<compile_context>
chip_gen: v6e
topology: v6e:2x2x1
jax: 0.10.0
libtpu: 0.0.40
codegen_flags: <defaults>
</compile_context>

<pallas_src>
import functools
import math

import jax
import jax.numpy as jnp
import numpy as np
from jax.experimental import pallas as pl
from jax.experimental.pallas import tpu as pltpu


# ------------------------------------------------------------------ helpers

def _layernorm(x, gamma, beta, eps):
    mu = jnp.mean(x, axis=-1, keepdims=True)
    var = jnp.mean(jnp.square(x - mu), axis=-1, keepdims=True)
    return (x - mu) * jax.lax.rsqrt(var + eps) * gamma + beta


def _sinusoidal_pe_np(S, E):
    # TODO(synk): PositionalEncoder source not provided; assuming the standard
    # sinusoidal table applied as "x + alpha * pe" with dropout disabled (eval).
    pos = np.arange(S, dtype=np.float32)[:, None]
    div = np.exp(np.arange(0, E, 2, dtype=np.float32) * (-math.log(10000.0) / E))
    pe = np.zeros((S, E), np.float32)
    pe[:, 0::2] = np.sin(pos * div)
    pe[:, 1::2] = np.cos(pos * div)
    return pe


# ------------------------------------------------------------------ kernel

def _fused_stack_kernel(x_ref, tokw_ref, front_ref,
                        wqkv_ref, bqkv_ref, wo_ref, bo_ref,
                        w1_ref, b1_ref, w2_ref, b2_ref,
                        g1_ref, be1_ref, g2_ref, be2_ref,
                        o_ref, act_ref, *, n_head, seq_valid, eps):
    """Whole forward for one batch element; depth is the inner grid axis."""
    d = pl.program_id(1)

    # ---- frontend (tokenizer + cls + alpha*PE) only at the first depth step.
    # x_ref row 0 and pad rows are zero; cls token, tokenizer bias and
    # alpha*PE are pre-folded into front_ref -> single matmul + add.
    @pl.when(d == 0)
    def _():
        toks = jnp.dot(x_ref[0], tokw_ref[...],
                       preferred_element_type=jnp.float32)
        act_ref[...] = toks + front_ref[...]

    x = act_ref[...]                                     # (S_pad, E) f32
    s_pad, e = x.shape
    dh = e // n_head
    scale = 1.0 / math.sqrt(dh)

    # ---- packed QKV projection ---------------------------------------------
    qkv = jnp.dot(x, wqkv_ref[0],
                  preferred_element_type=jnp.float32) + bqkv_ref[0]

    # key-padding bias: built once per layer (NOT per head)
    key_idx = jax.lax.broadcasted_iota(jnp.int32, (s_pad, s_pad), 1)
    neg_bias = jnp.where(key_idx < seq_valid, 0.0, -1e30)

    # ---- multi-head attention, folded straight into the out projection -----
    # TODO(synk): head_dim=8 underfills the MXU; acceptable at this toy size.
    wo = wo_ref[0]                                       # (E, E) f32
    y = jnp.zeros((s_pad, e), jnp.float32)
    qk_dims = (((1,), (1,)), ((), ()))                   # q @ k^T, no explicit .T
    for h in range(n_head):
        qh = qkv[:, h * dh:(h + 1) * dh]
        kh = qkv[:, e + h * dh:e + (h + 1) * dh]
        vh = qkv[:, 2 * e + h * dh:2 * e + (h + 1) * dh]
        s = jax.lax.dot_general(qh, kh, qk_dims,
                                preferred_element_type=jnp.float32)
        s = s * scale + neg_bias
        m = jnp.max(s, axis=-1, keepdims=True)
        p = jnp.exp(s - m)
        p = p / jnp.sum(p, axis=-1, keepdims=True)       # exact softmax
        oh = jnp.dot(p, vh, preferred_element_type=jnp.float32)
        # concat(heads) @ Wo  ==  sum_h  head_h @ Wo[h*dh:(h+1)*dh, :]
        y = y + jnp.dot(oh, wo[h * dh:(h + 1) * dh, :],
                        preferred_element_type=jnp.float32)

    # ---- out-proj bias + residual + LayerNorm1 ------------------------------
    y = y + bo_ref[0] + x
    y = _layernorm(y, g1_ref[0], be1_ref[0], eps)

    # ---- FFN (ReLU, bf16 weights / f32 accum) + residual + LayerNorm2 -------
    h1 = jnp.dot(y.astype(jnp.bfloat16), w1_ref[0],
                 preferred_element_type=jnp.float32) + b1_ref[0]
    h1 = jnp.maximum(h1, 0.0)
    y2 = jnp.dot(h1.astype(jnp.bfloat16), w2_ref[0],
                 preferred_element_type=jnp.float32) + b2_ref[0] + y
    y2 = _layernorm(y2, g2_ref[0], be2_ref[0], eps)

    act_ref[...] = y2                                    # carry to next layer

    @pl.when(d == pl.num_programs(1) - 1)
    def _():
        o_ref[0] = y2.astype(o_ref.dtype)


# ------------------------------------------------------------------ wrapper

def fused_stack(x_shift, packed, *, n_head, seq_valid, eps=1e-5):
    B, S_pad, F = x_shift.shape
    depth, E, _ = packed["wqkv"].shape
    FF = packed["w1"].shape[2]

    wmap = lambda b, d: (d, 0, 0)      # per-layer (depth-stacked) weights
    cmap = lambda b, d: (0, 0)         # whole-array constants

    in_specs = [
        pl.BlockSpec((1, S_pad, F), lambda b, d: (b, 0, 0)),   # shifted input
        pl.BlockSpec((F, E), cmap),                            # tokenizer W^T
        pl.BlockSpec((S_pad, E), cmap),                        # folded cls/PE/bias
        pl.BlockSpec((1, E, 3 * E), wmap),                     # in_proj W^T
        pl.BlockSpec((1, 1, 3 * E), wmap),                     # in_proj b
        pl.BlockSpec((1, E, E), wmap),                         # out_proj W^T
        pl.BlockSpec((1, 1, E), wmap),                         # out_proj b
        pl.BlockSpec((1, E, FF), wmap),                        # ffn W1^T (bf16)
        pl.BlockSpec((1, 1, FF), wmap),                        # ffn b1
        pl.BlockSpec((1, FF, E), wmap),                        # ffn W2^T (bf16)
        pl.BlockSpec((1, 1, E), wmap),                         # ffn b2
        pl.BlockSpec((1, 1, E), wmap),                         # ln1 gamma
        pl.BlockSpec((1, 1, E), wmap),                         # ln1 beta
        pl.BlockSpec((1, 1, E), wmap),                         # ln2 gamma
        pl.BlockSpec((1, 1, E), wmap),                         # ln2 beta
    ]
    return pl.pallas_call(
        functools.partial(_fused_stack_kernel, n_head=n_head,
                          seq_valid=seq_valid, eps=eps),
        out_shape=jax.ShapeDtypeStruct((B, S_pad, E), jnp.float32),
        grid=(B, depth),
        in_specs=in_specs,
        out_specs=pl.BlockSpec((1, S_pad, E), lambda b, d: (b, 0, 0)),
        scratch_shapes=[pltpu.VMEM((S_pad, E), jnp.float32)],
        compiler_params=pltpu.CompilerParams(
            dimension_semantics=("parallel", "arbitrary")),
    )(x_shift, packed["tok_w_t"], packed["front"],
      packed["wqkv"], packed["bqkv"], packed["wo"], packed["bo"],
      packed["w1"], packed["b1"], packed["w2"], packed["b2"],
      packed["g1"], packed["be1"], packed["g2"], packed["be2"])


# ------------------------------------------------------------------ params

def init_params(key, input_features, E, n_head, depth, dim_ff):
    """Deterministic synthetic params; PyTorch (out_features, in_features) convention."""
    ks = jax.random.split(key, 2 + depth)

    def w(k, shape, scale=0.05):
        return scale * jax.random.normal(k, shape, jnp.float32)

    params = {
        "tok_w": w(ks[0], (E, input_features)),        # nn.Linear(F, E).weight
        "tok_b": w(ks[0], (E,), 0.01),
        "cls_token": jax.random.normal(ks[1], (1, 1, E), jnp.float32),
        "layers": [],
    }
    for d in range(depth):
        lk = jax.random.split(ks[2 + d], 6)
        params["layers"].append({
            "in_proj_w": w(lk[0], (3 * E, E)),          # MHA packed qkv projection
            "in_proj_b": w(lk[0], (3 * E,), 0.01),
            "out_proj_w": w(lk[1], (E, E)),
            "out_proj_b": w(lk[1], (E,), 0.01),
            "ffn_w1": w(lk[2], (dim_ff, E)),
            "ffn_b1": w(lk[2], (dim_ff,), 0.01),
            "ffn_w2": w(lk[3], (E, dim_ff)),
            "ffn_b2": w(lk[3], (E,), 0.01),
            "ln1_g": jnp.ones((E,), jnp.float32),
            "ln1_b": jnp.zeros((E,), jnp.float32),
            "ln2_g": jnp.ones((E,), jnp.float32),
            "ln2_b": jnp.zeros((E,), jnp.float32),
        })
    return params


def pack_params(params, *, alpha, seq_len):
    """One-time repack: depth-stacked weights + folded cls/PE/bias table."""
    E = params["tok_w"].shape[0]
    S = seq_len + 1                                   # cls token prepended
    S_pad = ((S + 7) // 8) * 8                        # sublane-aligned rows

    pe = _sinusoidal_pe_np(S, E)                      # numpy, outside jit
    pe_pad = np.zeros((S_pad, E), np.float32)
    pe_pad[:S] = pe

    # Fold cls token, tokenizer bias and alpha*PE into a single additive table
    # so the in-kernel frontend is one matmul + one add (no concat / where).
    front = alpha * pe_pad
    front[1:S, :] += np.asarray(params["tok_b"], np.float32)
    front[0, :] = (np.asarray(params["cls_token"], np.float32).reshape(E)
                   + alpha * pe_pad[0])

    layers = params["layers"]
    sw32 = lambda k: jnp.stack([p[k].T for p in layers]).astype(jnp.float32)
    sw16 = lambda k: jnp.stack([p[k].T for p in layers]).astype(jnp.bfloat16)
    sb = lambda k: jnp.stack([p[k][None, :] for p in layers]).astype(jnp.float32)

    return {
        "tok_w_t": params["tok_w"].T.astype(jnp.float32),   # (F, E)
        "front": jnp.asarray(front),                         # (S_pad, E)
        "wqkv": sw32("in_proj_w"), "bqkv": sb("in_proj_b"),
        "wo": sw32("out_proj_w"), "bo": sb("out_proj_b"),
        "w1": sw16("ffn_w1"), "b1": sb("ffn_b1"),            # bf16 FFN weights
        "w2": sw16("ffn_w2"), "b2": sb("ffn_b2"),
        "g1": sb("ln1_g"), "be1": sb("ln1_b"),
        "g2": sb("ln2_g"), "be2": sb("ln2_b"),
    }


# ------------------------------------------------------------------ forward

@functools.partial(jax.jit, static_argnames=("n_head", "seq_valid"))
def transformer_encoder_forward(packed, x, *, n_head, seq_valid):
    """x: (B, input_features, L).  Returns (h, h[:, 0, :]) like the PyTorch module."""
    B, F, L = x.shape
    S_pad, E = packed["front"].shape

    # tokenizer input layout: x.transpose(1, 2) -> (B, L, F); shift tokens down
    # one row (row 0 reserved for the cls token), pad rows stay zero.
    x_blf = jnp.transpose(x, (0, 2, 1))
    x_shift = jnp.zeros((B, S_pad, F), jnp.float32).at[:, 1:L + 1, :].set(x_blf)

    h = fused_stack(x_shift, packed, n_head=n_head, seq_valid=seq_valid)
    h = h[:, :seq_valid, :]                          # drop sublane padding
    return h, h[:, 0, :]


# ------------------------------------------------------------------ main

if __name__ == "__main__":
    # Module config: use_tokenizer=True, use_cls_token=True, alpha=1.0,
    # input_features=4, embedding_dim=32, n_head=4, depth=2
    # (dim_feedforward=2048 = nn.TransformerEncoderLayer default).
    B, F, L = 2, 4, 16
    E, n_head, depth = 32, 4, 2
    alpha = 1.0
    dim_ff = 2048

    key = jax.random.PRNGKey(0)
    pkey, xkey = jax.random.split(key)
    params = init_params(pkey, F, E, n_head, depth, dim_ff)
    packed = pack_params(params, alpha=alpha, seq_len=L)
    x = jax.random.normal(xkey, (B, F, L), jnp.float32)

    h, cls_out = transformer_encoder_forward(packed, x, n_head=n_head,
                                             seq_valid=L + 1)
    h, cls_out = jax.block_until_ready((h, cls_out))

    assert h.shape == (B, L + 1, E), h.shape
    assert cls_out.shape == (B, E), cls_out.shape
    assert bool(jnp.all(jnp.isfinite(h))) and bool(jnp.all(jnp.isfinite(cls_out)))
    print("KERNEL_OK")
</pallas_src>

<mosaic_0001>
module attributes {stable_mosaic.version = 11 : i64} {
  func.func @_fused_stack_kernel(%arg0: i32, %arg1: i32, %arg2: memref<1x24x4xf32, #tpu.memory_space<vmem>>, %arg3: memref<4x32xf32, #tpu.memory_space<vmem>>, %arg4: memref<24x32xf32, #tpu.memory_space<vmem>>, %arg5: memref<1x32x96xf32, #tpu.memory_space<vmem>>, %arg6: memref<1x1x96xf32, #tpu.memory_space<vmem>>, %arg7: memref<1x32x32xf32, #tpu.memory_space<vmem>>, %arg8: memref<1x1x32xf32, #tpu.memory_space<vmem>>, %arg9: memref<1x32x2048xbf16, #tpu.memory_space<vmem>>, %arg10: memref<1x1x2048xf32, #tpu.memory_space<vmem>>, %arg11: memref<1x2048x32xbf16, #tpu.memory_space<vmem>>, %arg12: memref<1x1x32xf32, #tpu.memory_space<vmem>>, %arg13: memref<1x1x32xf32, #tpu.memory_space<vmem>>, %arg14: memref<1x1x32xf32, #tpu.memory_space<vmem>>, %arg15: memref<1x1x32xf32, #tpu.memory_space<vmem>>, %arg16: memref<1x1x32xf32, #tpu.memory_space<vmem>>, %arg17: memref<1x24x32xf32, #tpu.memory_space<vmem>>, %arg18: memref<24x32xf32, #tpu.memory_space<vmem>>) attributes {dimension_semantics = [#tpu.dimension_semantics<parallel>, #tpu.dimension_semantics<arbitrary>], iteration_bounds = array<i64: 2, 2>, scalar_prefetch = 0 : i64, scratch_operands = 1 : i64, tpu.core_type = #tpu.core_type<tc>, window_params = [{transform_indices = @transform_0, window_bounds = array<i64: 1, 24, 4>}, {pipeline_mode = #tpu.pipeline_mode<synchronous>, transform_indices = @transform_1, window_bounds = array<i64: 4, 32>}, {pipeline_mode = #tpu.pipeline_mode<synchronous>, transform_indices = @transform_2, window_bounds = array<i64: 24, 32>}, {transform_indices = @transform_3, window_bounds = array<i64: 1, 32, 96>}, {transform_indices = @transform_4, window_bounds = array<i64: 1, 1, 96>}, {transform_indices = @transform_5, window_bounds = array<i64: 1, 32, 32>}, {transform_indices = @transform_6, window_bounds = array<i64: 1, 1, 32>}, {transform_indices = @transform_7, window_bounds = array<i64: 1, 32, 2048>}, {transform_indices = @transform_8, window_bounds = array<i64: 1, 1, 2048>}, {transform_indices = @transform_9, window_bounds = array<i64: 1, 2048, 32>}, {transform_indices = @transform_10, window_bounds = array<i64: 1, 1, 32>}, {transform_indices = @transform_11, window_bounds = array<i64: 1, 1, 32>}, {transform_indices = @transform_12, window_bounds = array<i64: 1, 1, 32>}, {transform_indices = @transform_13, window_bounds = array<i64: 1, 1, 32>}, {transform_indices = @transform_14, window_bounds = array<i64: 1, 1, 32>}, {transform_indices = @transform_15, window_bounds = array<i64: 1, 24, 32>}]} {
    %c0_i32 = arith.constant 0 : i32
    %0 = arith.cmpi eq, %arg1, %c0_i32 : i32
    %1 = arith.extui %0 : i1 to i32
    %c0_i32_0 = arith.constant 0 : i32
    %2 = arith.cmpi ne, %1, %c0_i32_0 : i32
    scf.if %2 {
      %c0_81 = arith.constant 0 : index
      %c0_82 = arith.constant 0 : index
      %c0_83 = arith.constant 0 : index
      %180 = vector.load %arg2[%c0_81, %c0_82, %c0_83] : memref<1x24x4xf32, #tpu.memory_space<vmem>>, vector<1x24x4xf32>
      %181 = vector.shape_cast %180 : vector<1x24x4xf32> to vector<24x4xf32>
      %c0_84 = arith.constant 0 : index
      %c0_85 = arith.constant 0 : index
      %182 = vector.load %arg3[%c0_84, %c0_85] : memref<4x32xf32, #tpu.memory_space<vmem>>, vector<4x32xf32>
      %cst_86 = arith.constant dense<0.000000e+00> : vector<24x32xf32>
      %183 = tpu.matmul %181, %182, %cst_86 {dimension_numbers = #tpu.dot_dimension_numbers<[1], [0], [0], [1], [0, 0, 1, 1], [], []>} : vector<24x4xf32>, vector<4x32xf32>, vector<24x32xf32> -> vector<24x32xf32>
      %c0_87 = arith.constant 0 : index
      %c0_88 = arith.constant 0 : index
      %184 = vector.load %arg4[%c0_87, %c0_88] : memref<24x32xf32, #tpu.memory_space<vmem>>, vector<24x32xf32>
      %185 = arith.addf %183, %184 : vector<24x32xf32>
      %c0_89 = arith.constant 0 : index
      %c0_90 = arith.constant 0 : index
      %186 = vector.load %arg18[%c0_89, %c0_90] : memref<24x32xf32, #tpu.memory_space<vmem>>, vector<24x32xf32>
      tpu.vector_store %arg18[%c0_89, %c0_90], %185 {strides = array<i32>} : memref<24x32xf32, #tpu.memory_space<vmem>>, vector<24x32xf32>,
    } else {
    }
    %c0 = arith.constant 0 : index
    %c0_1 = arith.constant 0 : index
    %3 = vector.load %arg18[%c0, %c0_1] : memref<24x32xf32, #tpu.memory_space<vmem>>, vector<24x32xf32>
    %c0_2 = arith.constant 0 : index
    %c0_3 = arith.constant 0 : index
    %c0_4 = arith.constant 0 : index
    %4 = vector.load %arg5[%c0_2, %c0_3, %c0_4] : memref<1x32x96xf32, #tpu.memory_space<vmem>>, vector<1x32x96xf32>
    %5 = vector.shape_cast %4 : vector<1x32x96xf32> to vector<32x96xf32>
    %cst = arith.constant dense<0.000000e+00> : vector<24x96xf32>
    %6 = tpu.matmul %3, %5, %cst {dimension_numbers = #tpu.dot_dimension_numbers<[1], [0], [0], [1], [0, 0, 1, 1], [], []>} : vector<24x32xf32>, vector<32x96xf32>, vector<24x96xf32> -> vector<24x96xf32>
    %c0_5 = arith.constant 0 : index
    %c0_6 = arith.constant 0 : index
    %c0_7 = arith.constant 0 : index
    %7 = vector.load %arg6[%c0_5, %c0_6, %c0_7] : memref<1x1x96xf32, #tpu.memory_space<vmem>>, vector<1x1x96xf32>
    %8 = vector.shape_cast %7 : vector<1x1x96xf32> to vector<1x96xf32>
    %9 = vector.broadcast %8 : vector<1x96xf32> to vector<24x96xf32>
    %10 = arith.addf %6, %9 : vector<24x96xf32>
    %11 = tpu.iota {dimensions = array<i32: 1>} : vector<24x24xi32>
    %c17_i32 = arith.constant 17 : i32
    %12 = vector.broadcast %c17_i32 : i32 to vector<24x24xi32>
    %13 = arith.cmpi slt, %11, %12 : vector<24x24xi32>
    %cst_8 = arith.constant 0.000000e+00 : f32
    %cst_9 = arith.constant -1.000000e+30 : f32
    %14 = vector.broadcast %cst_8 : f32 to vector<24x24xf32>
    %15 = vector.broadcast %cst_9 : f32 to vector<24x24xf32>
    %16 = arith.select %13, %14, %15 : vector<24x24xi1>, vector<24x24xf32>
    %c0_10 = arith.constant 0 : index
    %c0_11 = arith.constant 0 : index
    %c0_12 = arith.constant 0 : index
    %17 = vector.load %arg7[%c0_10, %c0_11, %c0_12] : memref<1x32x32xf32, #tpu.memory_space<vmem>>, vector<1x32x32xf32>
    %18 = vector.shape_cast %17 : vector<1x32x32xf32> to vector<32x32xf32>
    %cst_13 = arith.constant 0.000000e+00 : f32
    %19 = vector.broadcast %cst_13 : f32 to vector<24x32xf32>
    %20 = vector.extract_strided_slice %10 {offsets = [0, 0], sizes = [24, 8], strides = [1, 1]} : vector<24x96xf32> to vector<24x8xf32>
    %21 = vector.extract_strided_slice %10 {offsets = [0, 32], sizes = [24, 8], strides = [1, 1]} : vector<24x96xf32> to vector<24x8xf32>
    %22 = vector.extract_strided_slice %10 {offsets = [0, 64], sizes = [24, 8], strides = [1, 1]} : vector<24x96xf32> to vector<24x8xf32>
    %cst_14 = arith.constant dense<0.000000e+00> : vector<24x24xf32>
    %23 = tpu.matmul %20, %21, %cst_14 {dimension_numbers = #tpu.dot_dimension_numbers<[1], [1], [0], [0], [0, 0, 1, 0], [], []>} : vector<24x8xf32>, vector<24x8xf32>, vector<24x24xf32> -> vector<24x24xf32>
    %cst_15 = arith.constant 0.353553385 : f32
    %24 = vector.broadcast %cst_15 : f32 to vector<24x24xf32>
    %25 = arith.mulf %23, %24 : vector<24x24xf32>
    %26 = arith.addf %25, %16 : vector<24x24xf32>
    %cst_16 = arith.constant dense<0xFF800000> : vector<24xf32>
    %27 = vector.multi_reduction <maximumf>, %26, %cst_16 [1] : vector<24x24xf32> to vector<24xf32>
    %28 = vector.shape_cast %27 : vector<24xf32> to vector<24x1xf32>
    %29 = vector.broadcast %28 : vector<24x1xf32> to vector<24x24xf32>
    %30 = arith.subf %26, %29 : vector<24x24xf32>
    %31 = math.exp %30 : vector<24x24xf32>
    %cst_17 = arith.constant dense<0.000000e+00> : vector<24xf32>
    %32 = vector.multi_reduction <add>, %31, %cst_17 [1] : vector<24x24xf32> to vector<24xf32>
    %33 = vector.shape_cast %32 : vector<24xf32> to vector<24x1xf32>
    %34 = vector.broadcast %33 : vector<24x1xf32> to vector<24x24xf32>
    %35 = arith.divf %31, %34 : vector<24x24xf32>
    %cst_18 = arith.constant dense<0.000000e+00> : vector<24x8xf32>
    %36 = tpu.matmul %35, %22, %cst_18 {dimension_numbers = #tpu.dot_dimension_numbers<[1], [0], [0], [1], [0, 0, 1, 1], [], []>} : vector<24x24xf32>, vector<24x8xf32>, vector<24x8xf32> -> vector<24x8xf32>
    %37 = vector.extract_strided_slice %18 {offsets = [0, 0], sizes = [8, 32], strides = [1, 1]} : vector<32x32xf32> to vector<8x32xf32>
    %cst_19 = arith.constant dense<0.000000e+00> : vector<24x32xf32>
    %38 = tpu.matmul %36, %37, %cst_19 {dimension_numbers = #tpu.dot_dimension_numbers<[1], [0], [0], [1], [0, 0, 1, 1], [], []>} : vector<24x8xf32>, vector<8x32xf32>, vector<24x32xf32> -> vector<24x32xf32>
    %39 = arith.addf %19, %38 : vector<24x32xf32>
    %40 = vector.extract_strided_slice %10 {offsets = [0, 8], sizes = [24, 8], strides = [1, 1]} : vector<24x96xf32> to vector<24x8xf32>
    %41 = vector.extract_strided_slice %10 {offsets = [0, 40], sizes = [24, 8], strides = [1, 1]} : vector<24x96xf32> to vector<24x8xf32>
    %42 = vector.extract_strided_slice %10 {offsets = [0, 72], sizes = [24, 8], strides = [1, 1]} : vector<24x96xf32> to vector<24x8xf32>
    %cst_20 = arith.constant dense<0.000000e+00> : vector<24x24xf32>
    %43 = tpu.matmul %40, %41, %cst_20 {dimension_numbers = #tpu.dot_dimension_numbers<[1], [1], [0], [0], [0, 0, 1, 0], [], []>} : vector<24x8xf32>, vector<24x8xf32>, vector<24x24xf32> -> vector<24x24xf32>
    %cst_21 = arith.constant 0.353553385 : f32
    %44 = vector.broadcast %cst_21 : f32 to vector<24x24xf32>
    %45 = arith.mulf %43, %44 : vector<24x24xf32>
    %46 = arith.addf %45, %16 : vector<24x24xf32>
    %cst_22 = arith.constant dense<0xFF800000> : vector<24xf32>
    %47 = vector.multi_reduction <maximumf>, %46, %cst_22 [1] : vector<24x24xf32> to vector<24xf32>
    %48 = vector.shape_cast %47 : vector<24xf32> to vector<24x1xf32>
    %49 = vector.broadcast %48 : vector<24x1xf32> to vector<24x24xf32>
    %50 = arith.subf %46, %49 : vector<24x24xf32>
    %51 = math.exp %50 : vector<24x24xf32>
    %cst_23 = arith.constant dense<0.000000e+00> : vector<24xf32>
    %52 = vector.multi_reduction <add>, %51, %cst_23 [1] : vector<24x24xf32> to vector<24xf32>
    %53 = vector.shape_cast %52 : vector<24xf32> to vector<24x1xf32>
    %54 = vector.broadcast %53 : vector<24x1xf32> to vector<24x24xf32>
    %55 = arith.divf %51, %54 : vector<24x24xf32>
    %cst_24 = arith.constant dense<0.000000e+00> : vector<24x8xf32>
    %56 = tpu.matmul %55, %42, %cst_24 {dimension_numbers = #tpu.dot_dimension_numbers<[1], [0], [0], [1], [0, 0, 1, 1], [], []>} : vector<24x24xf32>, vector<24x8xf32>, vector<24x8xf32> -> vector<24x8xf32>
    %57 = vector.extract_strided_slice %18 {offsets = [8, 0], sizes = [8, 32], strides = [1, 1]} : vector<32x32xf32> to vector<8x32xf32>
    %cst_25 = arith.constant dense<0.000000e+00> : vector<24x32xf32>
    %58 = tpu.matmul %56, %57, %cst_25 {dimension_numbers = #tpu.dot_dimension_numbers<[1], [0], [0], [1], [0, 0, 1, 1], [], []>} : vector<24x8xf32>, vector<8x32xf32>, vector<24x32xf32> -> vector<24x32xf32>
    %59 = arith.addf %39, %58 : vector<24x32xf32>
    %60 = vector.extract_strided_slice %10 {offsets = [0, 16], sizes = [24, 8], strides = [1, 1]} : vector<24x96xf32> to vector<24x8xf32>
    %61 = vector.extract_strided_slice %10 {offsets = [0, 48], sizes = [24, 8], strides = [1, 1]} : vector<24x96xf32> to vector<24x8xf32>
    %62 = vector.extract_strided_slice %10 {offsets = [0, 80], sizes = [24, 8], strides = [1, 1]} : vector<24x96xf32> to vector<24x8xf32>
    %cst_26 = arith.constant dense<0.000000e+00> : vector<24x24xf32>
    %63 = tpu.matmul %60, %61, %cst_26 {dimension_numbers = #tpu.dot_dimension_numbers<[1], [1], [0], [0], [0, 0, 1, 0], [], []>} : vector<24x8xf32>, vector<24x8xf32>, vector<24x24xf32> -> vector<24x24xf32>
    %cst_27 = arith.constant 0.353553385 : f32
    %64 = vector.broadcast %cst_27 : f32 to vector<24x24xf32>
    %65 = arith.mulf %63, %64 : vector<24x24xf32>
    %66 = arith.addf %65, %16 : vector<24x24xf32>
    %cst_28 = arith.constant dense<0xFF800000> : vector<24xf32>
    %67 = vector.multi_reduction <maximumf>, %66, %cst_28 [1] : vector<24x24xf32> to vector<24xf32>
    %68 = vector.shape_cast %67 : vector<24xf32> to vector<24x1xf32>
    %69 = vector.broadcast %68 : vector<24x1xf32> to vector<24x24xf32>
    %70 = arith.subf %66, %69 : vector<24x24xf32>
    %71 = math.exp %70 : vector<24x24xf32>
    %cst_29 = arith.constant dense<0.000000e+00> : vector<24xf32>
    %72 = vector.multi_reduction <add>, %71, %cst_29 [1] : vector<24x24xf32> to vector<24xf32>
    %73 = vector.shape_cast %72 : vector<24xf32> to vector<24x1xf32>
    %74 = vector.broadcast %73 : vector<24x1xf32> to vector<24x24xf32>
    %75 = arith.divf %71, %74 : vector<24x24xf32>
    %cst_30 = arith.constant dense<0.000000e+00> : vector<24x8xf32>
    %76 = tpu.matmul %75, %62, %cst_30 {dimension_numbers = #tpu.dot_dimension_numbers<[1], [0], [0], [1], [0, 0, 1, 1], [], []>} : vector<24x24xf32>, vector<24x8xf32>, vector<24x8xf32> -> vector<24x8xf32>
    %77 = vector.extract_strided_slice %18 {offsets = [16, 0], sizes = [8, 32], strides = [1, 1]} : vector<32x32xf32> to vector<8x32xf32>
    %cst_31 = arith.constant dense<0.000000e+00> : vector<24x32xf32>
    %78 = tpu.matmul %76, %77, %cst_31 {dimension_numbers = #tpu.dot_dimension_numbers<[1], [0], [0], [1], [0, 0, 1, 1], [], []>} : vector<24x8xf32>, vector<8x32xf32>, vector<24x32xf32> -> vector<24x32xf32>
    %79 = arith.addf %59, %78 : vector<24x32xf32>
    %80 = vector.extract_strided_slice %10 {offsets = [0, 24], sizes = [24, 8], strides = [1, 1]} : vector<24x96xf32> to vector<24x8xf32>
    %81 = vector.extract_strided_slice %10 {offsets = [0, 56], sizes = [24, 8], strides = [1, 1]} : vector<24x96xf32> to vector<24x8xf32>
    %82 = vector.extract_strided_slice %10 {offsets = [0, 88], sizes = [24, 8], strides = [1, 1]} : vector<24x96xf32> to vector<24x8xf32>
    %cst_32 = arith.constant dense<0.000000e+00> : vector<24x24xf32>
    %83 = tpu.matmul %80, %81, %cst_32 {dimension_numbers = #tpu.dot_dimension_numbers<[1], [1], [0], [0], [0, 0, 1, 0], [], []>} : vector<24x8xf32>, vector<24x8xf32>, vector<24x24xf32> -> vector<24x24xf32>
    %cst_33 = arith.constant 0.353553385 : f32
    %84 = vector.broadcast %cst_33 : f32 to vector<24x24xf32>
    %85 = arith.mulf %83, %84 : vector<24x24xf32>
    %86 = arith.addf %85, %16 : vector<24x24xf32>
    %cst_34 = arith.constant dense<0xFF800000> : vector<24xf32>
    %87 = vector.multi_reduction <maximumf>, %86, %cst_34 [1] : vector<24x24xf32> to vector<24xf32>
    %88 = vector.shape_cast %87 : vector<24xf32> to vector<24x1xf32>
    %89 = vector.broadcast %88 : vector<24x1xf32> to vector<24x24xf32>
    %90 = arith.subf %86, %89 : vector<24x24xf32>
    %91 = math.exp %90 : vector<24x24xf32>
    %cst_35 = arith.constant dense<0.000000e+00> : vector<24xf32>
    %92 = vector.multi_reduction <add>, %91, %cst_35 [1] : vector<24x24xf32> to vector<24xf32>
    %93 = vector.shape_cast %92 : vector<24xf32> to vector<24x1xf32>
    %94 = vector.broadcast %93 : vector<24x1xf32> to vector<24x24xf32>
    %95 = arith.divf %91, %94 : vector<24x24xf32>
    %cst_36 = arith.constant dense<0.000000e+00> : vector<24x8xf32>
    %96 = tpu.matmul %95, %82, %cst_36 {dimension_numbers = #tpu.dot_dimension_numbers<[1], [0], [0], [1], [0, 0, 1, 1], [], []>} : vector<24x24xf32>, vector<24x8xf32>, vector<24x8xf32> -> vector<24x8xf32>
    %97 = vector.extract_strided_slice %18 {offsets = [24, 0], sizes = [8, 32], strides = [1, 1]} : vector<32x32xf32> to vector<8x32xf32>
    %cst_37 = arith.constant dense<0.000000e+00> : vector<24x32xf32>
    %98 = tpu.matmul %96, %97, %cst_37 {dimension_numbers = #tpu.dot_dimension_numbers<[1], [0], [0], [1], [0, 0, 1, 1], [], []>} : vector<24x8xf32>, vector<8x32xf32>, vector<24x32xf32> -> vector<24x32xf32>
    %99 = arith.addf %79, %98 : vector<24x32xf32>
    %c0_38 = arith.constant 0 : index
    %c0_39 = arith.constant 0 : index
    %c0_40 = arith.constant 0 : index
    %100 = vector.load %arg8[%c0_38, %c0_39, %c0_40] : memref<1x1x32xf32, #tpu.memory_space<vmem>>, vector<1x1x32xf32>
    %101 = vector.shape_cast %100 : vector<1x1x32xf32> to vector<1x32xf32>
    %102 = vector.broadcast %101 : vector<1x32xf32> to vector<24x32xf32>
    %103 = arith.addf %99, %102 : vector<24x32xf32>
    %104 = arith.addf %103, %3 : vector<24x32xf32>
    %c0_41 = arith.constant 0 : index
    %c0_42 = arith.constant 0 : index
    %c0_43 = arith.constant 0 : index
    %105 = vector.load %arg13[%c0_41, %c0_42, %c0_43] : memref<1x1x32xf32, #tpu.memory_space<vmem>>, vector<1x1x32xf32>
    %106 = vector.shape_cast %105 : vector<1x1x32xf32> to vector<1x32xf32>
    %c0_44 = arith.constant 0 : index
    %c0_45 = arith.constant 0 : index
    %c0_46 = arith.constant 0 : index
    %107 = vector.load %arg14[%c0_44, %c0_45, %c0_46] : memref<1x1x32xf32, #tpu.memory_space<vmem>>, vector<1x1x32xf32>
    %108 = vector.shape_cast %107 : vector<1x1x32xf32> to vector<1x32xf32>
    %cst_47 = arith.constant dense<0.000000e+00> : vector<24xf32>
    %109 = vector.multi_reduction <add>, %104, %cst_47 [1] : vector<24x32xf32> to vector<24xf32>
    %110 = vector.shape_cast %109 : vector<24xf32> to vector<24x1xf32>
    %cst_48 = arith.constant 3.200000e+01 : f32
    %111 = vector.broadcast %cst_48 : f32 to vector<24x1xf32>
    %112 = arith.divf %110, %111 : vector<24x1xf32>
    %113 = vector.broadcast %112 : vector<24x1xf32> to vector<24x32xf32>
    %114 = arith.subf %104, %113 : vector<24x32xf32>
    %115 = arith.mulf %114, %114 : vector<24x32xf32>
    %cst_49 = arith.constant dense<0.000000e+00> : vector<24xf32>
    %116 = vector.multi_reduction <add>, %115, %cst_49 [1] : vector<24x32xf32> to vector<24xf32>
    %117 = vector.shape_cast %116 : vector<24xf32> to vector<24x1xf32>
    %cst_50 = arith.constant 3.200000e+01 : f32
    %118 = vector.broadcast %cst_50 : f32 to vector<24x1xf32>
    %119 = arith.divf %117, %118 : vector<24x1xf32>
    %120 = vector.broadcast %112 : vector<24x1xf32> to vector<24x32xf32>
    %121 = arith.subf %104, %120 : vector<24x32xf32>
    %cst_51 = arith.constant 9.99999974E-6 : f32
    %122 = vector.broadcast %cst_51 : f32 to vector<24x1xf32>
    %123 = arith.addf %119, %122 : vector<24x1xf32>
    %124 = math.rsqrt %123 : vector<24x1xf32>
    %125 = vector.broadcast %124 : vector<24x1xf32> to vector<24x32xf32>
    %126 = arith.mulf %121, %125 : vector<24x32xf32>
    %127 = vector.broadcast %106 : vector<1x32xf32> to vector<24x32xf32>
    %128 = arith.mulf %126, %127 : vector<24x32xf32>
    %129 = vector.broadcast %108 : vector<1x32xf32> to vector<24x32xf32>
    %130 = arith.addf %128, %129 : vector<24x32xf32>
    %131 = arith.truncf %130 : vector<24x32xf32> to vector<24x32xbf16>
    %c0_52 = arith.constant 0 : index
    %c0_53 = arith.constant 0 : index
    %c0_54 = arith.constant 0 : index
    %132 = vector.load %arg9[%c0_52, %c0_53, %c0_54] : memref<1x32x2048xbf16, #tpu.memory_space<vmem>>, vector<1x32x2048xbf16>
    %133 = vector.shape_cast %132 : vector<1x32x2048xbf16> to vector<32x2048xbf16>
    %cst_55 = arith.constant dense<0.000000e+00> : vector<24x2048xf32>
    %134 = tpu.matmul %131, %133, %cst_55 {dimension_numbers = #tpu.dot_dimension_numbers<[1], [0], [0], [1], [0, 0, 1, 1], [], []>} : vector<24x32xbf16>, vector<32x2048xbf16>, vector<24x2048xf32> -> vector<24x2048xf32>
    %c0_56 = arith.constant 0 : index
    %c0_57 = arith.constant 0 : index
    %c0_58 = arith.constant 0 : index
    %135 = vector.load %arg10[%c0_56, %c0_57, %c0_58] : memref<1x1x2048xf32, #tpu.memory_space<vmem>>, vector<1x1x2048xf32>
    %136 = vector.shape_cast %135 : vector<1x1x2048xf32> to vector<1x2048xf32>
    %137 = vector.broadcast %136 : vector<1x2048xf32> to vector<24x2048xf32>
    %138 = arith.addf %134, %137 : vector<24x2048xf32>
    %cst_59 = arith.constant 0.000000e+00 : f32
    %139 = vector.broadcast %cst_59 : f32 to vector<24x2048xf32>
    %140 = arith.maximumf %138, %139 : vector<24x2048xf32>
    %141 = arith.truncf %140 : vector<24x2048xf32> to vector<24x2048xbf16>
    %c0_60 = arith.constant 0 : index
    %c0_61 = arith.constant 0 : index
    %c0_62 = arith.constant 0 : index
    %142 = vector.load %arg11[%c0_60, %c0_61, %c0_62] : memref<1x2048x32xbf16, #tpu.memory_space<vmem>>, vector<1x2048x32xbf16>
    %143 = vector.shape_cast %142 : vector<1x2048x32xbf16> to vector<2048x32xbf16>
    %cst_63 = arith.constant dense<0.000000e+00> : vector<24x32xf32>
    %144 = tpu.matmul %141, %143, %cst_63 {dimension_numbers = #tpu.dot_dimension_numbers<[1], [0], [0], [1], [0, 0, 1, 1], [], []>} : vector<24x2048xbf16>, vector<2048x32xbf16>, vector<24x32xf32> -> vector<24x32xf32>
    %c0_64 = arith.constant 0 : index
    %c0_65 = arith.constant 0 : index
    %c0_66 = arith.constant 0 : index
    %145 = vector.load %arg12[%c0_64, %c0_65, %c0_66] : memref<1x1x32xf32, #tpu.memory_space<vmem>>, vector<1x1x32xf32>
    %146 = vector.shape_cast %145 : vector<1x1x32xf32> to vector<1x32xf32>
    %147 = vector.broadcast %146 : vector<1x32xf32> to vector<24x32xf32>
    %148 = arith.addf %144, %147 : vector<24x32xf32>
    %149 = arith.addf %148, %130 : vector<24x32xf32>
    %c0_67 = arith.constant 0 : index
    %c0_68 = arith.constant 0 : index
    %c0_69 = arith.constant 0 : index
    %150 = vector.load %arg15[%c0_67, %c0_68, %c0_69] : memref<1x1x32xf32, #tpu.memory_space<vmem>>, vector<1x1x32xf32>
    %151 = vector.shape_cast %150 : vector<1x1x32xf32> to vector<1x32xf32>
    %c0_70 = arith.constant 0 : index
    %c0_71 = arith.constant 0 : index
    %c0_72 = arith.constant 0 : index
    %152 = vector.load %arg16[%c0_70, %c0_71, %c0_72] : memref<1x1x32xf32, #tpu.memory_space<vmem>>, vector<1x1x32xf32>
    %153 = vector.shape_cast %152 : vector<1x1x32xf32> to vector<1x32xf32>
    %cst_73 = arith.constant dense<0.000000e+00> : vector<24xf32>
    %154 = vector.multi_reduction <add>, %149, %cst_73 [1] : vector<24x32xf32> to vector<24xf32>
    %155 = vector.shape_cast %154 : vector<24xf32> to vector<24x1xf32>
    %cst_74 = arith.constant 3.200000e+01 : f32
    %156 = vector.broadcast %cst_74 : f32 to vector<24x1xf32>
    %157 = arith.divf %155, %156 : vector<24x1xf32>
    %158 = vector.broadcast %157 : vector<24x1xf32> to vector<24x32xf32>
    %159 = arith.subf %149, %158 : vector<24x32xf32>
    %160 = arith.mulf %159, %159 : vector<24x32xf32>
    %cst_75 = arith.constant dense<0.000000e+00> : vector<24xf32>
    %161 = vector.multi_reduction <add>, %160, %cst_75 [1] : vector<24x32xf32> to vector<24xf32>
    %162 = vector.shape_cast %161 : vector<24xf32> to vector<24x1xf32>
    %cst_76 = arith.constant 3.200000e+01 : f32
    %163 = vector.broadcast %cst_76 : f32 to vector<24x1xf32>
    %164 = arith.divf %162, %163 : vector<24x1xf32>
    %165 = vector.broadcast %157 : vector<24x1xf32> to vector<24x32xf32>
    %166 = arith.subf %149, %165 : vector<24x32xf32>
    %cst_77 = arith.constant 9.99999974E-6 : f32
    %167 = vector.broadcast %cst_77 : f32 to vector<24x1xf32>
    %168 = arith.addf %164, %167 : vector<24x1xf32>
    %169 = math.rsqrt %168 : vector<24x1xf32>
    %170 = vector.broadcast %169 : vector<24x1xf32> to vector<24x32xf32>
    %171 = arith.mulf %166, %170 : vector<24x32xf32>
    %172 = vector.broadcast %151 : vector<1x32xf32> to vector<24x32xf32>
    %173 = arith.mulf %171, %172 : vector<24x32xf32>
    %174 = vector.broadcast %153 : vector<1x32xf32> to vector<24x32xf32>
    %175 = arith.addf %173, %174 : vector<24x32xf32>
    %c0_78 = arith.constant 0 : index
    %c0_79 = arith.constant 0 : index
    %176 = vector.load %arg18[%c0_78, %c0_79] : memref<24x32xf32, #tpu.memory_space<vmem>>, vector<24x32xf32>
    tpu.vector_store %arg18[%c0_78, %c0_79], %175 {strides = array<i32>} : memref<24x32xf32, #tpu.memory_space<vmem>>, vector<24x32xf32>,
    %c1_i32 = arith.constant 1 : i32
    %177 = arith.cmpi eq, %arg1, %c1_i32 : i32
    %178 = arith.extui %177 : i1 to i32
    %c0_i32_80 = arith.constant 0 : i32
    %179 = arith.cmpi ne, %178, %c0_i32_80 : i32
    scf.if %179 {
      %c0_81 = arith.constant 0 : index
      %c0_82 = arith.constant 0 : index
      %c0_83 = arith.constant 0 : index
      %180 = vector.load %arg17[%c0_81, %c0_82, %c0_83] : memref<1x24x32xf32, #tpu.memory_space<vmem>>, vector<1x24x32xf32>
      %181 = vector.shape_cast %180 : vector<1x24x32xf32> to vector<24x32xf32>
      %182 = vector.shape_cast %175 : vector<24x32xf32> to vector<1x24x32xf32>
      tpu.vector_store %arg17[%c0_81, %c0_82, %c0_83], %182 {strides = array<i32>} : memref<1x24x32xf32, #tpu.memory_space<vmem>>, vector<1x24x32xf32>,
    } else {
    }
    return
  }
  func.func @transform_0(%arg0: i32, %arg1: i32) -> (i32, i32, i32) {
    %c0_i32 = arith.constant 0 : i32
    %c0_i32_0 = arith.constant 0 : i32
    %c0_i32_1 = arith.constant 0 : i32
    return %arg0, %c0_i32, %c0_i32_0 : i32, i32, i32
  }
  func.func @transform_1(%arg0: i32, %arg1: i32) -> (i32, i32) {
    %c0_i32 = arith.constant 0 : i32
    %c0_i32_0 = arith.constant 0 : i32
    %c0_i32_1 = arith.constant 0 : i32
    return %c0_i32, %c0_i32_0 : i32, i32
  }
  func.func @transform_2(%arg0: i32, %arg1: i32) -> (i32, i32) {
    %c0_i32 = arith.constant 0 : i32
    %c0_i32_0 = arith.constant 0 : i32
    %c0_i32_1 = arith.constant 0 : i32
    return %c0_i32, %c0_i32_0 : i32, i32
  }
  func.func @transform_3(%arg0: i32, %arg1: i32) -> (i32, i32, i32) {
    %c0_i32 = arith.constant 0 : i32
    %c0_i32_0 = arith.constant 0 : i32
    %c0_i32_1 = arith.constant 0 : i32
    return %arg1, %c0_i32, %c0_i32_0 : i32, i32, i32
  }
  func.func @transform_4(%arg0: i32, %arg1: i32) -> (i32, i32, i32) {
    %c0_i32 = arith.constant 0 : i32
    %c0_i32_0 = arith.constant 0 : i32
    %c0_i32_1 = arith.constant 0 : i32
    return %arg1, %c0_i32, %c0_i32_0 : i32, i32, i32
  }
  func.func @transform_5(%arg0: i32, %arg1: i32) -> (i32, i32, i32) {
    %c0_i32 = arith.constant 0 : i32
    %c0_i32_0 = arith.constant 0 : i32
    %c0_i32_1 = arith.constant 0 : i32
    return %arg1, %c0_i32, %c0_i32_0 : i32, i32, i32
  }
  func.func @transform_6(%arg0: i32, %arg1: i32) -> (i32, i32, i32) {
    %c0_i32 = arith.constant 0 : i32
    %c0_i32_0 = arith.constant 0 : i32
    %c0_i32_1 = arith.constant 0 : i32
    return %arg1, %c0_i32, %c0_i32_0 : i32, i32, i32
  }
  func.func @transform_7(%arg0: i32, %arg1: i32) -> (i32, i32, i32) {
    %c0_i32 = arith.constant 0 : i32
    %c0_i32_0 = arith.constant 0 : i32
    %c0_i32_1 = arith.constant 0 : i32
    return %arg1, %c0_i32, %c0_i32_0 : i32, i32, i32
  }
  func.func @transform_8(%arg0: i32, %arg1: i32) -> (i32, i32, i32) {
    %c0_i32 = arith.constant 0 : i32
    %c0_i32_0 = arith.constant 0 : i32
    %c0_i32_1 = arith.constant 0 : i32
    return %arg1, %c0_i32, %c0_i32_0 : i32, i32, i32
  }
  func.func @transform_9(%arg0: i32, %arg1: i32) -> (i32, i32, i32) {
    %c0_i32 = arith.constant 0 : i32
    %c0_i32_0 = arith.constant 0 : i32
    %c0_i32_1 = arith.constant 0 : i32
    return %arg1, %c0_i32, %c0_i32_0 : i32, i32, i32
  }
  func.func @transform_10(%arg0: i32, %arg1: i32) -> (i32, i32, i32) {
    %c0_i32 = arith.constant 0 : i32
    %c0_i32_0 = arith.constant 0 : i32
    %c0_i32_1 = arith.constant 0 : i32
    return %arg1, %c0_i32, %c0_i32_0 : i32, i32, i32
  }
  func.func @transform_11(%arg0: i32, %arg1: i32) -> (i32, i32, i32) {
    %c0_i32 = arith.constant 0 : i32
    %c0_i32_0 = arith.constant 0 : i32
    %c0_i32_1 = arith.constant 0 : i32
    return %arg1, %c0_i32, %c0_i32_0 : i32, i32, i32
  }
  func.func @transform_12(%arg0: i32, %arg1: i32) -> (i32, i32, i32) {
    %c0_i32 = arith.constant 0 : i32
    %c0_i32_0 = arith.constant 0 : i32
    %c0_i32_1 = arith.constant 0 : i32
    return %arg1, %c0_i32, %c0_i32_0 : i32, i32, i32
  }
  func.func @transform_13(%arg0: i32, %arg1: i32) -> (i32, i32, i32) {
    %c0_i32 = arith.constant 0 : i32
    %c0_i32_0 = arith.constant 0 : i32
    %c0_i32_1 = arith.constant 0 : i32
    return %arg1, %c0_i32, %c0_i32_0 : i32, i32, i32
  }
  func.func @transform_14(%arg0: i32, %arg1: i32) -> (i32, i32, i32) {
    %c0_i32 = arith.constant 0 : i32
    %c0_i32_0 = arith.constant 0 : i32
    %c0_i32_1 = arith.constant 0 : i32
    return %arg1, %c0_i32, %c0_i32_0 : i32, i32, i32
  }
  func.func @transform_15(%arg0: i32, %arg1: i32) -> (i32, i32, i32) {
    %c0_i32 = arith.constant 0 : i32
    %c0_i32_0 = arith.constant 0 : i32
    %c0_i32_1 = arith.constant 0 : i32
    return %arg0, %c0_i32, %c0_i32_0 : i32, i32, i32
  }
}

</mosaic_0001>

<llo_original>
// kernel: transformer_encoder_forward.1
$region0: #{transformer_encoder_forward.1}
  #allocation0 [shape = 'u32[]', space=smem, size = 0x4, offset = 0x4, fixed_abs, tag = 'smem constant byte address 0x4 - core index']
  #allocation1 [shape = 'u32[144,128]{1,0:T(1,128)}', space=vmem, size = 0x12000, scoped, tag = 'internal scratch']
  #allocation2 [shape = 'f32[24,32]{1,0:T(8,128)}', space=vmem, size = 0x3000, scoped, tag = 'scratch operand']
  %s0 = inlined_call_operand.vmem [shape: f32[2,24,4], index: 0, kind: input, shape index: {}]
  %s1 = inlined_call_operand.vmem [shape: f32[4,32], index: 1, kind: input, shape index: {}]
  %s2 = inlined_call_operand.vmem [shape: f32[24,32], index: 2, kind: input, shape index: {}]
  %s3 = inlined_call_operand.vmem [shape: f32[2,32,96], index: 3, kind: input, shape index: {}]
  %s4 = inlined_call_operand.vmem [shape: f32[2,1,96], index: 4, kind: input, shape index: {}]
  %s5 = inlined_call_operand.vmem [shape: f32[2,32,32], index: 5, kind: input, shape index: {}]
  %s6 = inlined_call_operand.vmem [shape: f32[2,1,32], index: 6, kind: input, shape index: {}]
  %s7 = inlined_call_operand.vmem [shape: bf16[2,32,2048], index: 7, kind: input, shape index: {}]
  %s8 = inlined_call_operand.vmem [shape: f32[2,1,2048], index: 8, kind: input, shape index: {}]
  %s9 = inlined_call_operand.vmem [shape: bf16[2,2048,32], index: 9, kind: input, shape index: {}]
  %s10 = inlined_call_operand.vmem [shape: f32[2,1,32], index: 10, kind: input, shape index: {}]
  %s11 = inlined_call_operand.vmem [shape: f32[2,1,32], index: 11, kind: input, shape index: {}]
  %s12 = inlined_call_operand.vmem [shape: f32[2,1,32], index: 12, kind: input, shape index: {}]
  %s13 = inlined_call_operand.vmem [shape: f32[2,1,32], index: 13, kind: input, shape index: {}]
  %s14 = inlined_call_operand.vmem [shape: f32[2,1,32], index: 14, kind: input, shape index: {}]
  %s15 = inlined_call_operand.vmem [shape: f32[2,24,32], index: 15, kind: output, shape index: {}]
  %s16 = sld [smem:[#allocation0]]
  $region101: #{transformer_encoder_forward.1} parent=0
    _
  %s18 = ssub.s32 1, %s16
  %s19 = scalar_select 0, %s18, %s16
  loop: start=0, step=1, limit=6
  $region2: #{transformer_encoder_forward.1} parent=0 // loop_pre_header
    _
  $region3: #{transformer_encoder_forward.1} parent=0 // loop_header
    %s21 = sphi 0, %s25
    %p22 = scmp.ge.s32.totalorder %s21, 6
    %s28 = sphi 0, %s40
    %s29 = sphi 0, %s36
    %s30 = sphi 0, %s28
    %s31 = sphi 0, %s29
    %s32 = sphi 0, %s30
    %s33 = sphi 0, %s31
    %s43 = sphi 0, %s45
    %s46 = sphi 0, %s43
    %s47 = sphi 0, %s46
    %s63 = sphi 0, %s47
    %s67 = sphi 0, %s67
    %s69 = sphi 0, %s67
    %s70 = sphi 0, %s69
    %s84 = sphi 0, %s70
    %s88 = sphi 0, %s88
    %s90 = sphi 0, %s88
    %s91 = sphi 0, %s90
    %s105 = sphi 0, %s91
    %s111 = sphi 0, %s113
    %s114 = sphi 0, %s111
    %s115 = sphi 0, %s114
    %s131 = sphi 0, %s115
    %s137 = sphi 0, %s139
    %s140 = sphi 0, %s137
    %s141 = sphi 0, %s140
    %s157 = sphi 0, %s141
    %s163 = sphi 0, %s165
    %s166 = sphi 0, %s163
    %s167 = sphi 0, %s166
    %s183 = sphi 0, %s167
    %s189 = sphi 0, %s191
    %s192 = sphi 0, %s189
    %s193 = sphi 0, %s192
    %s209 = sphi 0, %s193
    %s215 = sphi 0, %s217
    %s218 = sphi 0, %s215
    %s219 = sphi 0, %s218
    %s235 = sphi 0, %s219
    %s241 = sphi 0, %s243
    %s244 = sphi 0, %s241
    %s245 = sphi 0, %s244
    %s261 = sphi 0, %s245
    %s267 = sphi 0, %s269
    %s270 = sphi 0, %s267
    %s271 = sphi 0, %s270
    %s287 = sphi 0, %s271
    %s293 = sphi 0, %s295
    %s296 = sphi 0, %s293
    %s297 = sphi 0, %s296
    %s313 = sphi 0, %s297
    %s319 = sphi 0, %s321
    %s322 = sphi 0, %s319
    %s323 = sphi 0, %s322
    %s339 = sphi 0, %s323
    %s345 = sphi 0, %s347
    %s348 = sphi 0, %s345
    %s349 = sphi 0, %s348
    %s365 = sphi 0, %s349
    %s371 = sphi 0, %s373
    %s374 = sphi 0, %s371
    %s375 = sphi 0, %s374
    %s391 = sphi 0, %s375
    %s397 = sphi 0, %s399
    %s400 = sphi 0, %s397
    %s401 = sphi 0, %s400
    %s417 = sphi 0, %s401
    %s423 = sphi 0, %s425
    %s426 = sphi 0, %s423
    %s427 = sphi 0, %s426
    %s443 = sphi 0, %s427
  $region4: #{transformer_encoder_forward.1} parent=0 // loop_header_branch
    %24 = sbr.rel (%p22) target = $region8
  $region5: #{transformer_encoder_forward.1} parent=0 // loop_body
    %s26 = ssub.s32 %s21, 1
    %s27 = ssub.s32 %s21, 2
    %s34 = sadd.s32 1, %s29
    %p35 = scmp.ge.s32.totalorder %s34, 2
    %s36 = scalar_select %p35, 0, %s34
    %s37 = sadd.s32 1, %s28
    %s38 = scalar_select %p35, %s37, %s28
    %p39 = scmp.ge.s32.totalorder %s38, 2
    %s40 = scalar_select %p39, 0, %s38
    %s41 = ssub.s32 %s28, %s40
    %p42 = scmp.eq.s32.totalorder %s41, 0
    %s44 = sadd.s32 %s43, 1
    %s45 = scalar_select %p42, %s43, %s44
    %p48 = pneg %p42
    %p49 = scmp.eq.s32.totalorder %s21, 3
    %p50 = por %p48, %p49
    %p51 = scmp.ne.s32.totalorder %s43, %s46
    %p52 = scmp.eq.s32.totalorder %s21, 0
    %p53 = por %p51, %p52
    %p54 = scmp.ne.s32.totalorder %s43, %s46
    %p55 = scmp.eq.s32.totalorder %s26, 3
    %p56 = por %p54, %p55
    %p57 = scmp.ne.s32.totalorder %s46, %s47
    %p58 = scmp.eq.s32.totalorder %s26, 0
    %p59 = por %p57, %p58
    %p60 = scmp.ne.s32.totalorder %s46, %s47
    %p61 = scmp.eq.s32.totalorder %s27, 3
    %p62 = por %p60, %p61
    %p64 = scmp.ne.s32.totalorder %s47, %s63
    %p65 = scmp.eq.s32.totalorder %s27, 0
    %p66 = por %p64, %p65
    %s68 = sadd.s32 %s67, 1
    %p71 = scmp.eq.s32.totalorder %s21, 3
    %p72 = scmp.ne.s32.totalorder %s67, %s69
    %p73 = scmp.eq.s32.totalorder %s21, 0
    %p74 = por %p72, %p73
    %p75 = scmp.ne.s32.totalorder %s67, %s69
    %p76 = scmp.eq.s32.totalorder %s26, 3
    %p77 = por %p75, %p76
    %p78 = scmp.ne.s32.totalorder %s69, %s70
    %p79 = scmp.eq.s32.totalorder %s26, 0
    %p80 = por %p78, %p79
    %p81 = scmp.ne.s32.totalorder %s69, %s70
    %p82 = scmp.eq.s32.totalorder %s27, 3
    %p83 = por %p81, %p82
    %p85 = scmp.ne.s32.totalorder %s70, %s84
    %p86 = scmp.eq.s32.totalorder %s27, 0
    %p87 = por %p85, %p86
    %s89 = sadd.s32 %s88, 1
    %p92 = scmp.eq.s32.totalorder %s21, 3
    %p93 = scmp.ne.s32.totalorder %s88, %s90
    %p94 = scmp.eq.s32.totalorder %s21, 0
    %p95 = por %p93, %p94
    %p96 = scmp.ne.s32.totalorder %s88, %s90
    %p97 = scmp.eq.s32.totalorder %s26, 3
    %p98 = por %p96, %p97
    %p99 = scmp.ne.s32.totalorder %s90, %s91
    %p100 = scmp.eq.s32.totalorder %s26, 0
    %p101 = por %p99, %p100
    %p102 = scmp.ne.s32.totalorder %s90, %s91
    %p103 = scmp.eq.s32.totalorder %s27, 3
    %p104 = por %p102, %p103
    %p106 = scmp.ne.s32.totalorder %s91, %s105
    %p107 = scmp.eq.s32.totalorder %s27, 0
    %p108 = por %p106, %p107
    %s109 = ssub.s32 %s29, %s36
    %p110 = scmp.eq.s32.totalorder %s109, 0
    %s112 = sadd.s32 %s111, 1
    %s113 = scalar_select %p110, %s111, %s112
    %p116 = pneg %p110
    %p117 = scmp.eq.s32.totalorder %s21, 3
    %p118 = por %p116, %p117
    %p119 = scmp.ne.s32.totalorder %s111, %s114
    %p120 = scmp.eq.s32.totalorder %s21, 0
    %p121 = por %p119, %p120
    %p122 = scmp.ne.s32.totalorder %s111, %s114
    %p123 = scmp.eq.s32.totalorder %s26, 3
    %p124 = por %p122, %p123
    %p125 = scmp.ne.s32.totalorder %s114, %s115
    %p126 = scmp.eq.s32.totalorder %s26, 0
    %p127 = por %p125, %p126
    %p128 = scmp.ne.s32.totalorder %s114, %s115
    %p129 = scmp.eq.s32.totalorder %s27, 3
    %p130 = por %p128, %p129
    %p132 = scmp.ne.s32.totalorder %s115, %s131
    %p133 = scmp.eq.s32.totalorder %s27, 0
    %p134 = por %p132, %p133
    %s135 = ssub.s32 %s29, %s36
    %p136 = scmp.eq.s32.totalorder %s135, 0
    %s138 = sadd.s32 %s137, 1
    %s139 = scalar_select %p136, %s137, %s138
    %p142 = pneg %p136
    %p143 = scmp.eq.s32.totalorder %s21, 3
    %p144 = por %p142, %p143
    %p145 = scmp.ne.s32.totalorder %s137, %s140
    %p146 = scmp.eq.s32.totalorder %s21, 0
    %p147 = por %p145, %p146
    %p148 = scmp.ne.s32.totalorder %s137, %s140
    %p149 = scmp.eq.s32.totalorder %s26, 3
    %p150 = por %p148, %p149
    %p151 = scmp.ne.s32.totalorder %s140, %s141
    %p152 = scmp.eq.s32.totalorder %s26, 0
    %p153 = por %p151, %p152
    %p154 = scmp.ne.s32.totalorder %s140, %s141
    %p155 = scmp.eq.s32.totalorder %s27, 3
    %p156 = por %p154, %p155
    %p158 = scmp.ne.s32.totalorder %s141, %s157
    %p159 = scmp.eq.s32.totalorder %s27, 0
    %p160 = por %p158, %p159
    %s161 = ssub.s32 %s29, %s36
    %p162 = scmp.eq.s32.totalorder %s161, 0
    %s164 = sadd.s32 %s163, 1
    %s165 = scalar_select %p162, %s163, %s164
    %p168 = pneg %p162
    %p169 = scmp.eq.s32.totalorder %s21, 3
    %p170 = por %p168, %p169
    %p171 = scmp.ne.s32.totalorder %s163, %s166
    %p172 = scmp.eq.s32.totalorder %s21, 0
    %p173 = por %p171, %p172
    %p174 = scmp.ne.s32.totalorder %s163, %s166
    %p175 = scmp.eq.s32.totalorder %s26, 3
    %p176 = por %p174, %p175
    %p177 = scmp.ne.s32.totalorder %s166, %s167
    %p178 = scmp.eq.s32.totalorder %s26, 0
    %p179 = por %p177, %p178
    %p180 = scmp.ne.s32.totalorder %s166, %s167
    %p181 = scmp.eq.s32.totalorder %s27, 3
    %p182 = por %p180, %p181
    %p184 = scmp.ne.s32.totalorder %s167, %s183
    %p185 = scmp.eq.s32.totalorder %s27, 0
    %p186 = por %p184, %p185
    %s187 = ssub.s32 %s29, %s36
    %p188 = scmp.eq.s32.totalorder %s187, 0
    %s190 = sadd.s32 %s189, 1
    %s191 = scalar_select %p188, %s189, %s190
    %p194 = pneg %p188
    %p195 = scmp.eq.s32.totalorder %s21, 3
    %p196 = por %p194, %p195
    %p197 = scmp.ne.s32.totalorder %s189, %s192
    %p198 = scmp.eq.s32.totalorder %s21, 0
    %p199 = por %p197, %p198
    %p200 = scmp.ne.s32.totalorder %s189, %s192
    %p201 = scmp.eq.s32.totalorder %s26, 3
    %p202 = por %p200, %p201
    %p203 = scmp.ne.s32.totalorder %s192, %s193
    %p204 = scmp.eq.s32.totalorder %s26, 0
    %p205 = por %p203, %p204
    %p206 = scmp.ne.s32.totalorder %s192, %s193
    %p207 = scmp.eq.s32.totalorder %s27, 3
    %p208 = por %p206, %p207
    %p210 = scmp.ne.s32.totalorder %s193, %s209
    %p211 = scmp.eq.s32.totalorder %s27, 0
    %p212 = por %p210, %p211
    %s213 = ssub.s32 %s29, %s36
    %p214 = scmp.eq.s32.totalorder %s213, 0
    %s216 = sadd.s32 %s215, 1
    %s217 = scalar_select %p214, %s215, %s216
    %p220 = pneg %p214
    %p221 = scmp.eq.s32.totalorder %s21, 3
    %p222 = por %p220, %p221
    %p223 = scmp.ne.s32.totalorder %s215, %s218
    %p224 = scmp.eq.s32.totalorder %s21, 0
    %p225 = por %p223, %p224
    %p226 = scmp.ne.s32.totalorder %s215, %s218
    %p227 = scmp.eq.s32.totalorder %s26, 3
    %p228 = por %p226, %p227
    %p229 = scmp.ne.s32.totalorder %s218, %s219
    %p230 = scmp.eq.s32.totalorder %s26, 0
    %p231 = por %p229, %p230
    %p232 = scmp.ne.s32.totalorder %s218, %s219
    %p233 = scmp.eq.s32.totalorder %s27, 3
    %p234 = por %p232, %p233
    %p236 = scmp.ne.s32.totalorder %s219, %s235
    %p237 = scmp.eq.s32.totalorder %s27, 0
    %p238 = por %p236, %p237
    %s239 = ssub.s32 %s29, %s36
    %p240 = scmp.eq.s32.totalorder %s239, 0
    %s242 = sadd.s32 %s241, 1
    %s243 = scalar_select %p240, %s241, %s242
    %p246 = pneg %p240
    %p247 = scmp.eq.s32.totalorder %s21, 3
    %p248 = por %p246, %p247
    %p249 = scmp.ne.s32.totalorder %s241, %s244
    %p250 = scmp.eq.s32.totalorder %s21, 0
    %p251 = por %p249, %p250
    %p252 = scmp.ne.s32.totalorder %s241, %s244
    %p253 = scmp.eq.s32.totalorder %s26, 3
    %p254 = por %p252, %p253
    %p255 = scmp.ne.s32.totalorder %s244, %s245
    %p256 = scmp.eq.s32.totalorder %s26, 0
    %p257 = por %p255, %p256
    %p258 = scmp.ne.s32.totalorder %s244, %s245
    %p259 = scmp.eq.s32.totalorder %s27, 3
    %p260 = por %p258, %p259
    %p262 = scmp.ne.s32.totalorder %s245, %s261
    %p263 = scmp.eq.s32.totalorder %s27, 0
    %p264 = por %p262, %p263
    %s265 = ssub.s32 %s29, %s36
    %p266 = scmp.eq.s32.totalorder %s265, 0
    %s268 = sadd.s32 %s267, 1
    %s269 = scalar_select %p266, %s267, %s268
    %p272 = pneg %p266
    %p273 = scmp.eq.s32.totalorder %s21, 3
    %p274 = por %p272, %p273
    %p275 = scmp.ne.s32.totalorder %s267, %s270
    %p276 = scmp.eq.s32.totalorder %s21, 0
    %p277 = por %p275, %p276
    %p278 = scmp.ne.s32.totalorder %s267, %s270
    %p279 = scmp.eq.s32.totalorder %s26, 3
    %p280 = por %p278, %p279
    %p281 = scmp.ne.s32.totalorder %s270, %s271
    %p282 = scmp.eq.s32.totalorder %s26, 0
    %p283 = por %p281, %p282
    %p284 = scmp.ne.s32.totalorder %s270, %s271
    %p285 = scmp.eq.s32.totalorder %s27, 3
    %p286 = por %p284, %p285
    %p288 = scmp.ne.s32.totalorder %s271, %s287
    %p289 = scmp.eq.s32.totalorder %s27, 0
    %p290 = por %p288, %p289
    %s291 = ssub.s32 %s29, %s36
    %p292 = scmp.eq.s32.totalorder %s291, 0
    %s294 = sadd.s32 %s293, 1
    %s295 = scalar_select %p292, %s293, %s294
    %p298 = pneg %p292
    %p299 = scmp.eq.s32.totalorder %s21, 3
    %p300 = por %p298, %p299
    %p301 = scmp.ne.s32.totalorder %s293, %s296
    %p302 = scmp.eq.s32.totalorder %s21, 0
    %p303 = por %p301, %p302
    %p304 = scmp.ne.s32.totalorder %s293, %s296
    %p305 = scmp.eq.s32.totalorder %s26, 3
    %p306 = por %p304, %p305
    %p307 = scmp.ne.s32.totalorder %s296, %s297
    %p308 = scmp.eq.s32.totalorder %s26, 0
    %p309 = por %p307, %p308
    %p310 = scmp.ne.s32.totalorder %s296, %s297
    %p311 = scmp.eq.s32.totalorder %s27, 3
    %p312 = por %p310, %p311
    %p314 = scmp.ne.s32.totalorder %s297, %s313
    %p315 = scmp.eq.s32.totalorder %s27, 0
    %p316 = por %p314, %p315
    %s317 = ssub.s32 %s29, %s36
    %p318 = scmp.eq.s32.totalorder %s317, 0
    %s320 = sadd.s32 %s319, 1
    %s321 = scalar_select %p318, %s319, %s320
    %p324 = pneg %p318
    %p325 = scmp.eq.s32.totalorder %s21, 3
    %p326 = por %p324, %p325
    %p327 = scmp.ne.s32.totalorder %s319, %s322
    %p328 = scmp.eq.s32.totalorder %s21, 0
    %p329 = por %p327, %p328
    %p330 = scmp.ne.s32.totalorder %s319, %s322
    %p331 = scmp.eq.s32.totalorder %s26, 3
    %p332 = por %p330, %p331
    %p333 = scmp.ne.s32.totalorder %s322, %s323
    %p334 = scmp.eq.s32.totalorder %s26, 0
    %p335 = por %p333, %p334
    %p336 = scmp.ne.s32.totalorder %s322, %s323
    %p337 = scmp.eq.s32.totalorder %s27, 3
    %p338 = por %p336, %p337
    %p340 = scmp.ne.s32.totalorder %s323, %s339
    %p341 = scmp.eq.s32.totalorder %s27, 0
    %p342 = por %p340, %p341
    %s343 = ssub.s32 %s29, %s36
    %p344 = scmp.eq.s32.totalorder %s343, 0
    %s346 = sadd.s32 %s345, 1
    %s347 = scalar_select %p344, %s345, %s346
    %p350 = pneg %p344
    %p351 = scmp.eq.s32.totalorder %s21, 3
    %p352 = por %p350, %p351
    %p353 = scmp.ne.s32.totalorder %s345, %s348
    %p354 = scmp.eq.s32.totalorder %s21, 0
    %p355 = por %p353, %p354
    %p356 = scmp.ne.s32.totalorder %s345, %s348
    %p357 = scmp.eq.s32.totalorder %s26, 3
    %p358 = por %p356, %p357
    %p359 = scmp.ne.s32.totalorder %s348, %s349
    %p360 = scmp.eq.s32.totalorder %s26, 0
    %p361 = por %p359, %p360
    %p362 = scmp.ne.s32.totalorder %s348, %s349
    %p363 = scmp.eq.s32.totalorder %s27, 3
    %p364 = por %p362, %p363
    %p366 = scmp.ne.s32.totalorder %s349, %s365
    %p367 = scmp.eq.s32.totalorder %s27, 0
    %p368 = por %p366, %p367
    %s369 = ssub.s32 %s29, %s36
    %p370 = scmp.eq.s32.totalorder %s369, 0
    %s372 = sadd.s32 %s371, 1
    %s373 = scalar_select %p370, %s371, %s372
    %p376 = pneg %p370
    %p377 = scmp.eq.s32.totalorder %s21, 3
    %p378 = por %p376, %p377
    %p379 = scmp.ne.s32.totalorder %s371, %s374
    %p380 = scmp.eq.s32.totalorder %s21, 0
    %p381 = por %p379, %p380
    %p382 = scmp.ne.s32.totalorder %s371, %s374
    %p383 = scmp.eq.s32.totalorder %s26, 3
    %p384 = por %p382, %p383
    %p385 = scmp.ne.s32.totalorder %s374, %s375
    %p386 = scmp.eq.s32.totalorder %s26, 0
    %p387 = por %p385, %p386
    %p388 = scmp.ne.s32.totalorder %s374, %s375
    %p389 = scmp.eq.s32.totalorder %s27, 3
    %p390 = por %p388, %p389
    %p392 = scmp.ne.s32.totalorder %s375, %s391
    %p393 = scmp.eq.s32.totalorder %s27, 0
    %p394 = por %p392, %p393
    %s395 = ssub.s32 %s29, %s36
    %p396 = scmp.eq.s32.totalorder %s395, 0
    %s398 = sadd.s32 %s397, 1
    %s399 = scalar_select %p396, %s397, %s398
    %p402 = pneg %p396
    %p403 = scmp.eq.s32.totalorder %s21, 3
    %p404 = por %p402, %p403
    %p405 = scmp.ne.s32.totalorder %s397, %s400
    %p406 = scmp.eq.s32.totalorder %s21, 0
    %p407 = por %p405, %p406
    %p408 = scmp.ne.s32.totalorder %s397, %s400
    %p409 = scmp.eq.s32.totalorder %s26, 3
    %p410 = por %p408, %p409
    %p411 = scmp.ne.s32.totalorder %s400, %s401
    %p412 = scmp.eq.s32.totalorder %s26, 0
    %p413 = por %p411, %p412
    %p414 = scmp.ne.s32.totalorder %s400, %s401
    %p415 = scmp.eq.s32.totalorder %s27, 3
    %p416 = por %p414, %p415
    %p418 = scmp.ne.s32.totalorder %s401, %s417
    %p419 = scmp.eq.s32.totalorder %s27, 0
    %p420 = por %p418, %p419
    %s421 = ssub.s32 %s28, %s40
    %p422 = scmp.eq.s32.totalorder %s421, 0
    %s424 = sadd.s32 %s423, 1
    %s425 = scalar_select %p422, %s423, %s424
    %p428 = pneg %p422
    %p429 = scmp.eq.s32.totalorder %s21, 3
    %p430 = por %p428, %p429
    %p431 = scmp.ne.s32.totalorder %s423, %s426
    %p432 = scmp.eq.s32.totalorder %s21, 0
    %p433 = por %p431, %p432
    %p434 = scmp.ne.s32.totalorder %s423, %s426
    %p435 = scmp.eq.s32.totalorder %s26, 3
    %p436 = por %p434, %p435
    %p437 = scmp.ne.s32.totalorder %s426, %s427
    %p438 = scmp.eq.s32.totalorder %s26, 0
    %p439 = por %p437, %p438
    %p440 = scmp.ne.s32.totalorder %s426, %s427
    %p441 = scmp.eq.s32.totalorder %s27, 3
    %p442 = por %p440, %p441
    %p444 = scmp.ne.s32.totalorder %s427, %s443
    %p445 = scmp.eq.s32.totalorder %s27, 0
    %p446 = por %p444, %p445
    %p447 = scmp.le.s32.totalorder 1, %s21
    %p448 = scmp.lt.s32.totalorder %s21, 5
    %p449 = pnand %p447, %p448
    %p450 = pneg %p449
    // Predicated region
    $region9: #{transformer_encoder_forward.1} parent=5 // pred_check
      _
    $region10: #{transformer_encoder_forward.1} parent=5 // pred_check_branch
      %452 = sbr.rel (%p449) target = $region12
    $region11: #{transformer_encoder_forward.1} parent=5 // pred_region
      %s453 = ssub.s32 %s21, 1
      // Predicated region
      $region13: #{transformer_encoder_forward.1} parent=11 // pred_check
        %p454 = pneg %p80
      $region14: #{transformer_encoder_forward.1} parent=11 // pred_check_branch
        %456 = sbr.rel (%p454) target = $region16
      $region15: #{transformer_encoder_forward.1} parent=11 // pred_region
        _
      $region16: #{transformer_encoder_forward.1} parent=11 // pred_fallthru
        _
      // Predicated region
      $region17: #{transformer_encoder_forward.1} parent=11 // pred_check
        %p457 = pneg %p101
      $region18: #{transformer_encoder_forward.1} parent=11 // pred_check_branch
        %459 = sbr.rel (%p457) target = $region20
      $region19: #{transformer_encoder_forward.1} parent=11 // pred_region
        _
      $region20: #{transformer_encoder_forward.1} parent=11 // pred_fallthru
        _
    $region12: #{transformer_encoder_forward.1} parent=5 // pred_fallthru
      _
    %p460 = scmp.lt.s32.totalorder %s21, 4
    // Predicated region
    $region21: #{transformer_encoder_forward.1} parent=5 // pred_check
      %p461 = pneg %p460
    $region22: #{transformer_encoder_forward.1} parent=5 // pred_check_branch
      %463 = sbr.rel (%p461) target = $region24
    $region23: #{transformer_encoder_forward.1} parent=5 // pred_region
      // Predicated region
      $region25: #{transformer_encoder_forward.1} parent=23 // pred_check
        %p464 = pneg %p53
      $region26: #{transformer_encoder_forward.1} parent=23 // pred_check_branch
        %466 = sbr.rel (%p464) target = $region28
      $region27: #{transformer_encoder_forward.1} parent=23 // pred_region
        %p467 = scmp.lt.s32.totalorder %s28, 1
        %s468 = scalar_select %p467, %s28, 1
        %s469 = smul.addr %s468, 3
        %s470 = smul.addr %s469, 8
        %s471 = scalar_lea.vmem %s0, %s470
      $region28: #{transformer_encoder_forward.1} parent=23 // pred_fallthru
        _
      // Predicated region
      $region29: #{transformer_encoder_forward.1} parent=23 // pred_check
        %p472 = pneg %p121
      $region30: #{transformer_encoder_forward.1} parent=23 // pred_check_branch
        %474 = sbr.rel (%p472) target = $region32
      $region31: #{transformer_encoder_forward.1} parent=23 // pred_region
        %p475 = scmp.lt.s32.totalorder %s29, 1
        %s476 = scalar_select %p475, %s29, 1
        %s477 = smul.addr %s476, 4
        %s478 = smul.addr %s477, 8
        %s479 = scalar_lea.vmem %s3, %s478
      $region32: #{transformer_encoder_forward.1} parent=23 // pred_fallthru
        _
      // Predicated region
      $region33: #{transformer_encoder_forward.1} parent=23 // pred_check
        %p480 = pneg %p147
      $region34: #{transformer_encoder_forward.1} parent=23 // pred_check_branch
        %482 = sbr.rel (%p480) target = $region36
      $region35: #{transformer_encoder_forward.1} parent=23 // pred_region
        %p483 = scmp.lt.s32.totalorder %s29, 1
        %s484 = scalar_select %p483, %s29, 1
        %s485 = scalar_lea.vmem %s4, %s484
      $region36: #{transformer_encoder_forward.1} parent=23 // pred_fallthru
        _
      // Predicated region
      $region37: #{transformer_encoder_forward.1} parent=23 // pred_check
        %p486 = pneg %p173
      $region38: #{transformer_encoder_forward.1} parent=23 // pred_check_branch
        %488 = sbr.rel (%p486) target = $region40
      $region39: #{transformer_encoder_forward.1} parent=23 // pred_region
        %p489 = scmp.lt.s32.totalorder %s29, 1
        %s490 = scalar_select %p489, %s29, 1
        %s491 = smul.addr %s490, 4
        %s492 = smul.addr %s491, 8
        %s493 = scalar_lea.vmem %s5, %s492
      $region40: #{transformer_encoder_forward.1} parent=23 // pred_fallthru
        _
      // Predicated region
      $region41: #{transformer_encoder_forward.1} parent=23 // pred_check
        %p494 = pneg %p199
      $region42: #{transformer_encoder_forward.1} parent=23 // pred_check_branch
        %496 = sbr.rel (%p494) target = $region44
      $region43: #{transformer_encoder_forward.1} parent=23 // pred_region
        %p497 = scmp.lt.s32.totalorder %s29, 1
        %s498 = scalar_select %p497, %s29, 1
        %s499 = scalar_lea.vmem %s6, %s498
      $region44: #{transformer_encoder_forward.1} parent=23 // pred_fallthru
        _
      // Predicated region
      $region45: #{transformer_encoder_forward.1} parent=23 // pred_check
        %p500 = pneg %p225
      $region46: #{transformer_encoder_forward.1} parent=23 // pred_check_branch
        %502 = sbr.rel (%p500) target = $region48
      $region47: #{transformer_encoder_forward.1} parent=23 // pred_region
        %p503 = scmp.lt.s32.totalorder %s29, 1
        %s504 = scalar_select %p503, %s29, 1
        %s505 = smul.addr %s504, 64
        %s506 = smul.addr %s505, 4
        %s507 = scalar_lea.vmem %s7, %s506
      $region48: #{transformer_encoder_forward.1} parent=23 // pred_fallthru
        _
      // Predicated region
      $region49: #{transformer_encoder_forward.1} parent=23 // pred_check
        %p508 = pneg %p251
      $region50: #{transformer_encoder_forward.1} parent=23 // pred_check_branch
        %510 = sbr.rel (%p508) target = $region52
      $region51: #{transformer_encoder_forward.1} parent=23 // pred_region
        %p511 = scmp.lt.s32.totalorder %s29, 1
        %s512 = scalar_select %p511, %s29, 1
        %s513 = smul.addr %s512, 16
        %s514 = scalar_lea.vmem %s8, %s513
      $region52: #{transformer_encoder_forward.1} parent=23 // pred_fallthru
        _
      // Predicated region
      $region53: #{transformer_encoder_forward.1} parent=23 // pred_check
        %p515 = pneg %p277
      $region54: #{transformer_encoder_forward.1} parent=23 // pred_check_branch
        %517 = sbr.rel (%p515) target = $region56
      $region55: #{transformer_encoder_forward.1} parent=23 // pred_region
        %p518 = scmp.lt.s32.totalorder %s29, 1
        %s519 = scalar_select %p518, %s29, 1
        %s520 = smul.addr %s519, 256
        %s521 = smul.addr %s520, 4
        %s522 = scalar_lea.vmem %s9, %s521
      $region56: #{transformer_encoder_forward.1} parent=23 // pred_fallthru
        _
      // Predicated region
      $region57: #{transformer_encoder_forward.1} parent=23 // pred_check
        %p523 = pneg %p303
      $region58: #{transformer_encoder_forward.1} parent=23 // pred_check_branch
        %525 = sbr.rel (%p523) target = $region60
      $region59: #{transformer_encoder_forward.1} parent=23 // pred_region
        %p526 = scmp.lt.s32.totalorder %s29, 1
        %s527 = scalar_select %p526, %s29, 1
        %s528 = scalar_lea.vmem %s10, %s527
      $region60: #{transformer_encoder_forward.1} parent=23 // pred_fallthru
        _
      // Predicated region
      $region61: #{transformer_encoder_forward.1} parent=23 // pred_check
        %p529 = pneg %p329
      $region62: #{transformer_encoder_forward.1} parent=23 // pred_check_branch
        %531 = sbr.rel (%p529) target = $region64
      $region63: #{transformer_encoder_forward.1} parent=23 // pred_region
        %p532 = scmp.lt.s32.totalorder %s29, 1
        %s533 = scalar_select %p532, %s29, 1
        %s534 = scalar_lea.vmem %s11, %s533
      $region64: #{transformer_encoder_forward.1} parent=23 // pred_fallthru
        _
      // Predicated region
      $region65: #{transformer_encoder_forward.1} parent=23 // pred_check
        %p535 = pneg %p355
      $region66: #{transformer_encoder_forward.1} parent=23 // pred_check_branch
        %537 = sbr.rel (%p535) target = $region68
      $region67: #{transformer_encoder_forward.1} parent=23 // pred_region
        %p538 = scmp.lt.s32.totalorder %s29, 1
        %s539 = scalar_select %p538, %s29, 1
        %s540 = scalar_lea.vmem %s12, %s539
      $region68: #{transformer_encoder_forward.1} parent=23 // pred_fallthru
        _
      // Predicated region
      $region69: #{transformer_encoder_forward.1} parent=23 // pred_check
        %p541 = pneg %p381
      $region70: #{transformer_encoder_forward.1} parent=23 // pred_check_branch
        %543 = sbr.rel (%p541) target = $region72
      $region71: #{transformer_encoder_forward.1} parent=23 // pred_region
        %p544 = scmp.lt.s32.totalorder %s29, 1
        %s545 = scalar_select %p544, %s29, 1
        %s546 = scalar_lea.vmem %s13, %s545
      $region72: #{transformer_encoder_forward.1} parent=23 // pred_fallthru
        _
      // Predicated region
      $region73: #{transformer_encoder_forward.1} parent=23 // pred_check
        %p547 = pneg %p407
      $region74: #{transformer_encoder_forward.1} parent=23 // pred_check_branch
        %549 = sbr.rel (%p547) target = $region76
      $region75: #{transformer_encoder_forward.1} parent=23 // pred_region
        %p550 = scmp.lt.s32.totalorder %s29, 1
        %s551 = scalar_select %p550, %s29, 1
        %s552 = scalar_lea.vmem %s14, %s551
      $region76: #{transformer_encoder_forward.1} parent=23 // pred_fallthru
        _
    $region24: #{transformer_encoder_forward.1} parent=5 // pred_fallthru
      _
    %p553 = scmp.le.s32.totalorder 1, %s21
    %p554 = scmp.lt.s32.totalorder %s21, 5
    %p555 = pnand %p553, %p554
    %p556 = pneg %p555
    // Predicated region
    $region77: #{transformer_encoder_forward.1} parent=5 // pred_check
      _
    $region78: #{transformer_encoder_forward.1} parent=5 // pred_check_branch
      %558 = sbr.rel (%p555) target = $region80
    $region79: #{transformer_encoder_forward.1} parent=5 // pred_region
      %s559 = ssub.s32 %s21, 1
      %p560 = scmp.lt.s32.totalorder %s30, 1
      %s561 = scalar_select %p560, %s30, 1
      %s562 = smul.addr %s561, 3
      %s563 = smul.addr %s562, 8
      %s564 = scalar_lea.vmem %s0, %s563
      %p565 = pneg %p59
      %p566 = pneg %p56
      %p567 = pneg %p80
      %p568 = pneg %p77
      %p569 = pneg %p101
      %p570 = pneg %p98
      %p571 = scmp.lt.s32.totalorder %s31, 1
      %s572 = scalar_select %p571, %s31, 1
      %s573 = smul.addr %s572, 4
      %s574 = smul.addr %s573, 8
      %s575 = scalar_lea.vmem %s3, %s574
      %p576 = pneg %p127
      %p577 = pneg %p124
      %p578 = scmp.lt.s32.totalorder %s31, 1
      %s579 = scalar_select %p578, %s31, 1
      %s580 = scalar_lea.vmem %s4, %s579
      %p581 = pneg %p153
      %p582 = pneg %p150
      %p583 = scmp.lt.s32.totalorder %s31, 1
      %s584 = scalar_select %p583, %s31, 1
      %s585 = smul.addr %s584, 4
      %s586 = smul.addr %s585, 8
      %s587 = scalar_lea.vmem %s5, %s586
      %p588 = pneg %p179
      %p589 = pneg %p176
      %p590 = scmp.lt.s32.totalorder %s31, 1
      %s591 = scalar_select %p590, %s31, 1
      %s592 = scalar_lea.vmem %s6, %s591
      %p593 = pneg %p205
      %p594 = pneg %p202
      %p595 = scmp.lt.s32.totalorder %s31, 1
      %s596 = scalar_select %p595, %s31, 1
      %s597 = smul.addr %s596, 64
      %s598 = smul.addr %s597, 4
      %s599 = scalar_lea.vmem %s7, %s598
      %p600 = pneg %p231
      %p601 = pneg %p228
      %p602 = scmp.lt.s32.totalorder %s31, 1
      %s603 = scalar_select %p602, %s31, 1
      %s604 = smul.addr %s603, 16
      %s605 = scalar_lea.vmem %s8, %s604
      %p606 = pneg %p257
      %p607 = pneg %p254
      %p608 = scmp.lt.s32.totalorder %s31, 1
      %s609 = scalar_select %p608, %s31, 1
      %s610 = smul.addr %s609, 256
      %s611 = smul.addr %s610, 4
      %s612 = scalar_lea.vmem %s9, %s611
      %p613 = pneg %p283
      %p614 = pneg %p280
      %p615 = scmp.lt.s32.totalorder %s31, 1
      %s616 = scalar_select %p615, %s31, 1
      %s617 = scalar_lea.vmem %s10, %s616
      %p618 = pneg %p309
      %p619 = pneg %p306
      %p620 = scmp.lt.s32.totalorder %s31, 1
      %s621 = scalar_select %p620, %s31, 1
      %s622 = scalar_lea.vmem %s11, %s621
      %p623 = pneg %p335
      %p624 = pneg %p332
      %p625 = scmp.lt.s32.totalorder %s31, 1
      %s626 = scalar_select %p625, %s31, 1
      %s627 = scalar_lea.vmem %s12, %s626
      %p628 = pneg %p361
      %p629 = pneg %p358
      %p630 = scmp.lt.s32.totalorder %s31, 1
      %s631 = scalar_select %p630, %s31, 1
      %s632 = scalar_lea.vmem %s13, %s631
      %p633 = pneg %p387
      %p634 = pneg %p384
      %p635 = scmp.lt.s32.totalorder %s31, 1
      %s636 = scalar_select %p635, %s31, 1
      %s637 = scalar_lea.vmem %s14, %s636
      %p638 = pneg %p413
      %p639 = pneg %p410
      %p640 = pneg %p439
      %p641 = pneg %p436
      %p642 = scmp.lt.s32.totalorder %s30, 1
      %s643 = scalar_select %p642, %s30, 1
      %s644 = smul.addr %s643, 3
      %s645 = smul.addr %s644, 8
      %s646 = scalar_lea.vmem %s15, %s645
      %p647 = scmp.lt.s32.totalorder %s30, 1
      %s648 = scalar_select %p647, %s30, 1
      %s649 = smul.addr %s648, 3
      %s650 = smul.addr %s649, 8
      %s651 = scalar_lea.vmem %s0, %s650
      %p652 = scmp.lt.s32.totalorder %s31, 1
      %s653 = scalar_select %p652, %s31, 1
      %s654 = smul.addr %s653, 4
      %s655 = smul.addr %s654, 8
      %s656 = scalar_lea.vmem %s3, %s655
      %p657 = scmp.lt.s32.totalorder %s31, 1
      %s658 = scalar_select %p657, %s31, 1
      %s659 = scalar_lea.vmem %s4, %s658
      %p660 = scmp.lt.s32.totalorder %s31, 1
      %s661 = scalar_select %p660, %s31, 1
      %s662 = smul.addr %s661, 4
      %s663 = smul.addr %s662, 8
      %s664 = scalar_lea.vmem %s5, %s663
      %p665 = scmp.lt.s32.totalorder %s31, 1
      %s666 = scalar_select %p665, %s31, 1
      %s667 = scalar_lea.vmem %s6, %s666
      %p668 = scmp.lt.s32.totalorder %s31, 1
      %s669 = scalar_select %p668, %s31, 1
      %s670 = smul.addr %s669, 64
      %s671 = smul.addr %s670, 4
      %s672 = scalar_lea.vmem %s7, %s671
      %p673 = scmp.lt.s32.totalorder %s31, 1
      %s674 = scalar_select %p673, %s31, 1
      %s675 = smul.addr %s674, 16
      %s676 = scalar_lea.vmem %s8, %s675
      %p677 = scmp.lt.s32.totalorder %s31, 1
      %s678 = scalar_select %p677, %s31, 1
      %s679 = smul.addr %s678, 256
      %s680 = smul.addr %s679, 4
      %s681 = scalar_lea.vmem %s9, %s680
      %p682 = scmp.lt.s32.totalorder %s31, 1
      %s683 = scalar_select %p682, %s31, 1
      %s684 = scalar_lea.vmem %s10, %s683
      %p685 = scmp.lt.s32.totalorder %s31, 1
      %s686 = scalar_select %p685, %s31, 1
      %s687 = scalar_lea.vmem %s11, %s686
      %p688 = scmp.lt.s32.totalorder %s31, 1
      %s689 = scalar_select %p688, %s31, 1
      %s690 = scalar_lea.vmem %s12, %s689
      %p691 = scmp.lt.s32.totalorder %s31, 1
      %s692 = scalar_select %p691, %s31, 1
      %s693 = scalar_lea.vmem %s13, %s692
      %p694 = scmp.lt.s32.totalorder %s31, 1
      %s695 = scalar_select %p694, %s31, 1
      %s696 = scalar_lea.vmem %s14, %s695
      %p697 = scmp.lt.s32.totalorder %s30, 1
      %s698 = scalar_select %p697, %s30, 1
      %s699 = smul.addr %s698, 3
      %s700 = smul.addr %s699, 8
      %s701 = scalar_lea.vmem %s15, %s700
      %p703 = scmp.eq.s32.totalorder %s31, 0
      // Predicated region
      $region81: #{transformer_encoder_forward.1} parent=79 // pred_check
        %p704 = pneg %p703
      $region82: #{transformer_encoder_forward.1} parent=79 // pred_check_branch
        %706 = sbr.rel (%p704) target = $region84
      $region83: #{transformer_encoder_forward.1} parent=79 // pred_region
        %v707 = vld [vmem:[%s651] sm:$0xff]
        %v708 = vld [vmem:[%s651 + $0x8] sm:$0xff]
        %v709 = vld [vmem:[%s651 + $0x10] sm:$0xff]
        %v710 = vld [vmem:[%s1] sm:$0xf]
        %v711 = vld [vmem:[%s2] sm:$0xff]
        %v712 = vld [vmem:[%s2 + $0x8] sm:$0xff]
        %v713 = vld [vmem:[%s2 + $0x10] sm:$0xff]
        %vm714 = vcmask 31744
        %v716 = vsel %vm714, %v707, 0
        %v719 = vsel %vm714, %v708, 0
        %v722 = vsel %vm714, %v709, 0
        %vm724 = vcmask 1043456
        %v726 = vsel %vm724, %v710, 0
        %728 = vmatprep.subr.mxu0 0.0
        %729 = vmatpush1.msra.mxu0 0.0
        %730 = vmatprep.subr.mxu0 0.0
        %731 = vmatpush1.msra.mxu0 0.0
        %732 = vmatprep.subr.mxu0 0.0
        %733 = vmatpush1.msra.mxu0 0.0
        %734 = vmatprep.subr.mxu0 0.0
        %735 = vmatpush1.msra.mxu0 0.0
        %736 = vmatprep.subr.mxu0 0.0
        %737 = vmatpush1.msra.mxu0 0.0
        %738 = vmatprep.subr.mxu0 0.0
        %739 = vmatpush1.msra.mxu0 0.0
        %740 = vmatprep.subr.mxu0 0.0
        %741 = vmatpush1.msra.mxu0 0.0
        %742 = vmatprep.subr.mxu0 0.0
        %743 = vmatpush1.msra.mxu0 0.0
        %744 = vmatprep.subr.mxu0 0.0
        %745 = vmatpush1.msra.mxu0 0.0
        %746 = vmatprep.subr.mxu0 0.0
        %747 = vmatpush1.msra.mxu0 0.0
        %748 = vmatprep.subr.mxu0 0.0
        %749 = vmatpush1.msra.mxu0 0.0
        %750 = vmatprep.subr.mxu0 0.0
        %751 = vmatpush1.msra.mxu0 0.0
        %752 = vmatprep.subr.mxu0 0.0
        %753 = vmatpush1.msra.mxu0 0.0
        %754 = vmatprep.subr.mxu0 0.0
        %755 = vmatpush1.msra.mxu0 0.0
        %756 = vmatprep.subr.mxu0 0.0
        %757 = vmatpush1.msra.mxu0 0.0
        %758 = vmatprep.subr.mxu0 0.0
        %759 = vmatpush1.msra.mxu0 %v726
        %760 = vmatprep.subr.mxu0 0.0
        %761 = vmatpush2.msra.mxu0 0.0
        %762 = vmatprep.subr.mxu0 0.0
        %763 = vmatpush2.msra.mxu0 0.0
        %764 = vmatprep.subr.mxu0 0.0
        %765 = vmatpush2.msra.mxu0 0.0
        %766 = vmatprep.subr.mxu0 0.0
        %767 = vmatpush2.msra.mxu0 0.0
        %768 = vmatprep.subr.mxu0 0.0
        %769 = vmatpush2.msra.mxu0 0.0
        %770 = vmatprep.subr.mxu0 0.0
        %771 = vmatpush2.msra.mxu0 0.0
        %772 = vmatprep.subr.mxu0 0.0
        %773 = vmatpush2.msra.mxu0 0.0
        %774 = vmatprep.subr.mxu0 0.0
        %775 = vmatpush2.msra.mxu0 0.0
        %776 = vmatprep.subr.mxu0 0.0
        %777 = vmatpush2.msra.mxu0 0.0
        %778 = vmatprep.subr.mxu0 0.0
        %779 = vmatpush2.msra.mxu0 0.0
        %780 = vmatprep.subr.mxu0 0.0
        %781 = vmatpush2.msra.mxu0 0.0
        %782 = vmatprep.subr.mxu0 0.0
        %783 = vmatpush2.msra.mxu0 0.0
        %784 = vmatprep.subr.mxu0 0.0
        %785 = vmatpush2.msra.mxu0 0.0
        %786 = vmatprep.subr.mxu0 0.0
        %787 = vmatpush2.msra.mxu0 0.0
        %788 = vmatprep.subr.mxu0 0.0
        %789 = vmatpush2.msra.mxu0 0.0
        %790 = vmatprep.subr.mxu0 0.0
        %791 = vmatpush2.msra.mxu0 0.0
        %792 = vmatprep.mubr.f32.mxu0 0.0
        %793 = vmatmul.mubr.f32.gmra.mxu0 %v716
        %v794 = vpop.f32.mrf.mxu0
        %v795 = vadd.f32 %v711, %v794
        %v796 = vpop.f32.mrf.mxu0
        %797 = vmatprep.mubr.f32.mxu0 0.0
        %798 = vmatmul.mubr.f32.gmra.mxu0 %v719
        %v799 = vpop.f32.mrf.mxu0
        %v800 = vadd.f32 %v712, %v799
        %v801 = vpop.f32.mrf.mxu0
        %802 = vmatprep.mubr.f32.mxu0 0.0
        %803 = vmatmul.mubr.f32.gmra.mxu0 %v722
        %v804 = vpop.f32.mrf.mxu0
        %v805 = vadd.f32 %v713, %v804
        %v806 = vpop.f32.mrf.mxu0
        %807 = vdwg.mxu0
        %vm808 = vcmask 261120
        %809 = vst.msk [vmem:[#allocation2] sm:$0xff] %vm808, %v795
        %810 = vst.msk [vmem:[#allocation2 + $0x8] sm:$0xff] %vm808, %v800
        %811 = vst.msk [vmem:[#allocation2 + $0x10] sm:$0xff] %vm808, %v805
      $region84: #{transformer_encoder_forward.1} parent=79 // pred_fallthru
        _
      %v812 = vld [vmem:[#allocation2] sm:$0xff]
      %v813 = vld [vmem:[#allocation2 + $0x8] sm:$0xff]
      %v814 = vld [vmem:[#allocation2 + $0x10] sm:$0xff]
      %v815 = vld [vmem:[%s656] sm:$0xff]
      %v816 = vld [vmem:[%s656 + $0x8] sm:$0xff]
      %v817 = vld [vmem:[%s656 + $0x10] sm:$0xff]
      %v818 = vld [vmem:[%s656 + $0x18] sm:$0xff]
      %v819 = vld [vmem:[%s659] sm:$0x1]
      %v821 = vlaneseq
      %v822 = vshrl.u32 %v821, 7
      %v823 = vsub.s32 0, %v822
      %v824 = vrot.slane %v819, %v823
      %vm826 = vcmask 261120
      %v828 = vsel %vm826, %v812, 0
      %v831 = vsel %vm826, %v813, 0
      %v834 = vsel %vm826, %v814, 0
      %836 = vmatprep.subr.mxu0 0.0
      %837 = vmatpush1.msra.mxu0 0.0
      %838 = vmatprep.subr.mxu0 0.0
      %839 = vmatpush1.msra.mxu0 0.0
      %840 = vmatprep.subr.mxu0 0.0
      %841 = vmatpush1.msra.mxu0 0.0
      %842 = vmatprep.subr.mxu0 0.0
      %843 = vmatpush1.msra.mxu0 0.0
      %844 = vmatprep.subr.mxu0 0.0
      %845 = vmatpush1.msra.mxu0 0.0
      %846 = vmatprep.subr.mxu0 0.0
      %847 = vmatpush1.msra.mxu0 0.0
      %848 = vmatprep.subr.mxu0 0.0
      %849 = vmatpush1.msra.mxu0 0.0
      %850 = vmatprep.subr.mxu0 0.0
      %851 = vmatpush1.msra.mxu0 0.0
      %852 = vmatprep.subr.mxu0 0.0
      %853 = vmatpush1.msra.mxu0 0.0
      %854 = vmatprep.subr.mxu0 0.0
      %855 = vmatpush1.msra.mxu0 0.0
      %856 = vmatprep.subr.mxu0 0.0
      %857 = vmatpush1.msra.mxu0 0.0
      %858 = vmatprep.subr.mxu0 0.0
      %859 = vmatpush1.msra.mxu0 0.0
      %860 = vmatprep.subr.mxu0 0.0
      %861 = vmatpush1.msra.mxu0 %v818
      %862 = vmatprep.subr.mxu0 0.0
      %863 = vmatpush1.msra.mxu0 %v817
      %864 = vmatprep.subr.mxu0 0.0
      %865 = vmatpush1.msra.mxu0 %v816
      %866 = vmatprep.subr.mxu0 0.0
      %867 = vmatpush1.msra.mxu0 %v815
      %868 = vmatprep.subr.mxu0 0.0
      %869 = vmatpush2.msra.mxu0 0.0
      %870 = vmatprep.subr.mxu0 0.0
      %871 = vmatpush2.msra.mxu0 0.0
      %872 = vmatprep.subr.mxu0 0.0
      %873 = vmatpush2.msra.mxu0 0.0
      %874 = vmatprep.subr.mxu0 0.0
      %875 = vmatpush2.msra.mxu0 0.0
      %876 = vmatprep.subr.mxu0 0.0
      %877 = vmatpush2.msra.mxu0 0.0
      %878 = vmatprep.subr.mxu0 0.0
      %879 = vmatpush2.msra.mxu0 0.0
      %880 = vmatprep.subr.mxu0 0.0
      %881 = vmatpush2.msra.mxu0 0.0
      %882 = vmatprep.subr.mxu0 0.0
      %883 = vmatpush2.msra.mxu0 0.0
      %884 = vmatprep.subr.mxu0 0.0
      %885 = vmatpush2.msra.mxu0 0.0
      %886 = vmatprep.subr.mxu0 0.0
      %887 = vmatpush2.msra.mxu0 0.0
      %888 = vmatprep.subr.mxu0 0.0
      %889 = vmatpush2.msra.mxu0 0.0
      %890 = vmatprep.subr.mxu0 0.0
      %891 = vmatpush2.msra.mxu0 0.0
      %892 = vmatprep.subr.mxu0 0.0
      %893 = vmatpush2.msra.mxu0 0.0
      %894 = vmatprep.subr.mxu0 0.0
      %895 = vmatpush2.msra.mxu0 0.0
      %896 = vmatprep.subr.mxu0 0.0
      %897 = vmatpush2.msra.mxu0 0.0
      %898 = vmatprep.subr.mxu0 0.0
      %899 = vmatpush2.msra.mxu0 0.0
      %900 = vmatprep.mubr.f32.mxu0 0.0
      %901 = vmatmul.mubr.f32.gmra.mxu0 %v828
      %v902 = vpop.f32.mrf.mxu0
      %v903 = vadd.f32 %v824, %v902
      %v904 = vpop.f32.mrf.mxu0
      %905 = vmatprep.mubr.f32.mxu0 0.0
      %906 = vmatmul.mubr.f32.gmra.mxu0 %v831
      %v907 = vpop.f32.mrf.mxu0
      %v908 = vadd.f32 %v824, %v907
      %v909 = vpop.f32.mrf.mxu0
      %910 = vmatprep.mubr.f32.mxu0 0.0
      %911 = vmatmul.mubr.f32.gmra.mxu0 %v834
      %v912 = vpop.f32.mrf.mxu0
      %v913 = vadd.f32 %v824, %v912
      %v914 = vpop.f32.mrf.mxu0
      %915 = vdwg.mxu0
      %v916 = vlaneseq
      %v917 = vand.u32 %v916, 127
      %vm918 = vcmp.lt.s32.totalorder %v917, 17
      %v919 = vsel %vm918, 0.0, -1e+30
      %v920 = vld [vmem:[%s664] sm:$0xff]
      %v921 = vld [vmem:[%s664 + $0x8] sm:$0xff]
      %v922 = vld [vmem:[%s664 + $0x10] sm:$0xff]
      %v923 = vld [vmem:[%s664 + $0x18] sm:$0xff]
      %927 = vrot.lane.b32.xlu0 %v903, 96
      %v928 = vpop.permute.xlu0 %927
      %929 = vrot.lane.b32.xlu0 %v908, 96
      %v930 = vpop.permute.xlu0 %929
      %931 = vrot.lane.b32.xlu0 %v913, 96
      %v932 = vpop.permute.xlu0 %931
      %vm933 = vcmask 64512
      %v934 = vsel %vm933, %v903, 0
      %v936 = vsel %vm933, %v908, 0
      %v938 = vsel %vm933, %v913, 0
      %v940 = vsel %vm933, %v928, 0
      %v942 = vsel %vm933, %v930, 0
      %v944 = vsel %vm933, %v932, 0
      %946 = vmatprep.subr.mxu0 0.0
      %947 = vmatpush1.xpose.msra.mxu0 0.0
      %948 = vmatprep.subr.mxu0 0.0
      %949 = vmatpush1.xpose.msra.mxu0 0.0
      %950 = vmatprep.subr.mxu0 0.0
      %951 = vmatpush1.xpose.msra.mxu0 0.0
      %952 = vmatprep.subr.mxu0 0.0
      %953 = vmatpush1.xpose.msra.mxu0 0.0
      %954 = vmatprep.subr.mxu0 0.0
      %955 = vmatpush1.xpose.msra.mxu0 0.0
      %956 = vmatprep.subr.mxu0 0.0
      %957 = vmatpush1.xpose.msra.mxu0 0.0
      %958 = vmatprep.subr.mxu0 0.0
      %959 = vmatpush1.xpose.msra.mxu0 0.0
      %960 = vmatprep.subr.mxu0 0.0
      %961 = vmatpush1.xpose.msra.mxu0 0.0
      %962 = vmatprep.subr.mxu0 0.0
      %963 = vmatpush1.xpose.msra.mxu0 0.0
      %964 = vmatprep.subr.mxu0 0.0
      %965 = vmatpush1.xpose.msra.mxu0 0.0
      %966 = vmatprep.subr.mxu0 0.0
      %967 = vmatpush1.xpose.msra.mxu0 0.0
      %968 = vmatprep.subr.mxu0 0.0
      %969 = vmatpush1.xpose.msra.mxu0 0.0
      %970 = vmatprep.subr.mxu0 0.0
      %971 = vmatpush1.xpose.msra.mxu0 0.0
      %972 = vmatprep.subr.mxu0 0.0
      %973 = vmatpush1.xpose.msra.mxu0 %v944
      %974 = vmatprep.subr.mxu0 0.0
      %975 = vmatpush1.xpose.msra.mxu0 %v942
      %976 = vmatprep.subr.mxu0 0.0
      %977 = vmatpush1.xpose.msra.mxu0 %v940
      %978 = vmatprep.subr.mxu0 0.0
      %979 = vmatpush2.xpose.msra.mxu0 0.0
      %980 = vmatprep.subr.mxu0 0.0
      %981 = vmatpush2.xpose.msra.mxu0 0.0
      %982 = vmatprep.subr.mxu0 0.0
      %983 = vmatpush2.xpose.msra.mxu0 0.0
      %984 = vmatprep.subr.mxu0 0.0
      %985 = vmatpush2.xpose.msra.mxu0 0.0
      %986 = vmatprep.subr.mxu0 0.0
      %987 = vmatpush2.xpose.msra.mxu0 0.0
      %988 = vmatprep.subr.mxu0 0.0
      %989 = vmatpush2.xpose.msra.mxu0 0.0
      %990 = vmatprep.subr.mxu0 0.0
      %991 = vmatpush2.xpose.msra.mxu0 0.0
      %992 = vmatprep.subr.mxu0 0.0
      %993 = vmatpush2.xpose.msra.mxu0 0.0
      %994 = vmatprep.subr.mxu0 0.0
      %995 = vmatpush2.xpose.msra.mxu0 0.0
      %996 = vmatprep.subr.mxu0 0.0
      %997 = vmatpush2.xpose.msra.mxu0 0.0
      %998 = vmatprep.subr.mxu0 0.0
      %999 = vmatpush2.xpose.msra.mxu0 0.0
      %1000 = vmatprep.subr.mxu0 0.0
      %1001 = vmatpush2.xpose.msra.mxu0 0.0
      %1002 = vmatprep.subr.mxu0 0.0
      %1003 = vmatpush2.xpose.msra.mxu0 0.0
      %1004 = vmatprep.subr.mxu0 0.0
      %1005 = vmatpush2.xpose.msra.mxu0 0.0
      %1006 = vmatprep.subr.mxu0 0.0
      %1007 = vmatpush2.xpose.msra.mxu0 0.0
      %1008 = vmatprep.subr.mxu0 0.0
      %1009 = vmatpush2.xpose.msra.mxu0 0.0
      %1010 = vmatprep.mubr.f32.mxu0 0.0
      %1011 = vmatmul.mubr.f32.gmra.mxu0 %v934
      %v1012 = vpop.f32.mrf.mxu0
      %v1013 = vadd.f32 0.0, %v1012
      %v1014 = vpop.f32.mrf.mxu0
      %1015 = vmatprep.mubr.f32.mxu0 0.0
      %1016 = vmatmul.mubr.f32.gmra.mxu0 %v936
      %v1017 = vpop.f32.mrf.mxu0
      %v1018 = vadd.f32 0.0, %v1017
      %v1019 = vpop.f32.mrf.mxu0
      %1020 = vmatprep.mubr.f32.mxu0 0.0
      %1021 = vmatmul.mubr.f32.gmra.mxu0 %v938
      %v1022 = vpop.f32.mrf.mxu0
      %v1023 = vadd.f32 0.0, %v1022
      %v1024 = vpop.f32.mrf.mxu0
      %1025 = vdwg.mxu0
      %v1026 = vmul.f32 %v1013, 0.35355338
      %v1027 = vmul.f32 %v1018, 0.35355338
      %v1028 = vmul.f32 %v1023, 0.35355338
      %v1029 = vadd.f32 %v1026, %v919
      %v1030 = vadd.f32 %v1027, %v919
      %v1031 = vadd.f32 %v1028, %v919
      %vm1032 = vcmask 195584
      %v1033 = vsel %vm1032, %v1029, -inf
      %1034 = vmax.xlane.f32.xlu0 %v1033
      %v1035 = vpop.xlane.xlu0 %1034
      %v1036 = vsel %vm1032, %v1030, -inf
      %1037 = vmax.xlane.f32.xlu0 %v1036
      %v1038 = vpop.xlane.xlu0 %1037
      %v1039 = vsel %vm1032, %v1031, -inf
      %1040 = vmax.xlane.f32.xlu0 %v1039
      %v1041 = vpop.xlane.xlu0 %1040
      %v1042 = vsub.f32 %v1029, %v1035
      %v1043 = vsub.f32 %v1030, %v1038
      %v1044 = vsub.f32 %v1031, %v1041
      %v1045 = vmul.f32 %v1042, 1.442695
      %v1046 = vpow.pop %v1045
      %v1047 = vmul.f32 %v1043, 1.442695
      %v1048 = vpow.pop %v1047
      %v1049 = vmul.f32 %v1044, 1.442695
      %v1050 = vpow.pop %v1049
      %v1051 = vsel %vm1032, %v1046, 0.0
      %1052 = vadd.xlane.f32.xlu0 %v1051
      %v1053 = vpop.xlane.xlu0 %1052
      %v1054 = vsel %vm1032, %v1048, 0.0
      %1055 = vadd.xlane.f32.xlu0 %v1054
      %v1056 = vpop.xlane.xlu0 %1055
      %v1057 = vsel %vm1032, %v1050, 0.0
      %1058 = vadd.xlane.f32.xlu0 %v1057
      %v1059 = vpop.xlane.xlu0 %1058
      %v1060 = vrcp.pop %v1053
      %v1061 = vmul.f32 %v1046, %v1060
      %v1062 = vrcp.pop %v1056
      %v1063 = vmul.f32 %v1048, %v1062
      %v1064 = vrcp.pop %v1059
      %v1065 = vmul.f32 %v1050, %v1064
      %1066 = vrot.lane.b32.xlu0 %v903, 64
      %v1067 = vpop.permute.xlu0 %1066
      %1068 = vrot.lane.b32.xlu0 %v908, 64
      %v1069 = vpop.permute.xlu0 %1068
      %1070 = vrot.lane.b32.xlu0 %v913, 64
      %v1071 = vpop.permute.xlu0 %1070
      %v1076 = vsel %vm1032, %v1061, 0
      %v1079 = vsel %vm1032, %v1063, 0
      %v1082 = vsel %vm1032, %v1065, 0
      %1084 = vmatprep.subr.mxu0 0.0
      %1085 = vmatpush1.msra.mxu0 0.0
      %1086 = vmatprep.subr.mxu0 0.0
      %1087 = vmatpush1.msra.mxu0 0.0
      %1088 = vmatprep.subr.mxu0 0.0
      %1089 = vmatpush1.msra.mxu0 0.0
      %1090 = vmatprep.subr.mxu0 0.0
      %1091 = vmatpush1.msra.mxu0 0.0
      %1092 = vmatprep.subr.mxu0 0.0
      %1093 = vmatpush1.msra.mxu0 0.0
      %1094 = vmatprep.subr.mxu0 0.0
      %1095 = vmatpush1.msra.mxu0 0.0
      %1096 = vmatprep.subr.mxu0 0.0
      %1097 = vmatpush1.msra.mxu0 0.0
      %1098 = vmatprep.subr.mxu0 0.0
      %1099 = vmatpush1.msra.mxu0 0.0
      %1100 = vmatprep.subr.mxu0 0.0
      %1101 = vmatpush1.msra.mxu0 0.0
      %1102 = vmatprep.subr.mxu0 0.0
      %1103 = vmatpush1.msra.mxu0 0.0
      %1104 = vmatprep.subr.mxu0 0.0
      %1105 = vmatpush1.msra.mxu0 0.0
      %1106 = vmatprep.subr.mxu0 0.0
      %1107 = vmatpush1.msra.mxu0 0.0
      %1108 = vmatprep.subr.mxu0 0.0
      %1109 = vmatpush1.msra.mxu0 0.0
      %1110 = vmatprep.subr.mxu0 0.0
      %1111 = vmatpush1.msra.mxu0 %v1071
      %1112 = vmatprep.subr.mxu0 0.0
      %1113 = vmatpush1.msra.mxu0 %v1069
      %1114 = vmatprep.subr.mxu0 0.0
      %1115 = vmatpush1.msra.mxu0 %v1067
      %1116 = vmatprep.subr.mxu0 0.0
      %1117 = vmatpush2.msra.mxu0 0.0
      %1118 = vmatprep.subr.mxu0 0.0
      %1119 = vmatpush2.msra.mxu0 0.0
      %1120 = vmatprep.subr.mxu0 0.0
      %1121 = vmatpush2.msra.mxu0 0.0
      %1122 = vmatprep.subr.mxu0 0.0
      %1123 = vmatpush2.msra.mxu0 0.0
      %1124 = vmatprep.subr.mxu0 0.0
      %1125 = vmatpush2.msra.mxu0 0.0
      %1126 = vmatprep.subr.mxu0 0.0
      %1127 = vmatpush2.msra.mxu0 0.0
      %1128 = vmatprep.subr.mxu0 0.0
      %1129 = vmatpush2.msra.mxu0 0.0
      %1130 = vmatprep.subr.mxu0 0.0
      %1131 = vmatpush2.msra.mxu0 0.0
      %1132 = vmatprep.subr.mxu0 0.0
      %1133 = vmatpush2.msra.mxu0 0.0
      %1134 = vmatprep.subr.mxu0 0.0
      %1135 = vmatpush2.msra.mxu0 0.0
      %1136 = vmatprep.subr.mxu0 0.0
      %1137 = vmatpush2.msra.mxu0 0.0
      %1138 = vmatprep.subr.mxu0 0.0
      %1139 = vmatpush2.msra.mxu0 0.0
      %1140 = vmatprep.subr.mxu0 0.0
      %1141 = vmatpush2.msra.mxu0 0.0
      %1142 = vmatprep.subr.mxu0 0.0
      %1143 = vmatpush2.msra.mxu0 0.0
      %1144 = vmatprep.subr.mxu0 0.0
      %1145 = vmatpush2.msra.mxu0 0.0
      %1146 = vmatprep.subr.mxu0 0.0
      %1147 = vmatpush2.msra.mxu0 0.0
      %1148 = vmatprep.mubr.f32.mxu0 0.0
      %1149 = vmatmul.mubr.f32.gmra.mxu0 %v1076
      %v1150 = vpop.f32.mrf.mxu0
      %v1151 = vadd.f32 0.0, %v1150
      %v1152 = vpop.f32.mrf.mxu0
      %1153 = vmatprep.mubr.f32.mxu0 0.0
      %1154 = vmatmul.mubr.f32.gmra.mxu0 %v1079
      %v1155 = vpop.f32.mrf.mxu0
      %v1156 = vadd.f32 0.0, %v1155
      %v1157 = vpop.f32.mrf.mxu0
      %1158 = vmatprep.mubr.f32.mxu0 0.0
      %1159 = vmatmul.mubr.f32.gmra.mxu0 %v1082
      %v1160 = vpop.f32.mrf.mxu0
      %v1161 = vadd.f32 0.0, %v1160
      %v1162 = vpop.f32.mrf.mxu0
      %1163 = vdwg.mxu0
      %1164 = vrot.lane.b32.xlu0 %v903, 120
      %v1165 = vpop.permute.xlu0 %1164
      %1166 = vrot.lane.b32.xlu0 %v908, 120
      %v1167 = vpop.permute.xlu0 %1166
      %1168 = vrot.lane.b32.xlu0 %v913, 120
      %v1169 = vpop.permute.xlu0 %1168
      %1170 = vrot.lane.b32.xlu0 %v903, 88
      %v1171 = vpop.permute.xlu0 %1170
      %1172 = vrot.lane.b32.xlu0 %v908, 88
      %v1173 = vpop.permute.xlu0 %1172
      %1174 = vrot.lane.b32.xlu0 %v913, 88
      %v1175 = vpop.permute.xlu0 %1174
      %v1176 = vsel %vm933, %v1165, 0
      %v1178 = vsel %vm933, %v1167, 0
      %v1180 = vsel %vm933, %v1169, 0
      %v1182 = vsel %vm933, %v1171, 0
      %v1184 = vsel %vm933, %v1173, 0
      %v1186 = vsel %vm933, %v1175, 0
      %1188 = vmatprep.subr.mxu0 0.0
      %1189 = vmatpush1.xpose.msra.mxu0 0.0
      %1190 = vmatprep.subr.mxu0 0.0
      %1191 = vmatpush1.xpose.msra.mxu0 0.0
      %1192 = vmatprep.subr.mxu0 0.0
      %1193 = vmatpush1.xpose.msra.mxu0 0.0
      %1194 = vmatprep.subr.mxu0 0.0
      %1195 = vmatpush1.xpose.msra.mxu0 0.0
      %1196 = vmatprep.subr.mxu0 0.0
      %1197 = vmatpush1.xpose.msra.mxu0 0.0
      %1198 = vmatprep.subr.mxu0 0.0
      %1199 = vmatpush1.xpose.msra.mxu0 0.0
      %1200 = vmatprep.subr.mxu0 0.0
      %1201 = vmatpush1.xpose.msra.mxu0 0.0
      %1202 = vmatprep.subr.mxu0 0.0
      %1203 = vmatpush1.xpose.msra.mxu0 0.0
      %1204 = vmatprep.subr.mxu0 0.0
      %1205 = vmatpush1.xpose.msra.mxu0 0.0
      %1206 = vmatprep.subr.mxu0 0.0
      %1207 = vmatpush1.xpose.msra.mxu0 0.0
      %1208 = vmatprep.subr.mxu0 0.0
      %1209 = vmatpush1.xpose.msra.mxu0 0.0
      %1210 = vmatprep.subr.mxu0 0.0
      %1211 = vmatpush1.xpose.msra.mxu0 0.0
      %1212 = vmatprep.subr.mxu0 0.0
      %1213 = vmatpush1.xpose.msra.mxu0 0.0
      %1214 = vmatprep.subr.mxu0 0.0
      %1215 = vmatpush1.xpose.msra.mxu0 %v1186
      %1216 = vmatprep.subr.mxu0 0.0
      %1217 = vmatpush1.xpose.msra.mxu0 %v1184
      %1218 = vmatprep.subr.mxu0 0.0
      %1219 = vmatpush1.xpose.msra.mxu0 %v1182
      %1220 = vmatprep.subr.mxu0 0.0
      %1221 = vmatpush2.xpose.msra.mxu0 0.0
      %1222 = vmatprep.subr.mxu0 0.0
      %1223 = vmatpush2.xpose.msra.mxu0 0.0
      %1224 = vmatprep.subr.mxu0 0.0
      %1225 = vmatpush2.xpose.msra.mxu0 0.0
      %1226 = vmatprep.subr.mxu0 0.0
      %1227 = vmatpush2.xpose.msra.mxu0 0.0
      %1228 = vmatprep.subr.mxu0 0.0
      %1229 = vmatpush2.xpose.msra.mxu0 0.0
      %1230 = vmatprep.subr.mxu0 0.0
      %1231 = vmatpush2.xpose.msra.mxu0 0.0
      %1232 = vmatprep.subr.mxu0 0.0
      %1233 = vmatpush2.xpose.msra.mxu0 0.0
      %1234 = vmatprep.subr.mxu0 0.0
      %1235 = vmatpush2.xpose.msra.mxu0 0.0
      %1236 = vmatprep.subr.mxu0 0.0
      %1237 = vmatpush2.xpose.msra.mxu0 0.0
      %1238 = vmatprep.subr.mxu0 0.0
      %1239 = vmatpush2.xpose.msra.mxu0 0.0
      %1240 = vmatprep.subr.mxu0 0.0
      %1241 = vmatpush2.xpose.msra.mxu0 0.0
      %1242 = vmatprep.subr.mxu0 0.0
      %1243 = vmatpush2.xpose.msra.mxu0 0.0
      %1244 = vmatprep.subr.mxu0 0.0
      %1245 = vmatpush2.xpose.msra.mxu0 0.0
      %1246 = vmatprep.subr.mxu0 0.0
      %1247 = vmatpush2.xpose.msra.mxu0 0.0
      %1248 = vmatprep.subr.mxu0 0.0
      %1249 = vmatpush2.xpose.msra.mxu0 0.0
      %1250 = vmatprep.subr.mxu0 0.0
      %1251 = vmatpush2.xpose.msra.mxu0 0.0
      %1252 = vmatprep.mubr.f32.mxu0 0.0
      %1253 = vmatmul.mubr.f32.gmra.mxu0 %v1176
      %v1254 = vpop.f32.mrf.mxu0
      %v1255 = vadd.f32 0.0, %v1254
      %v1256 = vpop.f32.mrf.mxu0
      %1257 = vmatprep.mubr.f32.mxu0 0.0
      %1258 = vmatmul.mubr.f32.gmra.mxu0 %v1178
      %v1259 = vpop.f32.mrf.mxu0
      %v1260 = vadd.f32 0.0, %v1259
      %v1261 = vpop.f32.mrf.mxu0
      %1262 = vmatprep.mubr.f32.mxu0 0.0
      %1263 = vmatmul.mubr.f32.gmra.mxu0 %v1180
      %v1264 = vpop.f32.mrf.mxu0
      %v1265 = vadd.f32 0.0, %v1264
      %v1266 = vpop.f32.mrf.mxu0
      %1267 = vdwg.mxu0
      %v1268 = vmul.f32 %v1255, 0.35355338
      %v1269 = vmul.f32 %v1260, 0.35355338
      %v1270 = vmul.f32 %v1265, 0.35355338
      %v1271 = vadd.f32 %v1268, %v919
      %v1272 = vadd.f32 %v1269, %v919
      %v1273 = vadd.f32 %v1270, %v919
      %v1274 = vsel %vm1032, %v1271, -inf
      %1275 = vmax.xlane.f32.xlu0 %v1274
      %v1276 = vpop.xlane.xlu0 %1275
      %v1277 = vsel %vm1032, %v1272, -inf
      %1278 = vmax.xlane.f32.xlu0 %v1277
      %v1279 = vpop.xlane.xlu0 %1278
      %v1280 = vsel %vm1032, %v1273, -inf
      %1281 = vmax.xlane.f32.xlu0 %v1280
      %v1282 = vpop.xlane.xlu0 %1281
      %v1283 = vsub.f32 %v1271, %v1276
      %v1284 = vsub.f32 %v1272, %v1279
      %v1285 = vsub.f32 %v1273, %v1282
      %v1286 = vmul.f32 %v1283, 1.442695
      %v1287 = vpow.pop %v1286
      %v1288 = vmul.f32 %v1284, 1.442695
      %v1289 = vpow.pop %v1288
      %v1290 = vmul.f32 %v1285, 1.442695
      %v1291 = vpow.pop %v1290
      %v1292 = vsel %vm1032, %v1287, 0.0
      %1293 = vadd.xlane.f32.xlu0 %v1292
      %v1294 = vpop.xlane.xlu0 %1293
      %v1295 = vsel %vm1032, %v1289, 0.0
      %1296 = vadd.xlane.f32.xlu0 %v1295
      %v1297 = vpop.xlane.xlu0 %1296
      %v1298 = vsel %vm1032, %v1291, 0.0
      %1299 = vadd.xlane.f32.xlu0 %v1298
      %v1300 = vpop.xlane.xlu0 %1299
      %v1301 = vrcp.pop %v1294
      %v1302 = vmul.f32 %v1287, %v1301
      %v1303 = vrcp.pop %v1297
      %v1304 = vmul.f32 %v1289, %v1303
      %v1305 = vrcp.pop %v1300
      %v1306 = vmul.f32 %v1291, %v1305
      %1307 = vrot.lane.b32.xlu0 %v903, 56
      %v1308 = vpop.permute.xlu0 %1307
      %1309 = vrot.lane.b32.xlu0 %v908, 56
      %v1310 = vpop.permute.xlu0 %1309
      %1311 = vrot.lane.b32.xlu0 %v913, 56
      %v1312 = vpop.permute.xlu0 %1311
      %v1317 = vsel %vm1032, %v1302, 0
      %v1320 = vsel %vm1032, %v1304, 0
      %v1323 = vsel %vm1032, %v1306, 0
      %1325 = vmatprep.subr.mxu0 0.0
      %1326 = vmatpush1.msra.mxu0 0.0
      %1327 = vmatprep.subr.mxu0 0.0
      %1328 = vmatpush1.msra.mxu0 0.0
      %1329 = vmatprep.subr.mxu0 0.0
      %1330 = vmatpush1.msra.mxu0 0.0
      %1331 = vmatprep.subr.mxu0 0.0
      %1332 = vmatpush1.msra.mxu0 0.0
      %1333 = vmatprep.subr.mxu0 0.0
      %1334 = vmatpush1.msra.mxu0 0.0
      %1335 = vmatprep.subr.mxu0 0.0
      %1336 = vmatpush1.msra.mxu0 0.0
      %1337 = vmatprep.subr.mxu0 0.0
      %1338 = vmatpush1.msra.mxu0 0.0
      %1339 = vmatprep.subr.mxu0 0.0
      %1340 = vmatpush1.msra.mxu0 0.0
      %1341 = vmatprep.subr.mxu0 0.0
      %1342 = vmatpush1.msra.mxu0 0.0
      %1343 = vmatprep.subr.mxu0 0.0
      %1344 = vmatpush1.msra.mxu0 0.0
      %1345 = vmatprep.subr.mxu0 0.0
      %1346 = vmatpush1.msra.mxu0 0.0
      %1347 = vmatprep.subr.mxu0 0.0
      %1348 = vmatpush1.msra.mxu0 0.0
      %1349 = vmatprep.subr.mxu0 0.0
      %1350 = vmatpush1.msra.mxu0 0.0
      %1351 = vmatprep.subr.mxu0 0.0
      %1352 = vmatpush1.msra.mxu0 %v1312
      %1353 = vmatprep.subr.mxu0 0.0
      %1354 = vmatpush1.msra.mxu0 %v1310
      %1355 = vmatprep.subr.mxu0 0.0
      %1356 = vmatpush1.msra.mxu0 %v1308
      %1357 = vmatprep.subr.mxu0 0.0
      %1358 = vmatpush2.msra.mxu0 0.0
      %1359 = vmatprep.subr.mxu0 0.0
      %1360 = vmatpush2.msra.mxu0 0.0
      %1361 = vmatprep.subr.mxu0 0.0
      %1362 = vmatpush2.msra.mxu0 0.0
      %1363 = vmatprep.subr.mxu0 0.0
      %1364 = vmatpush2.msra.mxu0 0.0
      %1365 = vmatprep.subr.mxu0 0.0
      %1366 = vmatpush2.msra.mxu0 0.0
      %1367 = vmatprep.subr.mxu0 0.0
      %1368 = vmatpush2.msra.mxu0 0.0
      %1369 = vmatprep.subr.mxu0 0.0
      %1370 = vmatpush2.msra.mxu0 0.0
      %1371 = vmatprep.subr.mxu0 0.0
      %1372 = vmatpush2.msra.mxu0 0.0
      %1373 = vmatprep.subr.mxu0 0.0
      %1374 = vmatpush2.msra.mxu0 0.0
      %1375 = vmatprep.subr.mxu0 0.0
      %1376 = vmatpush2.msra.mxu0 0.0
      %1377 = vmatprep.subr.mxu0 0.0
      %1378 = vmatpush2.msra.mxu0 0.0
      %1379 = vmatprep.subr.mxu0 0.0
      %1380 = vmatpush2.msra.mxu0 0.0
      %1381 = vmatprep.subr.mxu0 0.0
      %1382 = vmatpush2.msra.mxu0 0.0
      %1383 = vmatprep.subr.mxu0 0.0
      %1384 = vmatpush2.msra.mxu0 0.0
      %1385 = vmatprep.subr.mxu0 0.0
      %1386 = vmatpush2.msra.mxu0 0.0
      %1387 = vmatprep.subr.mxu0 0.0
      %1388 = vmatpush2.msra.mxu0 0.0
      %1389 = vmatprep.mubr.f32.mxu0 0.0
      %1390 = vmatmul.mubr.f32.gmra.mxu0 %v1317
      %v1391 = vpop.f32.mrf.mxu0
      %v1392 = vadd.f32 0.0, %v1391
      %v1393 = vpop.f32.mrf.mxu0
      %1394 = vmatprep.mubr.f32.mxu0 0.0
      %1395 = vmatmul.mubr.f32.gmra.mxu0 %v1320
      %v1396 = vpop.f32.mrf.mxu0
      %v1397 = vadd.f32 0.0, %v1396
      %v1398 = vpop.f32.mrf.mxu0
      %1399 = vmatprep.mubr.f32.mxu0 0.0
      %1400 = vmatmul.mubr.f32.gmra.mxu0 %v1323
      %v1401 = vpop.f32.mrf.mxu0
      %v1402 = vadd.f32 0.0, %v1401
      %v1403 = vpop.f32.mrf.mxu0
      %1404 = vdwg.mxu0
      %v1406 = vsel %vm933, %v1392, 0
      %v1409 = vsel %vm933, %v1397, 0
      %v1412 = vsel %vm933, %v1402, 0
      %1414 = vmatprep.subr.mxu0 0.0
      %1415 = vmatpush1.msra.mxu0 0.0
      %1416 = vmatprep.subr.mxu0 0.0
      %1417 = vmatpush1.msra.mxu0 0.0
      %1418 = vmatprep.subr.mxu0 0.0
      %1419 = vmatpush1.msra.mxu0 0.0
      %1420 = vmatprep.subr.mxu0 0.0
      %1421 = vmatpush1.msra.mxu0 0.0
      %1422 = vmatprep.subr.mxu0 0.0
      %1423 = vmatpush1.msra.mxu0 0.0
      %1424 = vmatprep.subr.mxu0 0.0
      %1425 = vmatpush1.msra.mxu0 0.0
      %1426 = vmatprep.subr.mxu0 0.0
      %1427 = vmatpush1.msra.mxu0 0.0
      %1428 = vmatprep.subr.mxu0 0.0
      %1429 = vmatpush1.msra.mxu0 0.0
      %1430 = vmatprep.subr.mxu0 0.0
      %1431 = vmatpush1.msra.mxu0 0.0
      %1432 = vmatprep.subr.mxu0 0.0
      %1433 = vmatpush1.msra.mxu0 0.0
      %1434 = vmatprep.subr.mxu0 0.0
      %1435 = vmatpush1.msra.mxu0 0.0
      %1436 = vmatprep.subr.mxu0 0.0
      %1437 = vmatpush1.msra.mxu0 0.0
      %1438 = vmatprep.subr.mxu0 0.0
      %1439 = vmatpush1.msra.mxu0 0.0
      %1440 = vmatprep.subr.mxu0 0.0
      %1441 = vmatpush1.msra.mxu0 0.0
      %1442 = vmatprep.subr.mxu0 0.0
      %1443 = vmatpush1.msra.mxu0 0.0
      %1444 = vmatprep.subr.mxu0 0.0
      %1445 = vmatpush1.msra.mxu0 %v921
      %1446 = vmatprep.subr.mxu0 0.0
      %1447 = vmatpush2.msra.mxu0 0.0
      %1448 = vmatprep.subr.mxu0 0.0
      %1449 = vmatpush2.msra.mxu0 0.0
      %1450 = vmatprep.subr.mxu0 0.0
      %1451 = vmatpush2.msra.mxu0 0.0
      %1452 = vmatprep.subr.mxu0 0.0
      %1453 = vmatpush2.msra.mxu0 0.0
      %1454 = vmatprep.subr.mxu0 0.0
      %1455 = vmatpush2.msra.mxu0 0.0
      %1456 = vmatprep.subr.mxu0 0.0
      %1457 = vmatpush2.msra.mxu0 0.0
      %1458 = vmatprep.subr.mxu0 0.0
      %1459 = vmatpush2.msra.mxu0 0.0
      %1460 = vmatprep.subr.mxu0 0.0
      %1461 = vmatpush2.msra.mxu0 0.0
      %1462 = vmatprep.subr.mxu0 0.0
      %1463 = vmatpush2.msra.mxu0 0.0
      %1464 = vmatprep.subr.mxu0 0.0
      %1465 = vmatpush2.msra.mxu0 0.0
      %1466 = vmatprep.subr.mxu0 0.0
      %1467 = vmatpush2.msra.mxu0 0.0
      %1468 = vmatprep.subr.mxu0 0.0
      %1469 = vmatpush2.msra.mxu0 0.0
      %1470 = vmatprep.subr.mxu0 0.0
      %1471 = vmatpush2.msra.mxu0 0.0
      %1472 = vmatprep.subr.mxu0 0.0
      %1473 = vmatpush2.msra.mxu0 0.0
      %1474 = vmatprep.subr.mxu0 0.0
      %1475 = vmatpush2.msra.mxu0 0.0
      %1476 = vmatprep.subr.mxu0 0.0
      %1477 = vmatpush2.msra.mxu0 0.0
      %1478 = vmatprep.mubr.f32.mxu0 0.0
      %1479 = vmatmul.mubr.f32.gmra.mxu0 %v1406
      %v1480 = vpop.f32.mrf.mxu0
      %v1481 = vadd.f32 0.0, %v1480
      %v1482 = vpop.f32.mrf.mxu0
      %1483 = vmatprep.mubr.f32.mxu0 0.0
      %1484 = vmatmul.mubr.f32.gmra.mxu0 %v1409
      %v1485 = vpop.f32.mrf.mxu0
      %v1486 = vadd.f32 0.0, %v1485
      %v1487 = vpop.f32.mrf.mxu0
      %1488 = vmatprep.mubr.f32.mxu0 0.0
      %1489 = vmatmul.mubr.f32.gmra.mxu0 %v1412
      %v1490 = vpop.f32.mrf.mxu0
      %v1491 = vadd.f32 0.0, %v1490
      %v1492 = vpop.f32.mrf.mxu0
      %1493 = vdwg.mxu0
      %v1495 = vsel %vm933, %v1151, 0
      %v1498 = vsel %vm933, %v1156, 0
      %v1501 = vsel %vm933, %v1161, 0
      %1503 = vmatprep.subr.mxu0 0.0
      %1504 = vmatpush1.msra.mxu0 0.0
      %1505 = vmatprep.subr.mxu0 0.0
      %1506 = vmatpush1.msra.mxu0 0.0
      %1507 = vmatprep.subr.mxu0 0.0
      %1508 = vmatpush1.msra.mxu0 0.0
      %1509 = vmatprep.subr.mxu0 0.0
      %1510 = vmatpush1.msra.mxu0 0.0
      %1511 = vmatprep.subr.mxu0 0.0
      %1512 = vmatpush1.msra.mxu0 0.0
      %1513 = vmatprep.subr.mxu0 0.0
      %1514 = vmatpush1.msra.mxu0 0.0
      %1515 = vmatprep.subr.mxu0 0.0
      %1516 = vmatpush1.msra.mxu0 0.0
      %1517 = vmatprep.subr.mxu0 0.0
      %1518 = vmatpush1.msra.mxu0 0.0
      %1519 = vmatprep.subr.mxu0 0.0
      %1520 = vmatpush1.msra.mxu0 0.0
      %1521 = vmatprep.subr.mxu0 0.0
      %1522 = vmatpush1.msra.mxu0 0.0
      %1523 = vmatprep.subr.mxu0 0.0
      %1524 = vmatpush1.msra.mxu0 0.0
      %1525 = vmatprep.subr.mxu0 0.0
      %1526 = vmatpush1.msra.mxu0 0.0
      %1527 = vmatprep.subr.mxu0 0.0
      %1528 = vmatpush1.msra.mxu0 0.0
      %1529 = vmatprep.subr.mxu0 0.0
      %1530 = vmatpush1.msra.mxu0 0.0
      %1531 = vmatprep.subr.mxu0 0.0
      %1532 = vmatpush1.msra.mxu0 0.0
      %1533 = vmatprep.subr.mxu0 0.0
      %1534 = vmatpush1.msra.mxu0 %v920
      %1535 = vmatprep.subr.mxu0 0.0
      %1536 = vmatpush2.msra.mxu0 0.0
      %1537 = vmatprep.subr.mxu0 0.0
      %1538 = vmatpush2.msra.mxu0 0.0
      %1539 = vmatprep.subr.mxu0 0.0
      %1540 = vmatpush2.msra.mxu0 0.0
      %1541 = vmatprep.subr.mxu0 0.0
      %1542 = vmatpush2.msra.mxu0 0.0
      %1543 = vmatprep.subr.mxu0 0.0
      %1544 = vmatpush2.msra.mxu0 0.0
      %1545 = vmatprep.subr.mxu0 0.0
      %1546 = vmatpush2.msra.mxu0 0.0
      %1547 = vmatprep.subr.mxu0 0.0
      %1548 = vmatpush2.msra.mxu0 0.0
      %1549 = vmatprep.subr.mxu0 0.0
      %1550 = vmatpush2.msra.mxu0 0.0
      %1551 = vmatprep.subr.mxu0 0.0
      %1552 = vmatpush2.msra.mxu0 0.0
      %1553 = vmatprep.subr.mxu0 0.0
      %1554 = vmatpush2.msra.mxu0 0.0
      %1555 = vmatprep.subr.mxu0 0.0
      %1556 = vmatpush2.msra.mxu0 0.0
      %1557 = vmatprep.subr.mxu0 0.0
      %1558 = vmatpush2.msra.mxu0 0.0
      %1559 = vmatprep.subr.mxu0 0.0
      %1560 = vmatpush2.msra.mxu0 0.0
      %1561 = vmatprep.subr.mxu0 0.0
      %1562 = vmatpush2.msra.mxu0 0.0
      %1563 = vmatprep.subr.mxu0 0.0
      %1564 = vmatpush2.msra.mxu0 0.0
      %1565 = vmatprep.subr.mxu0 0.0
      %1566 = vmatpush2.msra.mxu0 0.0
      %1567 = vmatprep.mubr.f32.mxu0 0.0
      %1568 = vmatmul.mubr.f32.gmra.mxu0 %v1495
      %v1569 = vpop.f32.mrf.mxu0
      %v1570 = vadd.f32 %v1481, %v1569
      %v1571 = vpop.f32.mrf.mxu0
      %1572 = vmatprep.mubr.f32.mxu0 0.0
      %1573 = vmatmul.mubr.f32.gmra.mxu0 %v1498
      %v1574 = vpop.f32.mrf.mxu0
      %v1575 = vadd.f32 %v1486, %v1574
      %v1576 = vpop.f32.mrf.mxu0
      %1577 = vmatprep.mubr.f32.mxu0 0.0
      %1578 = vmatmul.mubr.f32.gmra.mxu0 %v1501
      %v1579 = vpop.f32.mrf.mxu0
      %v1580 = vadd.f32 %v1491, %v1579
      %v1581 = vpop.f32.mrf.mxu0
      %1582 = vdwg.mxu0
      %1583 = vrot.lane.b32.xlu0 %v903, 112
      %v1584 = vpop.permute.xlu0 %1583
      %1585 = vrot.lane.b32.xlu0 %v908, 112
      %v1586 = vpop.permute.xlu0 %1585
      %1587 = vrot.lane.b32.xlu0 %v913, 112
      %v1588 = vpop.permute.xlu0 %1587
      %1589 = vrot.lane.b32.xlu0 %v903, 80
      %v1590 = vpop.permute.xlu0 %1589
      %1591 = vrot.lane.b32.xlu0 %v908, 80
      %v1592 = vpop.permute.xlu0 %1591
      %1593 = vrot.lane.b32.xlu0 %v913, 80
      %v1594 = vpop.permute.xlu0 %1593
      %v1595 = vsel %vm933, %v1584, 0
      %v1597 = vsel %vm933, %v1586, 0
      %v1599 = vsel %vm933, %v1588, 0
      %v1601 = vsel %vm933, %v1590, 0
      %v1603 = vsel %vm933, %v1592, 0
      %v1605 = vsel %vm933, %v1594, 0
      %1607 = vmatprep.subr.mxu0 0.0
      %1608 = vmatpush1.xpose.msra.mxu0 0.0
      %1609 = vmatprep.subr.mxu0 0.0
      %1610 = vmatpush1.xpose.msra.mxu0 0.0
      %1611 = vmatprep.subr.mxu0 0.0
      %1612 = vmatpush1.xpose.msra.mxu0 0.0
      %1613 = vmatprep.subr.mxu0 0.0
      %1614 = vmatpush1.xpose.msra.mxu0 0.0
      %1615 = vmatprep.subr.mxu0 0.0
      %1616 = vmatpush1.xpose.msra.mxu0 0.0
      %1617 = vmatprep.subr.mxu0 0.0
      %1618 = vmatpush1.xpose.msra.mxu0 0.0
      %1619 = vmatprep.subr.mxu0 0.0
      %1620 = vmatpush1.xpose.msra.mxu0 0.0
      %1621 = vmatprep.subr.mxu0 0.0
      %1622 = vmatpush1.xpose.msra.mxu0 0.0
      %1623 = vmatprep.subr.mxu0 0.0
      %1624 = vmatpush1.xpose.msra.mxu0 0.0
      %1625 = vmatprep.subr.mxu0 0.0
      %1626 = vmatpush1.xpose.msra.mxu0 0.0
      %1627 = vmatprep.subr.mxu0 0.0
      %1628 = vmatpush1.xpose.msra.mxu0 0.0
      %1629 = vmatprep.subr.mxu0 0.0
      %1630 = vmatpush1.xpose.msra.mxu0 0.0
      %1631 = vmatprep.subr.mxu0 0.0
      %1632 = vmatpush1.xpose.msra.mxu0 0.0
      %1633 = vmatprep.subr.mxu0 0.0
      %1634 = vmatpush1.xpose.msra.mxu0 %v1605
      %1635 = vmatprep.subr.mxu0 0.0
      %1636 = vmatpush1.xpose.msra.mxu0 %v1603
      %1637 = vmatprep.subr.mxu0 0.0
      %1638 = vmatpush1.xpose.msra.mxu0 %v1601
      %1639 = vmatprep.subr.mxu0 0.0
      %1640 = vmatpush2.xpose.msra.mxu0 0.0
      %1641 = vmatprep.subr.mxu0 0.0
      %1642 = vmatpush2.xpose.msra.mxu0 0.0
      %1643 = vmatprep.subr.mxu0 0.0
      %1644 = vmatpush2.xpose.msra.mxu0 0.0
      %1645 = vmatprep.subr.mxu0 0.0
      %1646 = vmatpush2.xpose.msra.mxu0 0.0
      %1647 = vmatprep.subr.mxu0 0.0
      %1648 = vmatpush2.xpose.msra.mxu0 0.0
      %1649 = vmatprep.subr.mxu0 0.0
      %1650 = vmatpush2.xpose.msra.mxu0 0.0
      %1651 = vmatprep.subr.mxu0 0.0
      %1652 = vmatpush2.xpose.msra.mxu0 0.0
      %1653 = vmatprep.subr.mxu0 0.0
      %1654 = vmatpush2.xpose.msra.mxu0 0.0
      %1655 = vmatprep.subr.mxu0 0.0
      %1656 = vmatpush2.xpose.msra.mxu0 0.0
      %1657 = vmatprep.subr.mxu0 0.0
      %1658 = vmatpush2.xpose.msra.mxu0 0.0
      %1659 = vmatprep.subr.mxu0 0.0
      %1660 = vmatpush2.xpose.msra.mxu0 0.0
      %1661 = vmatprep.subr.mxu0 0.0
      %1662 = vmatpush2.xpose.msra.mxu0 0.0
      %1663 = vmatprep.subr.mxu0 0.0
      %1664 = vmatpush2.xpose.msra.mxu0 0.0
      %1665 = vmatprep.subr.mxu0 0.0
      %1666 = vmatpush2.xpose.msra.mxu0 0.0
      %1667 = vmatprep.subr.mxu0 0.0
      %1668 = vmatpush2.xpose.msra.mxu0 0.0
      %1669 = vmatprep.subr.mxu0 0.0
      %1670 = vmatpush2.xpose.msra.mxu0 0.0
      %1671 = vmatprep.mubr.f32.mxu0 0.0
      %1672 = vmatmul.mubr.f32.gmra.mxu0 %v1595
      %v1673 = vpop.f32.mrf.mxu0
      %v1674 = vadd.f32 0.0, %v1673
      %v1675 = vpop.f32.mrf.mxu0
      %1676 = vmatprep.mubr.f32.mxu0 0.0
      %1677 = vmatmul.mubr.f32.gmra.mxu0 %v1597
      %v1678 = vpop.f32.mrf.mxu0
      %v1679 = vadd.f32 0.0, %v1678
      %v1680 = vpop.f32.mrf.mxu0
      %1681 = vmatprep.mubr.f32.mxu0 0.0
      %1682 = vmatmul.mubr.f32.gmra.mxu0 %v1599
      %v1683 = vpop.f32.mrf.mxu0
      %v1684 = vadd.f32 0.0, %v1683
      %v1685 = vpop.f32.mrf.mxu0
      %1686 = vdwg.mxu0
      %v1687 = vmul.f32 %v1674, 0.35355338
      %v1688 = vmul.f32 %v1679, 0.35355338
      %v1689 = vmul.f32 %v1684, 0.35355338
      %v1690 = vadd.f32 %v1687, %v919
      %v1691 = vadd.f32 %v1688, %v919
      %v1692 = vadd.f32 %v1689, %v919
      %v1693 = vsel %vm1032, %v1690, -inf
      %1694 = vmax.xlane.f32.xlu0 %v1693
      %v1695 = vpop.xlane.xlu0 %1694
      %v1696 = vsel %vm1032, %v1691, -inf
      %1697 = vmax.xlane.f32.xlu0 %v1696
      %v1698 = vpop.xlane.xlu0 %1697
      %v1699 = vsel %vm1032, %v1692, -inf
      %1700 = vmax.xlane.f32.xlu0 %v1699
      %v1701 = vpop.xlane.xlu0 %1700
      %v1702 = vsub.f32 %v1690, %v1695
      %v1703 = vsub.f32 %v1691, %v1698
      %v1704 = vsub.f32 %v1692, %v1701
      %v1705 = vmul.f32 %v1702, 1.442695
      %v1706 = vpow.pop %v1705
      %v1707 = vmul.f32 %v1703, 1.442695
      %v1708 = vpow.pop %v1707
      %v1709 = vmul.f32 %v1704, 1.442695
      %v1710 = vpow.pop %v1709
      %v1711 = vsel %vm1032, %v1706, 0.0
      %1712 = vadd.xlane.f32.xlu0 %v1711
      %v1713 = vpop.xlane.xlu0 %1712
      %v1714 = vsel %vm1032, %v1708, 0.0
      %1715 = vadd.xlane.f32.xlu0 %v1714
      %v1716 = vpop.xlane.xlu0 %1715
      %v1717 = vsel %vm1032, %v1710, 0.0
      %1718 = vadd.xlane.f32.xlu0 %v1717
      %v1719 = vpop.xlane.xlu0 %1718
      %v1720 = vrcp.pop %v1713
      %v1721 = vmul.f32 %v1706, %v1720
      %v1722 = vrcp.pop %v1716
      %v1723 = vmul.f32 %v1708, %v1722
      %v1724 = vrcp.pop %v1719
      %v1725 = vmul.f32 %v1710, %v1724
      %1726 = vrot.lane.b32.xlu0 %v903, 48
      %v1727 = vpop.permute.xlu0 %1726
      %1728 = vrot.lane.b32.xlu0 %v908, 48
      %v1729 = vpop.permute.xlu0 %1728
      %1730 = vrot.lane.b32.xlu0 %v913, 48
      %v1731 = vpop.permute.xlu0 %1730
      %v1736 = vsel %vm1032, %v1721, 0
      %v1739 = vsel %vm1032, %v1723, 0
      %v1742 = vsel %vm1032, %v1725, 0
      %1744 = vmatprep.subr.mxu0 0.0
      %1745 = vmatpush1.msra.mxu0 0.0
      %1746 = vmatprep.subr.mxu0 0.0
      %1747 = vmatpush1.msra.mxu0 0.0
      %1748 = vmatprep.subr.mxu0 0.0
      %1749 = vmatpush1.msra.mxu0 0.0
      %1750 = vmatprep.subr.mxu0 0.0
      %1751 = vmatpush1.msra.mxu0 0.0
      %1752 = vmatprep.subr.mxu0 0.0
      %1753 = vmatpush1.msra.mxu0 0.0
      %1754 = vmatprep.subr.mxu0 0.0
      %1755 = vmatpush1.msra.mxu0 0.0
      %1756 = vmatprep.subr.mxu0 0.0
      %1757 = vmatpush1.msra.mxu0 0.0
      %1758 = vmatprep.subr.mxu0 0.0
      %1759 = vmatpush1.msra.mxu0 0.0
      %1760 = vmatprep.subr.mxu0 0.0
      %1761 = vmatpush1.msra.mxu0 0.0
      %1762 = vmatprep.subr.mxu0 0.0
      %1763 = vmatpush1.msra.mxu0 0.0
      %1764 = vmatprep.subr.mxu0 0.0
      %1765 = vmatpush1.msra.mxu0 0.0
      %1766 = vmatprep.subr.mxu0 0.0
      %1767 = vmatpush1.msra.mxu0 0.0
      %1768 = vmatprep.subr.mxu0 0.0
      %1769 = vmatpush1.msra.mxu0 0.0
      %1770 = vmatprep.subr.mxu0 0.0
      %1771 = vmatpush1.msra.mxu0 %v1731
      %1772 = vmatprep.subr.mxu0 0.0
      %1773 = vmatpush1.msra.mxu0 %v1729
      %1774 = vmatprep.subr.mxu0 0.0
      %1775 = vmatpush1.msra.mxu0 %v1727
      %1776 = vmatprep.subr.mxu0 0.0
      %1777 = vmatpush2.msra.mxu0 0.0
      %1778 = vmatprep.subr.mxu0 0.0
      %1779 = vmatpush2.msra.mxu0 0.0
      %1780 = vmatprep.subr.mxu0 0.0
      %1781 = vmatpush2.msra.mxu0 0.0
      %1782 = vmatprep.subr.mxu0 0.0
      %1783 = vmatpush2.msra.mxu0 0.0
      %1784 = vmatprep.subr.mxu0 0.0
      %1785 = vmatpush2.msra.mxu0 0.0
      %1786 = vmatprep.subr.mxu0 0.0
      %1787 = vmatpush2.msra.mxu0 0.0
      %1788 = vmatprep.subr.mxu0 0.0
      %1789 = vmatpush2.msra.mxu0 0.0
      %1790 = vmatprep.subr.mxu0 0.0
      %1791 = vmatpush2.msra.mxu0 0.0
      %1792 = vmatprep.subr.mxu0 0.0
      %1793 = vmatpush2.msra.mxu0 0.0
      %1794 = vmatprep.subr.mxu0 0.0
      %1795 = vmatpush2.msra.mxu0 0.0
      %1796 = vmatprep.subr.mxu0 0.0
      %1797 = vmatpush2.msra.mxu0 0.0
      %1798 = vmatprep.subr.mxu0 0.0
      %1799 = vmatpush2.msra.mxu0 0.0
      %1800 = vmatprep.subr.mxu0 0.0
      %1801 = vmatpush2.msra.mxu0 0.0
      %1802 = vmatprep.subr.mxu0 0.0
      %1803 = vmatpush2.msra.mxu0 0.0
      %1804 = vmatprep.subr.mxu0 0.0
      %1805 = vmatpush2.msra.mxu0 0.0
      %1806 = vmatprep.subr.mxu0 0.0
      %1807 = vmatpush2.msra.mxu0 0.0
      %1808 = vmatprep.mubr.f32.mxu0 0.0
      %1809 = vmatmul.mubr.f32.gmra.mxu0 %v1736
      %v1810 = vpop.f32.mrf.mxu0
      %v1811 = vadd.f32 0.0, %v1810
      %v1812 = vpop.f32.mrf.mxu0
      %1813 = vmatprep.mubr.f32.mxu0 0.0
      %1814 = vmatmul.mubr.f32.gmra.mxu0 %v1739
      %v1815 = vpop.f32.mrf.mxu0
      %v1816 = vadd.f32 0.0, %v1815
      %v1817 = vpop.f32.mrf.mxu0
      %1818 = vmatprep.mubr.f32.mxu0 0.0
      %1819 = vmatmul.mubr.f32.gmra.mxu0 %v1742
      %v1820 = vpop.f32.mrf.mxu0
      %v1821 = vadd.f32 0.0, %v1820
      %v1822 = vpop.f32.mrf.mxu0
      %1823 = vdwg.mxu0
      %v1825 = vsel %vm933, %v1811, 0
      %v1828 = vsel %vm933, %v1816, 0
      %v1831 = vsel %vm933, %v1821, 0
      %1833 = vmatprep.subr.mxu0 0.0
      %1834 = vmatpush1.msra.mxu0 0.0
      %1835 = vmatprep.subr.mxu0 0.0
      %1836 = vmatpush1.msra.mxu0 0.0
      %1837 = vmatprep.subr.mxu0 0.0
      %1838 = vmatpush1.msra.mxu0 0.0
      %1839 = vmatprep.subr.mxu0 0.0
      %1840 = vmatpush1.msra.mxu0 0.0
      %1841 = vmatprep.subr.mxu0 0.0
      %1842 = vmatpush1.msra.mxu0 0.0
      %1843 = vmatprep.subr.mxu0 0.0
      %1844 = vmatpush1.msra.mxu0 0.0
      %1845 = vmatprep.subr.mxu0 0.0
      %1846 = vmatpush1.msra.mxu0 0.0
      %1847 = vmatprep.subr.mxu0 0.0
      %1848 = vmatpush1.msra.mxu0 0.0
      %1849 = vmatprep.subr.mxu0 0.0
      %1850 = vmatpush1.msra.mxu0 0.0
      %1851 = vmatprep.subr.mxu0 0.0
      %1852 = vmatpush1.msra.mxu0 0.0
      %1853 = vmatprep.subr.mxu0 0.0
      %1854 = vmatpush1.msra.mxu0 0.0
      %1855 = vmatprep.subr.mxu0 0.0
      %1856 = vmatpush1.msra.mxu0 0.0
      %1857 = vmatprep.subr.mxu0 0.0
      %1858 = vmatpush1.msra.mxu0 0.0
      %1859 = vmatprep.subr.mxu0 0.0
      %1860 = vmatpush1.msra.mxu0 0.0
      %1861 = vmatprep.subr.mxu0 0.0
      %1862 = vmatpush1.msra.mxu0 0.0
      %1863 = vmatprep.subr.mxu0 0.0
      %1864 = vmatpush1.msra.mxu0 %v922
      %1865 = vmatprep.subr.mxu0 0.0
      %1866 = vmatpush2.msra.mxu0 0.0
      %1867 = vmatprep.subr.mxu0 0.0
      %1868 = vmatpush2.msra.mxu0 0.0
      %1869 = vmatprep.subr.mxu0 0.0
      %1870 = vmatpush2.msra.mxu0 0.0
      %1871 = vmatprep.subr.mxu0 0.0
      %1872 = vmatpush2.msra.mxu0 0.0
      %1873 = vmatprep.subr.mxu0 0.0
      %1874 = vmatpush2.msra.mxu0 0.0
      %1875 = vmatprep.subr.mxu0 0.0
      %1876 = vmatpush2.msra.mxu0 0.0
      %1877 = vmatprep.subr.mxu0 0.0
      %1878 = vmatpush2.msra.mxu0 0.0
      %1879 = vmatprep.subr.mxu0 0.0
      %1880 = vmatpush2.msra.mxu0 0.0
      %1881 = vmatprep.subr.mxu0 0.0
      %1882 = vmatpush2.msra.mxu0 0.0
      %1883 = vmatprep.subr.mxu0 0.0
      %1884 = vmatpush2.msra.mxu0 0.0
      %1885 = vmatprep.subr.mxu0 0.0
      %1886 = vmatpush2.msra.mxu0 0.0
      %1887 = vmatprep.subr.mxu0 0.0
      %1888 = vmatpush2.msra.mxu0 0.0
      %1889 = vmatprep.subr.mxu0 0.0
      %1890 = vmatpush2.msra.mxu0 0.0
      %1891 = vmatprep.subr.mxu0 0.0
      %1892 = vmatpush2.msra.mxu0 0.0
      %1893 = vmatprep.subr.mxu0 0.0
      %1894 = vmatpush2.msra.mxu0 0.0
      %1895 = vmatprep.subr.mxu0 0.0
      %1896 = vmatpush2.msra.mxu0 0.0
      %1897 = vmatprep.mubr.f32.mxu0 0.0
      %1898 = vmatmul.mubr.f32.gmra.mxu0 %v1825
      %v1899 = vpop.f32.mrf.mxu0
      %v1900 = vadd.f32 0.0, %v1899
      %v1901 = vpop.f32.mrf.mxu0
      %1902 = vmatprep.mubr.f32.mxu0 0.0
      %1903 = vmatmul.mubr.f32.gmra.mxu0 %v1828
      %v1904 = vpop.f32.mrf.mxu0
      %v1905 = vadd.f32 0.0, %v1904
      %v1906 = vpop.f32.mrf.mxu0
      %1907 = vmatprep.mubr.f32.mxu0 0.0
      %1908 = vmatmul.mubr.f32.gmra.mxu0 %v1831
      %v1909 = vpop.f32.mrf.mxu0
      %v1910 = vadd.f32 0.0, %v1909
      %v1911 = vpop.f32.mrf.mxu0
      %1912 = vdwg.mxu0
      %v1913 = vadd.f32 %v1570, %v1900
      %v1914 = vadd.f32 %v1575, %v1905
      %v1915 = vadd.f32 %v1580, %v1910
      %1916 = vrot.lane.b32.xlu0 %v903, 104
      %v1917 = vpop.permute.xlu0 %1916
      %1918 = vrot.lane.b32.xlu0 %v908, 104
      %v1919 = vpop.permute.xlu0 %1918
      %1920 = vrot.lane.b32.xlu0 %v913, 104
      %v1921 = vpop.permute.xlu0 %1920
      %1922 = vrot.lane.b32.xlu0 %v903, 72
      %v1923 = vpop.permute.xlu0 %1922
      %1924 = vrot.lane.b32.xlu0 %v908, 72
      %v1925 = vpop.permute.xlu0 %1924
      %1926 = vrot.lane.b32.xlu0 %v913, 72
      %v1927 = vpop.permute.xlu0 %1926
      %v1928 = vsel %vm933, %v1917, 0
      %v1930 = vsel %vm933, %v1919, 0
      %v1932 = vsel %vm933, %v1921, 0
      %v1934 = vsel %vm933, %v1923, 0
      %v1936 = vsel %vm933, %v1925, 0
      %v1938 = vsel %vm933, %v1927, 0
      %1940 = vmatprep.subr.mxu0 0.0
      %1941 = vmatpush1.xpose.msra.mxu0 0.0
      %1942 = vmatprep.subr.mxu0 0.0
      %1943 = vmatpush1.xpose.msra.mxu0 0.0
      %1944 = vmatprep.subr.mxu0 0.0
      %1945 = vmatpush1.xpose.msra.mxu0 0.0
      %1946 = vmatprep.subr.mxu0 0.0
      %1947 = vmatpush1.xpose.msra.mxu0 0.0
      %1948 = vmatprep.subr.mxu0 0.0
      %1949 = vmatpush1.xpose.msra.mxu0 0.0
      %1950 = vmatprep.subr.mxu0 0.0
      %1951 = vmatpush1.xpose.msra.mxu0 0.0
      %1952 = vmatprep.subr.mxu0 0.0
      %1953 = vmatpush1.xpose.msra.mxu0 0.0
      %1954 = vmatprep.subr.mxu0 0.0
      %1955 = vmatpush1.xpose.msra.mxu0 0.0
      %1956 = vmatprep.subr.mxu0 0.0
      %1957 = vmatpush1.xpose.msra.mxu0 0.0
      %1958 = vmatprep.subr.mxu0 0.0
      %1959 = vmatpush1.xpose.msra.mxu0 0.0
      %1960 = vmatprep.subr.mxu0 0.0
      %1961 = vmatpush1.xpose.msra.mxu0 0.0
      %1962 = vmatprep.subr.mxu0 0.0
      %1963 = vmatpush1.xpose.msra.mxu0 0.0
      %1964 = vmatprep.subr.mxu0 0.0
      %1965 = vmatpush1.xpose.msra.mxu0 0.0
      %1966 = vmatprep.subr.mxu0 0.0
      %1967 = vmatpush1.xpose.msra.mxu0 %v1938
      %1968 = vmatprep.subr.mxu0 0.0
      %1969 = vmatpush1.xpose.msra.mxu0 %v1936
      %1970 = vmatprep.subr.mxu0 0.0
      %1971 = vmatpush1.xpose.msra.mxu0 %v1934
      %1972 = vmatprep.subr.mxu0 0.0
      %1973 = vmatpush2.xpose.msra.mxu0 0.0
      %1974 = vmatprep.subr.mxu0 0.0
      %1975 = vmatpush2.xpose.msra.mxu0 0.0
      %1976 = vmatprep.subr.mxu0 0.0
      %1977 = vmatpush2.xpose.msra.mxu0 0.0
      %1978 = vmatprep.subr.mxu0 0.0
      %1979 = vmatpush2.xpose.msra.mxu0 0.0
      %1980 = vmatprep.subr.mxu0 0.0
      %1981 = vmatpush2.xpose.msra.mxu0 0.0
      %1982 = vmatprep.subr.mxu0 0.0
      %1983 = vmatpush2.xpose.msra.mxu0 0.0
      %1984 = vmatprep.subr.mxu0 0.0
      %1985 = vmatpush2.xpose.msra.mxu0 0.0
      %1986 = vmatprep.subr.mxu0 0.0
      %1987 = vmatpush2.xpose.msra.mxu0 0.0
      %1988 = vmatprep.subr.mxu0 0.0
      %1989 = vmatpush2.xpose.msra.mxu0 0.0
      %1990 = vmatprep.subr.mxu0 0.0
      %1991 = vmatpush2.xpose.msra.mxu0 0.0
      %1992 = vmatprep.subr.mxu0 0.0
      %1993 = vmatpush2.xpose.msra.mxu0 0.0
      %1994 = vmatprep.subr.mxu0 0.0
      %1995 = vmatpush2.xpose.msra.mxu0 0.0
      %1996 = vmatprep.subr.mxu0 0.0
      %1997 = vmatpush2.xpose.msra.mxu0 0.0
      %1998 = vmatprep.subr.mxu0 0.0
      %1999 = vmatpush2.xpose.msra.mxu0 0.0
      %2000 = vmatprep.subr.mxu0 0.0
      %2001 = vmatpush2.xpose.msra.mxu0 0.0
      %2002 = vmatprep.subr.mxu0 0.0
      %2003 = vmatpush2.xpose.msra.mxu0 0.0
      %2004 = vmatprep.mubr.f32.mxu0 0.0
      %2005 = vmatmul.mubr.f32.gmra.mxu0 %v1928
      %v2006 = vpop.f32.mrf.mxu0
      %v2007 = vadd.f32 0.0, %v2006
      %v2008 = vpop.f32.mrf.mxu0
      %2009 = vmatprep.mubr.f32.mxu0 0.0
      %2010 = vmatmul.mubr.f32.gmra.mxu0 %v1930
      %v2011 = vpop.f32.mrf.mxu0
      %v2012 = vadd.f32 0.0, %v2011
      %v2013 = vpop.f32.mrf.mxu0
      %2014 = vmatprep.mubr.f32.mxu0 0.0
      %2015 = vmatmul.mubr.f32.gmra.mxu0 %v1932
      %v2016 = vpop.f32.mrf.mxu0
      %v2017 = vadd.f32 0.0, %v2016
      %v2018 = vpop.f32.mrf.mxu0
      %2019 = vdwg.mxu0
      %v2020 = vmul.f32 %v2007, 0.35355338
      %v2021 = vmul.f32 %v2012, 0.35355338
      %v2022 = vmul.f32 %v2017, 0.35355338
      %v2023 = vadd.f32 %v2020, %v919
      %v2024 = vadd.f32 %v2021, %v919
      %v2025 = vadd.f32 %v2022, %v919
      %v2026 = vsel %vm1032, %v2023, -inf
      %2027 = vmax.xlane.f32.xlu0 %v2026
      %v2028 = vpop.xlane.xlu0 %2027
      %v2029 = vsel %vm1032, %v2024, -inf
      %2030 = vmax.xlane.f32.xlu0 %v2029
      %v2031 = vpop.xlane.xlu0 %2030
      %v2032 = vsel %vm1032, %v2025, -inf
      %2033 = vmax.xlane.f32.xlu0 %v2032
      %v2034 = vpop.xlane.xlu0 %2033
      %v2035 = vsub.f32 %v2023, %v2028
      %v2036 = vsub.f32 %v2024, %v2031
      %v2037 = vsub.f32 %v2025, %v2034
      %v2038 = vmul.f32 %v2035, 1.442695
      %v2039 = vpow.pop %v2038
      %v2040 = vmul.f32 %v2036, 1.442695
      %v2041 = vpow.pop %v2040
      %v2042 = vmul.f32 %v2037, 1.442695
      %v2043 = vpow.pop %v2042
      %v2044 = vsel %vm1032, %v2039, 0.0
      %2045 = vadd.xlane.f32.xlu0 %v2044
      %v2046 = vpop.xlane.xlu0 %2045
      %v2047 = vsel %vm1032, %v2041, 0.0
      %2048 = vadd.xlane.f32.xlu0 %v2047
      %v2049 = vpop.xlane.xlu0 %2048
      %v2050 = vsel %vm1032, %v2043, 0.0
      %2051 = vadd.xlane.f32.xlu0 %v2050
      %v2052 = vpop.xlane.xlu0 %2051
      %v2053 = vrcp.pop %v2046
      %v2054 = vmul.f32 %v2039, %v2053
      %v2055 = vrcp.pop %v2049
      %v2056 = vmul.f32 %v2041, %v2055
      %v2057 = vrcp.pop %v2052
      %v2058 = vmul.f32 %v2043, %v2057
      %2059 = vrot.lane.b32.xlu0 %v903, 40
      %v2060 = vpop.permute.xlu0 %2059
      %2061 = vrot.lane.b32.xlu0 %v908, 40
      %v2062 = vpop.permute.xlu0 %2061
      %2063 = vrot.lane.b32.xlu0 %v913, 40
      %v2064 = vpop.permute.xlu0 %2063
      %v2069 = vsel %vm1032, %v2054, 0
      %v2072 = vsel %vm1032, %v2056, 0
      %v2075 = vsel %vm1032, %v2058, 0
      %2077 = vmatprep.subr.mxu0 0.0
      %2078 = vmatpush1.msra.mxu0 0.0
      %2079 = vmatprep.subr.mxu0 0.0
      %2080 = vmatpush1.msra.mxu0 0.0
      %2081 = vmatprep.subr.mxu0 0.0
      %2082 = vmatpush1.msra.mxu0 0.0
      %2083 = vmatprep.subr.mxu0 0.0
      %2084 = vmatpush1.msra.mxu0 0.0
      %2085 = vmatprep.subr.mxu0 0.0
      %2086 = vmatpush1.msra.mxu0 0.0
      %2087 = vmatprep.subr.mxu0 0.0
      %2088 = vmatpush1.msra.mxu0 0.0
      %2089 = vmatprep.subr.mxu0 0.0
      %2090 = vmatpush1.msra.mxu0 0.0
      %2091 = vmatprep.subr.mxu0 0.0
      %2092 = vmatpush1.msra.mxu0 0.0
      %2093 = vmatprep.subr.mxu0 0.0
      %2094 = vmatpush1.msra.mxu0 0.0
      %2095 = vmatprep.subr.mxu0 0.0
      %2096 = vmatpush1.msra.mxu0 0.0
      %2097 = vmatprep.subr.mxu0 0.0
      %2098 = vmatpush1.msra.mxu0 0.0
      %2099 = vmatprep.subr.mxu0 0.0
      %2100 = vmatpush1.msra.mxu0 0.0
      %2101 = vmatprep.subr.mxu0 0.0
      %2102 = vmatpush1.msra.mxu0 0.0
      %2103 = vmatprep.subr.mxu0 0.0
      %2104 = vmatpush1.msra.mxu0 %v2064
      %2105 = vmatprep.subr.mxu0 0.0
      %2106 = vmatpush1.msra.mxu0 %v2062
      %2107 = vmatprep.subr.mxu0 0.0
      %2108 = vmatpush1.msra.mxu0 %v2060
      %2109 = vmatprep.subr.mxu0 0.0
      %2110 = vmatpush2.msra.mxu0 0.0
      %2111 = vmatprep.subr.mxu0 0.0
      %2112 = vmatpush2.msra.mxu0 0.0
      %2113 = vmatprep.subr.mxu0 0.0
      %2114 = vmatpush2.msra.mxu0 0.0
      %2115 = vmatprep.subr.mxu0 0.0
      %2116 = vmatpush2.msra.mxu0 0.0
      %2117 = vmatprep.subr.mxu0 0.0
      %2118 = vmatpush2.msra.mxu0 0.0
      %2119 = vmatprep.subr.mxu0 0.0
      %2120 = vmatpush2.msra.mxu0 0.0
      %2121 = vmatprep.subr.mxu0 0.0
      %2122 = vmatpush2.msra.mxu0 0.0
      %2123 = vmatprep.subr.mxu0 0.0
      %2124 = vmatpush2.msra.mxu0 0.0
      %2125 = vmatprep.subr.mxu0 0.0
      %2126 = vmatpush2.msra.mxu0 0.0
      %2127 = vmatprep.subr.mxu0 0.0
      %2128 = vmatpush2.msra.mxu0 0.0
      %2129 = vmatprep.subr.mxu0 0.0
      %2130 = vmatpush2.msra.mxu0 0.0
      %2131 = vmatprep.subr.mxu0 0.0
      %2132 = vmatpush2.msra.mxu0 0.0
      %2133 = vmatprep.subr.mxu0 0.0
      %2134 = vmatpush2.msra.mxu0 0.0
      %2135 = vmatprep.subr.mxu0 0.0
      %2136 = vmatpush2.msra.mxu0 0.0
      %2137 = vmatprep.subr.mxu0 0.0
      %2138 = vmatpush2.msra.mxu0 0.0
      %2139 = vmatprep.subr.mxu0 0.0
      %2140 = vmatpush2.msra.mxu0 0.0
      %2141 = vmatprep.mubr.f32.mxu0 0.0
      %2142 = vmatmul.mubr.f32.gmra.mxu0 %v2069
      %v2143 = vpop.f32.mrf.mxu0
      %v2144 = vadd.f32 0.0, %v2143
      %v2145 = vpop.f32.mrf.mxu0
      %2146 = vmatprep.mubr.f32.mxu0 0.0
      %2147 = vmatmul.mubr.f32.gmra.mxu0 %v2072
      %v2148 = vpop.f32.mrf.mxu0
      %v2149 = vadd.f32 0.0, %v2148
      %v2150 = vpop.f32.mrf.mxu0
      %2151 = vmatprep.mubr.f32.mxu0 0.0
      %2152 = vmatmul.mubr.f32.gmra.mxu0 %v2075
      %v2153 = vpop.f32.mrf.mxu0
      %v2154 = vadd.f32 0.0, %v2153
      %v2155 = vpop.f32.mrf.mxu0
      %2156 = vdwg.mxu0
      %v2158 = vsel %vm933, %v2144, 0
      %v2161 = vsel %vm933, %v2149, 0
      %v2164 = vsel %vm933, %v2154, 0
      %2166 = vmatprep.subr.mxu0 0.0
      %2167 = vmatpush1.msra.mxu0 0.0
      %2168 = vmatprep.subr.mxu0 0.0
      %2169 = vmatpush1.msra.mxu0 0.0
      %2170 = vmatprep.subr.mxu0 0.0
      %2171 = vmatpush1.msra.mxu0 0.0
      %2172 = vmatprep.subr.mxu0 0.0
      %2173 = vmatpush1.msra.mxu0 0.0
      %2174 = vmatprep.subr.mxu0 0.0
      %2175 = vmatpush1.msra.mxu0 0.0
      %2176 = vmatprep.subr.mxu0 0.0
      %2177 = vmatpush1.msra.mxu0 0.0
      %2178 = vmatprep.subr.mxu0 0.0
      %2179 = vmatpush1.msra.mxu0 0.0
      %2180 = vmatprep.subr.mxu0 0.0
      %2181 = vmatpush1.msra.mxu0 0.0
      %2182 = vmatprep.subr.mxu0 0.0
      %2183 = vmatpush1.msra.mxu0 0.0
      %2184 = vmatprep.subr.mxu0 0.0
      %2185 = vmatpush1.msra.mxu0 0.0
      %2186 = vmatprep.subr.mxu0 0.0
      %2187 = vmatpush1.msra.mxu0 0.0
      %2188 = vmatprep.subr.mxu0 0.0
      %2189 = vmatpush1.msra.mxu0 0.0
      %2190 = vmatprep.subr.mxu0 0.0
      %2191 = vmatpush1.msra.mxu0 0.0
      %2192 = vmatprep.subr.mxu0 0.0
      %2193 = vmatpush1.msra.mxu0 0.0
      %2194 = vmatprep.subr.mxu0 0.0
      %2195 = vmatpush1.msra.mxu0 0.0
      %2196 = vmatprep.subr.mxu0 0.0
      %2197 = vmatpush1.msra.mxu0 %v923
      %2198 = vmatprep.subr.mxu0 0.0
      %2199 = vmatpush2.msra.mxu0 0.0
      %2200 = vmatprep.subr.mxu0 0.0
      %2201 = vmatpush2.msra.mxu0 0.0
      %2202 = vmatprep.subr.mxu0 0.0
      %2203 = vmatpush2.msra.mxu0 0.0
      %2204 = vmatprep.subr.mxu0 0.0
      %2205 = vmatpush2.msra.mxu0 0.0
      %2206 = vmatprep.subr.mxu0 0.0
      %2207 = vmatpush2.msra.mxu0 0.0
      %2208 = vmatprep.subr.mxu0 0.0
      %2209 = vmatpush2.msra.mxu0 0.0
      %2210 = vmatprep.subr.mxu0 0.0
      %2211 = vmatpush2.msra.mxu0 0.0
      %2212 = vmatprep.subr.mxu0 0.0
      %2213 = vmatpush2.msra.mxu0 0.0
      %2214 = vmatprep.subr.mxu0 0.0
      %2215 = vmatpush2.msra.mxu0 0.0
      %2216 = vmatprep.subr.mxu0 0.0
      %2217 = vmatpush2.msra.mxu0 0.0
      %2218 = vmatprep.subr.mxu0 0.0
      %2219 = vmatpush2.msra.mxu0 0.0
      %2220 = vmatprep.subr.mxu0 0.0
      %2221 = vmatpush2.msra.mxu0 0.0
      %2222 = vmatprep.subr.mxu0 0.0
      %2223 = vmatpush2.msra.mxu0 0.0
      %2224 = vmatprep.subr.mxu0 0.0
      %2225 = vmatpush2.msra.mxu0 0.0
      %2226 = vmatprep.subr.mxu0 0.0
      %2227 = vmatpush2.msra.mxu0 0.0
      %2228 = vmatprep.subr.mxu0 0.0
      %2229 = vmatpush2.msra.mxu0 0.0
      %2230 = vmatprep.mubr.f32.mxu0 0.0
      %2231 = vmatmul.mubr.f32.gmra.mxu0 %v2158
      %v2232 = vpop.f32.mrf.mxu0
      %v2233 = vadd.f32 0.0, %v2232
      %v2234 = vpop.f32.mrf.mxu0
      %2235 = vmatprep.mubr.f32.mxu0 0.0
      %2236 = vmatmul.mubr.f32.gmra.mxu0 %v2161
      %v2237 = vpop.f32.mrf.mxu0
      %v2238 = vadd.f32 0.0, %v2237
      %v2239 = vpop.f32.mrf.mxu0
      %2240 = vmatprep.mubr.f32.mxu0 0.0
      %2241 = vmatmul.mubr.f32.gmra.mxu0 %v2164
      %v2242 = vpop.f32.mrf.mxu0
      %v2243 = vadd.f32 0.0, %v2242
      %v2244 = vpop.f32.mrf.mxu0
      %2245 = vdwg.mxu0
      %v2246 = vadd.f32 %v1913, %v2233
      %v2247 = vadd.f32 %v1914, %v2238
      %v2248 = vadd.f32 %v1915, %v2243
      %v2249 = vld [vmem:[%s667] sm:$0x1]
      %v2251 = vlaneseq
      %v2252 = vshrl.u32 %v2251, 7
      %v2253 = vsub.s32 0, %v2252
      %v2254 = vrot.slane %v2249, %v2253
      %v2256 = vadd.f32 %v2246, %v2254
      %v2257 = vadd.f32 %v2247, %v2254
      %v2258 = vadd.f32 %v2248, %v2254
      %v2259 = vadd.f32 %v2256, %v812
      %v2260 = vadd.f32 %v2257, %v813
      %v2261 = vadd.f32 %v2258, %v814
      %v2262 = vld [vmem:[%s687] sm:$0x1]
      %v2263 = vld [vmem:[%s690] sm:$0x1]
      %v2264 = vsel %vm826, %v2259, 0.0
      %2265 = vadd.xlane.f32.xlu0 %v2264
      %v2266 = vpop.xlane.xlu0 %2265
      %v2267 = vsel %vm826, %v2260, 0.0
      %2268 = vadd.xlane.f32.xlu0 %v2267
      %v2269 = vpop.xlane.xlu0 %2268
      %v2270 = vsel %vm826, %v2261, 0.0
      %2271 = vadd.xlane.f32.xlu0 %v2270
      %v2272 = vpop.xlane.xlu0 %2271
      %v2273 = vrcp.pop 32.0
      %v2274 = vmul.f32 %v2266, %v2273
      %v2275 = vmul.f32 %v2269, %v2273
      %v2276 = vmul.f32 %v2272, %v2273
      %v2277 = vsub.f32 %v2259, %v2274
      %v2278 = vsub.f32 %v2260, %v2275
      %v2279 = vsub.f32 %v2261, %v2276
      %v2280 = vmul.f32 %v2277, %v2277
      %v2281 = vmul.f32 %v2278, %v2278
      %v2282 = vmul.f32 %v2279, %v2279
      %v2283 = vsel %vm826, %v2280, 0.0
      %2284 = vadd.xlane.f32.xlu0 %v2283
      %v2285 = vpop.xlane.xlu0 %2284
      %v2286 = vsel %vm826, %v2281, 0.0
      %2287 = vadd.xlane.f32.xlu0 %v2286
      %v2288 = vpop.xlane.xlu0 %2287
      %v2289 = vsel %vm826, %v2282, 0.0
      %2290 = vadd.xlane.f32.xlu0 %v2289
      %v2291 = vpop.xlane.xlu0 %2290
      %v2292 = vmul.f32 %v2285, %v2273
      %v2293 = vmul.f32 %v2288, %v2273
      %v2294 = vmul.f32 %v2291, %v2273
      %v2295 = vadd.f32 %v2292, 1e-05
      %v2296 = vadd.f32 %v2293, 1e-05
      %v2297 = vadd.f32 %v2294, 1e-05
      %v2298 = vrsqrt.pop %v2295
      %v2299 = vrsqrt.pop %v2296
      %v2300 = vrsqrt.pop %v2297
      %v2301 = vmul.f32 %v2277, %v2298
      %v2302 = vmul.f32 %v2278, %v2299
      %v2303 = vmul.f32 %v2279, %v2300
      %v2305 = vlaneseq
      %v2306 = vshrl.u32 %v2305, 7
      %v2307 = vsub.s32 0, %v2306
      %v2308 = vrot.slane %v2262, %v2307
      %v2310 = vmul.f32 %v2301, %v2308
      %v2311 = vmul.f32 %v2302, %v2308
      %v2312 = vmul.f32 %v2303, %v2308
      %v2314 = vlaneseq
      %v2315 = vshrl.u32 %v2314, 7
      %v2316 = vsub.s32 0, %v2315
      %v2317 = vrot.slane %v2263, %v2316
      %v2319 = vadd.f32 %v2310, %v2317
      %v2320 = vadd.f32 %v2311, %v2317
      %v2321 = vadd.f32 %v2312, %v2317
      %v2322 = vpack.c.bf16 %v2320, %v2319
      %v2323 = vpack.c.bf16 %v2321, %v2321
      %v2324 = vld [vmem:[%s672] sm:$0xff]
      %v2325 = vld [vmem:[%s672 + $0x8] sm:$0xff]
      %v2326 = vld [vmem:[%s672 + $0x10] sm:$0xff]
      %v2327 = vld [vmem:[%s672 + $0x18] sm:$0xff]
      %v2328 = vld [vmem:[%s672 + $0x20] sm:$0xff]
      %v2329 = vld [vmem:[%s672 + $0x28] sm:$0xff]
      %v2330 = vld [vmem:[%s672 + $0x30] sm:$0xff]
      %v2331 = vld [vmem:[%s672 + $0x38] sm:$0xff]
      %v2332 = vld [vmem:[%s672 + $0x40] sm:$0xff]
      %v2333 = vld [vmem:[%s672 + $0x48] sm:$0xff]
      %v2334 = vld [vmem:[%s672 + $0x50] sm:$0xff]
      %v2335 = vld [vmem:[%s672 + $0x58] sm:$0xff]
      %v2336 = vld [vmem:[%s672 + $0x60] sm:$0xff]
      %v2337 = vld [vmem:[%s672 + $0x68] sm:$0xff]
      %v2338 = vld [vmem:[%s672 + $0x70] sm:$0xff]
      %v2339 = vld [vmem:[%s672 + $0x78] sm:$0xff]
      %v2340 = vld [vmem:[%s672 + $0x80] sm:$0xff]
      %v2341 = vld [vmem:[%s672 + $0x88] sm:$0xff]
      %v2342 = vld [vmem:[%s672 + $0x90] sm:$0xff]
      %v2343 = vld [vmem:[%s672 + $0x98] sm:$0xff]
      %v2344 = vld [vmem:[%s672 + $0xa0] sm:$0xff]
      %v2345 = vld [vmem:[%s672 + $0xa8] sm:$0xff]
      %v2346 = vld [vmem:[%s672 + $0xb0] sm:$0xff]
      %v2347 = vld [vmem:[%s672 + $0xb8] sm:$0xff]
      %v2348 = vld [vmem:[%s672 + $0xc0] sm:$0xff]
      %v2349 = vld [vmem:[%s672 + $0xc8] sm:$0xff]
      %v2350 = vld [vmem:[%s672 + $0xd0] sm:$0xff]
      %v2351 = vld [vmem:[%s672 + $0xd8] sm:$0xff]
      %v2352 = vld [vmem:[%s672 + $0xe0] sm:$0xff]
      %v2353 = vld [vmem:[%s672 + $0xe8] sm:$0xff]
      %v2354 = vld [vmem:[%s672 + $0xf0] sm:$0xff]
      %v2355 = vld [vmem:[%s672 + $0xf8] sm:$0xff]
      %v2356 = vld [vmem:[%s676] sm:$0xff]
      %v2357 = vld [vmem:[%s676 + $0x8] sm:$0xff]
      %v2360 = vlaneseq
      %v2361 = vshrl.u32 %v2360, 7
      %v2362 = vsub.s32 0, %v2361
      %v2363 = vrot.slane %v2356, %v2362
      %v2364 = vlaneseq
      %v2365 = vshrl.u32 %v2364, 7
      %v2366 = vsub.s32 1, %v2365
      %v2367 = vrot.slane %v2356, %v2366
      %v2368 = vlaneseq
      %v2369 = vshrl.u32 %v2368, 7
      %v2370 = vsub.s32 2, %v2369
      %v2371 = vrot.slane %v2356, %v2370
      %v2372 = vlaneseq
      %v2373 = vshrl.u32 %v2372, 7
      %v2374 = vsub.s32 3, %v2373
      %v2375 = vrot.slane %v2356, %v2374
      %v2376 = vlaneseq
      %v2377 = vshrl.u32 %v2376, 7
      %v2378 = vsub.s32 4, %v2377
      %v2379 = vrot.slane %v2356, %v2378
      %v2380 = vlaneseq
      %v2381 = vshrl.u32 %v2380, 7
      %v2382 = vsub.s32 5, %v2381
      %v2383 = vrot.slane %v2356, %v2382
      %v2384 = vlaneseq
      %v2385 = vshrl.u32 %v2384, 7
      %v2386 = vsub.s32 6, %v2385
      %v2387 = vrot.slane %v2356, %v2386
      %v2388 = vlaneseq
      %v2389 = vshrl.u32 %v2388, 7
      %v2390 = vsub.s32 7, %v2389
      %v2391 = vrot.slane %v2356, %v2390
      %v2392 = vlaneseq
      %v2393 = vshrl.u32 %v2392, 7
      %v2394 = vsub.s32 0, %v2393
      %v2395 = vrot.slane %v2357, %v2394
      %v2396 = vlaneseq
      %v2397 = vshrl.u32 %v2396, 7
      %v2398 = vsub.s32 1, %v2397
      %v2399 = vrot.slane %v2357, %v2398
      %v2400 = vlaneseq
      %v2401 = vshrl.u32 %v2400, 7
      %v2402 = vsub.s32 2, %v2401
      %v2403 = vrot.slane %v2357, %v2402
      %v2404 = vlaneseq
      %v2405 = vshrl.u32 %v2404, 7
      %v2406 = vsub.s32 3, %v2405
      %v2407 = vrot.slane %v2357, %v2406
      %v2408 = vlaneseq
      %v2409 = vshrl.u32 %v2408, 7
      %v2410 = vsub.s32 4, %v2409
      %v2411 = vrot.slane %v2357, %v2410
      %v2412 = vlaneseq
      %v2413 = vshrl.u32 %v2412, 7
      %v2414 = vsub.s32 5, %v2413
      %v2415 = vrot.slane %v2357, %v2414
      %v2416 = vlaneseq
      %v2417 = vshrl.u32 %v2416, 7
      %v2418 = vsub.s32 6, %v2417
      %v2419 = vrot.slane %v2357, %v2418
      %v2420 = vlaneseq
      %v2421 = vshrl.u32 %v2420, 7
      %v2422 = vsub.s32 7, %v2421
      %v2423 = vrot.slane %v2357, %v2422
      %v2472 = vunpack.c.l.b16 %v2324
      %v2473 = vunpack.c.h.b16 %v2324
      %v2474 = vunpack.c.l.b16 %v2325
      %v2475 = vunpack.c.h.b16 %v2325
      %v2476 = vunpack.c.l.b16 %v2326
      %v2477 = vunpack.c.h.b16 %v2326
      %v2478 = vunpack.c.l.b16 %v2327
      %v2479 = vunpack.c.h.b16 %v2327
      %v2480 = vunpack.c.l.b16 %v2328
      %v2481 = vunpack.c.h.b16 %v2328
      %v2482 = vunpack.c.l.b16 %v2329
      %v2483 = vunpack.c.h.b16 %v2329
      %v2484 = vunpack.c.l.b16 %v2330
      %v2485 = vunpack.c.h.b16 %v2330
      %v2486 = vunpack.c.l.b16 %v2331
      %v2487 = vunpack.c.h.b16 %v2331
      %v2488 = vunpack.c.l.b16 %v2332
      %v2489 = vunpack.c.h.b16 %v2332
      %v2490 = vunpack.c.l.b16 %v2333
      %v2491 = vunpack.c.h.b16 %v2333
      %v2492 = vunpack.c.l.b16 %v2334
      %v2493 = vunpack.c.h.b16 %v2334
      %v2494 = vunpack.c.l.b16 %v2335
      %v2495 = vunpack.c.h.b16 %v2335
      %v2496 = vunpack.c.l.b16 %v2336
      %v2497 = vunpack.c.h.b16 %v2336
      %v2498 = vunpack.c.l.b16 %v2337
      %v2499 = vunpack.c.h.b16 %v2337
      %v2500 = vunpack.c.l.b16 %v2338
      %v2501 = vunpack.c.h.b16 %v2338
      %v2502 = vunpack.c.l.b16 %v2339
      %v2503 = vunpack.c.h.b16 %v2339
      %v2504 = vunpack.c.l.b16 %v2340
      %v2505 = vunpack.c.h.b16 %v2340
      %v2506 = vunpack.c.l.b16 %v2341
      %v2507 = vunpack.c.h.b16 %v2341
      %v2508 = vunpack.c.l.b16 %v2342
      %v2509 = vunpack.c.h.b16 %v2342
      %v2510 = vunpack.c.l.b16 %v2343
      %v2511 = vunpack.c.h.b16 %v2343
      %v2512 = vunpack.c.l.b16 %v2344
      %v2513 = vunpack.c.h.b16 %v2344
      %v2514 = vunpack.c.l.b16 %v2345
      %v2515 = vunpack.c.h.b16 %v2345
      %v2516 = vunpack.c.l.b16 %v2346
      %v2517 = vunpack.c.h.b16 %v2346
      %v2518 = vunpack.c.l.b16 %v2347
      %v2519 = vunpack.c.h.b16 %v2347
      %v2520 = vunpack.c.l.b16 %v2348
      %v2521 = vunpack.c.h.b16 %v2348
      %v2522 = vunpack.c.l.b16 %v2349
      %v2523 = vunpack.c.h.b16 %v2349
      %v2524 = vunpack.c.l.b16 %v2350
      %v2525 = vunpack.c.h.b16 %v2350
      %v2526 = vunpack.c.l.b16 %v2351
      %v2527 = vunpack.c.h.b16 %v2351
      %v2528 = vunpack.c.l.b16 %v2352
      %v2529 = vunpack.c.h.b16 %v2352
      %v2530 = vunpack.c.l.b16 %v2353
      %v2531 = vunpack.c.h.b16 %v2353
      %v2532 = vunpack.c.l.b16 %v2354
      %v2533 = vunpack.c.h.b16 %v2354
      %v2534 = vunpack.c.l.b16 %v2355
      %v2535 = vunpack.c.h.b16 %v2355
      %v2536 = vpack.c.b16 %v2488, %v2472
      %v2537 = vpack.c.b16 %v2489, %v2473
      %v2538 = vpack.c.b16 %v2490, %v2474
      %v2539 = vpack.c.b16 %v2491, %v2475
      %v2540 = vpack.c.b16 %v2492, %v2476
      %v2541 = vpack.c.b16 %v2493, %v2477
      %v2542 = vpack.c.b16 %v2494, %v2478
      %v2543 = vpack.c.b16 %v2495, %v2479
      %v2544 = vpack.c.b16 %v2496, %v2480
      %v2545 = vpack.c.b16 %v2497, %v2481
      %v2546 = vpack.c.b16 %v2498, %v2482
      %v2547 = vpack.c.b16 %v2499, %v2483
      %v2548 = vpack.c.b16 %v2500, %v2484
      %v2549 = vpack.c.b16 %v2501, %v2485
      %v2550 = vpack.c.b16 %v2502, %v2486
      %v2551 = vpack.c.b16 %v2503, %v2487
      %v2552 = vpack.c.b16 %v2520, %v2504
      %v2553 = vpack.c.b16 %v2521, %v2505
      %v2554 = vpack.c.b16 %v2522, %v2506
      %v2555 = vpack.c.b16 %v2523, %v2507
      %v2556 = vpack.c.b16 %v2524, %v2508
      %v2557 = vpack.c.b16 %v2525, %v2509
      %v2558 = vpack.c.b16 %v2526, %v2510
      %v2559 = vpack.c.b16 %v2527, %v2511
      %v2560 = vpack.c.b16 %v2528, %v2512
      %v2561 = vpack.c.b16 %v2529, %v2513
      %v2562 = vpack.c.b16 %v2530, %v2514
      %v2563 = vpack.c.b16 %v2531, %v2515
      %v2564 = vpack.c.b16 %v2532, %v2516
      %v2565 = vpack.c.b16 %v2533, %v2517
      %v2566 = vpack.c.b16 %v2534, %v2518
      %v2567 = vpack.c.b16 %v2535, %v2519
      %v2601 = vsel %vm826, %v2322, 0
      %v2604 = vsel %vm826, %v2323, 0
      %2606 = vmatprep.subr.bf16.mxu0 0
      %2607 = vmatpush1.bf16.msra.mxu0 0
      %2608 = vmatprep.subr.bf16.mxu0 0
      %2609 = vmatpush1.bf16.msra.mxu0 0
      %2610 = vmatprep.subr.bf16.mxu0 0
      %2611 = vmatpush1.bf16.msra.mxu0 0
      %2612 = vmatprep.subr.bf16.mxu0 0
      %2613 = vmatpush1.bf16.msra.mxu0 0
      %2614 = vmatprep.subr.bf16.mxu0 0
      %2615 = vmatpush1.bf16.msra.mxu0 0
      %2616 = vmatprep.subr.bf16.mxu0 0
      %2617 = vmatpush1.bf16.msra.mxu0 0
      %2618 = vmatprep.subr.bf16.mxu0 %v2553
      %2619 = vmatpush1.bf16.msra.mxu0 %v2552
      %2620 = vmatprep.subr.bf16.mxu0 %v2537
      %2621 = vmatpush1.bf16.msra.mxu0 %v2536
      %2622 = vmatprep.subr.bf16.mxu0 0
      %2623 = vmatpush2.bf16.msra.mxu0 0
      %2624 = vmatprep.subr.bf16.mxu0 0
      %2625 = vmatpush2.bf16.msra.mxu0 0
      %2626 = vmatprep.subr.bf16.mxu0 0
      %2627 = vmatpush2.bf16.msra.mxu0 0
      %2628 = vmatprep.subr.bf16.mxu0 0
      %2629 = vmatpush2.bf16.msra.mxu0 0
      %2630 = vmatprep.subr.bf16.mxu0 0
      %2631 = vmatpush2.bf16.msra.mxu0 0
      %2632 = vmatprep.subr.bf16.mxu0 0
      %2633 = vmatpush2.bf16.msra.mxu0 0
      %2634 = vmatprep.subr.bf16.mxu0 0
      %2635 = vmatpush2.bf16.msra.mxu0 0
      %2636 = vmatprep.subr.bf16.mxu0 0
      %2637 = vmatpush2.bf16.msra.mxu0 0
      %2638 = vmatprep.mubr.bf16.mxu0 0
      %2639 = vmatmul.mubr.bf16.gmra.mxu0 %v2601
      %v2640 = vpop.f32.mrf.mxu0
      %v2641 = vadd.f32 %v2363, %v2640
      %v2642 = vpop.f32.mrf.mxu0
      %v2643 = vadd.f32 %v2367, %v2642
      %v2644 = vpop.f32.mrf.mxu0
      %v2645 = vadd.f32 %v2363, %v2644
      %v2646 = vpop.f32.mrf.mxu0
      %v2647 = vadd.f32 %v2367, %v2646
      %2648 = vmatprep.mubr.bf16.mxu0 0
      %2649 = vmatmul.mubr.bf16.gmra.mxu0 %v2604
      %v2650 = vpop.f32.mrf.mxu0
      %v2651 = vadd.f32 %v2363, %v2650
      %v2652 = vpop.f32.mrf.mxu0
      %v2653 = vadd.f32 %v2367, %v2652
      %v2654 = vpop.f32.mrf.mxu0
      %v2655 = vpop.f32.mrf.mxu0
      %2656 = vdwg.mxu0
      %2657 = vmatprep.subr.bf16.mxu0 0
      %2658 = vmatpush1.bf16.msra.mxu0 0
      %2659 = vmatprep.subr.bf16.mxu0 0
      %2660 = vmatpush1.bf16.msra.mxu0 0
      %2661 = vmatprep.subr.bf16.mxu0 0
      %2662 = vmatpush1.bf16.msra.mxu0 0
      %2663 = vmatprep.subr.bf16.mxu0 0
      %2664 = vmatpush1.bf16.msra.mxu0 0
      %2665 = vmatprep.subr.bf16.mxu0 0
      %2666 = vmatpush1.bf16.msra.mxu0 0
      %2667 = vmatprep.subr.bf16.mxu0 0
      %2668 = vmatpush1.bf16.msra.mxu0 0
      %2669 = vmatprep.subr.bf16.mxu0 %v2555
      %2670 = vmatpush1.bf16.msra.mxu0 %v2554
      %2671 = vmatprep.subr.bf16.mxu0 %v2539
      %2672 = vmatpush1.bf16.msra.mxu0 %v2538
      %2673 = vmatprep.subr.bf16.mxu0 0
      %2674 = vmatpush2.bf16.msra.mxu0 0
      %2675 = vmatprep.subr.bf16.mxu0 0
      %2676 = vmatpush2.bf16.msra.mxu0 0
      %2677 = vmatprep.subr.bf16.mxu0 0
      %2678 = vmatpush2.bf16.msra.mxu0 0
      %2679 = vmatprep.subr.bf16.mxu0 0
      %2680 = vmatpush2.bf16.msra.mxu0 0
      %2681 = vmatprep.subr.bf16.mxu0 0
      %2682 = vmatpush2.bf16.msra.mxu0 0
      %2683 = vmatprep.subr.bf16.mxu0 0
      %2684 = vmatpush2.bf16.msra.mxu0 0
      %2685 = vmatprep.subr.bf16.mxu0 0
      %2686 = vmatpush2.bf16.msra.mxu0 0
      %2687 = vmatprep.subr.bf16.mxu0 0
      %2688 = vmatpush2.bf16.msra.mxu0 0
      %2689 = vmatprep.mubr.bf16.mxu0 0
      %2690 = vmatmul.mubr.bf16.gmra.mxu0 %v2601
      %v2691 = vpop.f32.mrf.mxu0
      %v2692 = vadd.f32 %v2371, %v2691
      %v2693 = vpop.f32.mrf.mxu0
      %v2694 = vadd.f32 %v2375, %v2693
      %v2695 = vpop.f32.mrf.mxu0
      %v2696 = vadd.f32 %v2371, %v2695
      %v2697 = vpop.f32.mrf.mxu0
      %v2698 = vadd.f32 %v2375, %v2697
      %2699 = vmatprep.mubr.bf16.mxu0 0
      %2700 = vmatmul.mubr.bf16.gmra.mxu0 %v2604
      %v2701 = vpop.f32.mrf.mxu0
      %v2702 = vadd.f32 %v2371, %v2701
      %v2703 = vpop.f32.mrf.mxu0
      %v2704 = vadd.f32 %v2375, %v2703
      %v2705 = vpop.f32.mrf.mxu0
      %v2706 = vpop.f32.mrf.mxu0
      %2707 = vdwg.mxu0
      %2708 = vmatprep.subr.bf16.mxu0 0
      %2709 = vmatpush1.bf16.msra.mxu0 0
      %2710 = vmatprep.subr.bf16.mxu0 0
      %2711 = vmatpush1.bf16.msra.mxu0 0
      %2712 = vmatprep.subr.bf16.mxu0 0
      %2713 = vmatpush1.bf16.msra.mxu0 0
      %2714 = vmatprep.subr.bf16.mxu0 0
      %2715 = vmatpush1.bf16.msra.mxu0 0
      %2716 = vmatprep.subr.bf16.mxu0 0
      %2717 = vmatpush1.bf16.msra.mxu0 0
      %2718 = vmatprep.subr.bf16.mxu0 0
      %2719 = vmatpush1.bf16.msra.mxu0 0
      %2720 = vmatprep.subr.bf16.mxu0 %v2557
      %2721 = vmatpush1.bf16.msra.mxu0 %v2556
      %2722 = vmatprep.subr.bf16.mxu0 %v2541
      %2723 = vmatpush1.bf16.msra.mxu0 %v2540
      %2724 = vmatprep.subr.bf16.mxu0 0
      %2725 = vmatpush2.bf16.msra.mxu0 0
      %2726 = vmatprep.subr.bf16.mxu0 0
      %2727 = vmatpush2.bf16.msra.mxu0 0
      %2728 = vmatprep.subr.bf16.mxu0 0
      %2729 = vmatpush2.bf16.msra.mxu0 0
      %2730 = vmatprep.subr.bf16.mxu0 0
      %2731 = vmatpush2.bf16.msra.mxu0 0
      %2732 = vmatprep.subr.bf16.mxu0 0
      %2733 = vmatpush2.bf16.msra.mxu0 0
      %2734 = vmatprep.subr.bf16.mxu0 0
      %2735 = vmatpush2.bf16.msra.mxu0 0
      %2736 = vmatprep.subr.bf16.mxu0 0
      %2737 = vmatpush2.bf16.msra.mxu0 0
      %2738 = vmatprep.subr.bf16.mxu0 0
      %2739 = vmatpush2.bf16.msra.mxu0 0
      %2740 = vmatprep.mubr.bf16.mxu0 0
      %2741 = vmatmul.mubr.bf16.gmra.mxu0 %v2601
      %v2742 = vpop.f32.mrf.mxu0
      %v2743 = vadd.f32 %v2379, %v2742
      %v2744 = vpop.f32.mrf.mxu0
      %v2745 = vadd.f32 %v2383, %v2744
      %v2746 = vpop.f32.mrf.mxu0
      %v2747 = vadd.f32 %v2379, %v2746
      %v2748 = vpop.f32.mrf.mxu0
      %v2749 = vadd.f32 %v2383, %v2748
      %2750 = vmatprep.mubr.bf16.mxu0 0
      %2751 = vmatmul.mubr.bf16.gmra.mxu0 %v2604
      %v2752 = vpop.f32.mrf.mxu0
      %v2753 = vadd.f32 %v2379, %v2752
      %v2754 = vpop.f32.mrf.mxu0
      %v2755 = vadd.f32 %v2383, %v2754
      %v2756 = vpop.f32.mrf.mxu0
      %v2757 = vpop.f32.mrf.mxu0
      %2758 = vdwg.mxu0
      %2759 = vmatprep.subr.bf16.mxu0 0
      %2760 = vmatpush1.bf16.msra.mxu0 0
      %2761 = vmatprep.subr.bf16.mxu0 0
      %2762 = vmatpush1.bf16.msra.mxu0 0
      %2763 = vmatprep.subr.bf16.mxu0 0
      %2764 = vmatpush1.bf16.msra.mxu0 0
      %2765 = vmatprep.subr.bf16.mxu0 0
      %2766 = vmatpush1.bf16.msra.mxu0 0
      %2767 = vmatprep.subr.bf16.mxu0 0
      %2768 = vmatpush1.bf16.msra.mxu0 0
      %2769 = vmatprep.subr.bf16.mxu0 0
      %2770 = vmatpush1.bf16.msra.mxu0 0
      %2771 = vmatprep.subr.bf16.mxu0 %v2559
      %2772 = vmatpush1.bf16.msra.mxu0 %v2558
      %2773 = vmatprep.subr.bf16.mxu0 %v2543
      %2774 = vmatpush1.bf16.msra.mxu0 %v2542
      %2775 = vmatprep.subr.bf16.mxu0 0
      %2776 = vmatpush2.bf16.msra.mxu0 0
      %2777 = vmatprep.subr.bf16.mxu0 0
      %2778 = vmatpush2.bf16.msra.mxu0 0
      %2779 = vmatprep.subr.bf16.mxu0 0
      %2780 = vmatpush2.bf16.msra.mxu0 0
      %2781 = vmatprep.subr.bf16.mxu0 0
      %2782 = vmatpush2.bf16.msra.mxu0 0
      %2783 = vmatprep.subr.bf16.mxu0 0
      %2784 = vmatpush2.bf16.msra.mxu0 0
      %2785 = vmatprep.subr.bf16.mxu0 0
      %2786 = vmatpush2.bf16.msra.mxu0 0
      %2787 = vmatprep.subr.bf16.mxu0 0
      %2788 = vmatpush2.bf16.msra.mxu0 0
      %2789 = vmatprep.subr.bf16.mxu0 0
      %2790 = vmatpush2.bf16.msra.mxu0 0
      %2791 = vmatprep.mubr.bf16.mxu0 0
      %2792 = vmatmul.mubr.bf16.gmra.mxu0 %v2601
      %v2793 = vpop.f32.mrf.mxu0
      %v2794 = vadd.f32 %v2387, %v2793
      %v2795 = vpop.f32.mrf.mxu0
      %v2796 = vadd.f32 %v2391, %v2795
      %v2797 = vpop.f32.mrf.mxu0
      %v2798 = vadd.f32 %v2387, %v2797
      %v2799 = vpop.f32.mrf.mxu0
      %v2800 = vadd.f32 %v2391, %v2799
      %2801 = vmatprep.mubr.bf16.mxu0 0
      %2802 = vmatmul.mubr.bf16.gmra.mxu0 %v2604
      %v2803 = vpop.f32.mrf.mxu0
      %v2804 = vadd.f32 %v2387, %v2803
      %v2805 = vpop.f32.mrf.mxu0
      %v2806 = vadd.f32 %v2391, %v2805
      %v2807 = vpop.f32.mrf.mxu0
      %v2808 = vpop.f32.mrf.mxu0
      %2809 = vdwg.mxu0
      %2810 = vmatprep.subr.bf16.mxu0 0
      %2811 = vmatpush1.bf16.msra.mxu0 0
      %2812 = vmatprep.subr.bf16.mxu0 0
      %2813 = vmatpush1.bf16.msra.mxu0 0
      %2814 = vmatprep.subr.bf16.mxu0 0
      %2815 = vmatpush1.bf16.msra.mxu0 0
      %2816 = vmatprep.subr.bf16.mxu0 0
      %2817 = vmatpush1.bf16.msra.mxu0 0
      %2818 = vmatprep.subr.bf16.mxu0 0
      %2819 = vmatpush1.bf16.msra.mxu0 0
      %2820 = vmatprep.subr.bf16.mxu0 0
      %2821 = vmatpush1.bf16.msra.mxu0 0
      %2822 = vmatprep.subr.bf16.mxu0 %v2561
      %2823 = vmatpush1.bf16.msra.mxu0 %v2560
      %2824 = vmatprep.subr.bf16.mxu0 %v2545
      %2825 = vmatpush1.bf16.msra.mxu0 %v2544
      %2826 = vmatprep.subr.bf16.mxu0 0
      %2827 = vmatpush2.bf16.msra.mxu0 0
      %2828 = vmatprep.subr.bf16.mxu0 0
      %2829 = vmatpush2.bf16.msra.mxu0 0
      %2830 = vmatprep.subr.bf16.mxu0 0
      %2831 = vmatpush2.bf16.msra.mxu0 0
      %2832 = vmatprep.subr.bf16.mxu0 0
      %2833 = vmatpush2.bf16.msra.mxu0 0
      %2834 = vmatprep.subr.bf16.mxu0 0
      %2835 = vmatpush2.bf16.msra.mxu0 0
      %2836 = vmatprep.subr.bf16.mxu0 0
      %2837 = vmatpush2.bf16.msra.mxu0 0
      %2838 = vmatprep.subr.bf16.mxu0 0
      %2839 = vmatpush2.bf16.msra.mxu0 0
      %2840 = vmatprep.subr.bf16.mxu0 0
      %2841 = vmatpush2.bf16.msra.mxu0 0
      %2842 = vmatprep.mubr.bf16.mxu0 0
      %2843 = vmatmul.mubr.bf16.gmra.mxu0 %v2601
      %v2844 = vpop.f32.mrf.mxu0
      %v2845 = vadd.f32 %v2395, %v2844
      %v2846 = vpop.f32.mrf.mxu0
      %v2847 = vadd.f32 %v2399, %v2846
      %v2848 = vpop.f32.mrf.mxu0
      %v2849 = vadd.f32 %v2395, %v2848
      %v2850 = vpop.f32.mrf.mxu0
      %v2851 = vadd.f32 %v2399, %v2850
      %2852 = vmatprep.mubr.bf16.mxu0 0
      %2853 = vmatmul.mubr.bf16.gmra.mxu0 %v2604
      %v2854 = vpop.f32.mrf.mxu0
      %v2855 = vadd.f32 %v2395, %v2854
      %v2856 = vpop.f32.mrf.mxu0
      %v2857 = vadd.f32 %v2399, %v2856
      %v2858 = vpop.f32.mrf.mxu0
      %v2859 = vpop.f32.mrf.mxu0
      %2860 = vdwg.mxu0
      %2861 = vmatprep.subr.bf16.mxu0 0
      %2862 = vmatpush1.bf16.msra.mxu0 0
      %2863 = vmatprep.subr.bf16.mxu0 0
      %2864 = vmatpush1.bf16.msra.mxu0 0
      %2865 = vmatprep.subr.bf16.mxu0 0
      %2866 = vmatpush1.bf16.msra.mxu0 0
      %2867 = vmatprep.subr.bf16.mxu0 0
      %2868 = vmatpush1.bf16.msra.mxu0 0
      %2869 = vmatprep.subr.bf16.mxu0 0
      %2870 = vmatpush1.bf16.msra.mxu0 0
      %2871 = vmatprep.subr.bf16.mxu0 0
      %2872 = vmatpush1.bf16.msra.mxu0 0
      %2873 = vmatprep.subr.bf16.mxu0 %v2563
      %2874 = vmatpush1.bf16.msra.mxu0 %v2562
      %2875 = vmatprep.subr.bf16.mxu0 %v2547
      %2876 = vmatpush1.bf16.msra.mxu0 %v2546
      %2877 = vmatprep.subr.bf16.mxu0 0
      %2878 = vmatpush2.bf16.msra.mxu0 0
      %2879 = vmatprep.subr.bf16.mxu0 0
      %2880 = vmatpush2.bf16.msra.mxu0 0
      %2881 = vmatprep.subr.bf16.mxu0 0
      %2882 = vmatpush2.bf16.msra.mxu0 0
      %2883 = vmatprep.subr.bf16.mxu0 0
      %2884 = vmatpush2.bf16.msra.mxu0 0
      %2885 = vmatprep.subr.bf16.mxu0 0
      %2886 = vmatpush2.bf16.msra.mxu0 0
      %2887 = vmatprep.subr.bf16.mxu0 0
      %2888 = vmatpush2.bf16.msra.mxu0 0
      %2889 = vmatprep.subr.bf16.mxu0 0
      %2890 = vmatpush2.bf16.msra.mxu0 0
      %2891 = vmatprep.subr.bf16.mxu0 0
      %2892 = vmatpush2.bf16.msra.mxu0 0
      %2893 = vmatprep.mubr.bf16.mxu0 0
      %2894 = vmatmul.mubr.bf16.gmra.mxu0 %v2601
      %v2895 = vpop.f32.mrf.mxu0
      %v2896 = vadd.f32 %v2403, %v2895
      %v2897 = vpop.f32.mrf.mxu0
      %v2898 = vadd.f32 %v2407, %v2897
      %v2899 = vpop.f32.mrf.mxu0
      %v2900 = vadd.f32 %v2403, %v2899
      %v2901 = vpop.f32.mrf.mxu0
      %v2902 = vadd.f32 %v2407, %v2901
      %2903 = vmatprep.mubr.bf16.mxu0 0
      %2904 = vmatmul.mubr.bf16.gmra.mxu0 %v2604
      %v2905 = vpop.f32.mrf.mxu0
      %v2906 = vadd.f32 %v2403, %v2905
      %v2907 = vpop.f32.mrf.mxu0
      %v2908 = vadd.f32 %v2407, %v2907
      %v2909 = vpop.f32.mrf.mxu0
      %v2910 = vpop.f32.mrf.mxu0
      %2911 = vdwg.mxu0
      %2912 = vmatprep.subr.bf16.mxu0 0
      %2913 = vmatpush1.bf16.msra.mxu0 0
      %2914 = vmatprep.subr.bf16.mxu0 0
      %2915 = vmatpush1.bf16.msra.mxu0 0
      %2916 = vmatprep.subr.bf16.mxu0 0
      %2917 = vmatpush1.bf16.msra.mxu0 0
      %2918 = vmatprep.subr.bf16.mxu0 0
      %2919 = vmatpush1.bf16.msra.mxu0 0
      %2920 = vmatprep.subr.bf16.mxu0 0
      %2921 = vmatpush1.bf16.msra.mxu0 0
      %2922 = vmatprep.subr.bf16.mxu0 0
      %2923 = vmatpush1.bf16.msra.mxu0 0
      %2924 = vmatprep.subr.bf16.mxu0 %v2565
      %2925 = vmatpush1.bf16.msra.mxu0 %v2564
      %2926 = vmatprep.subr.bf16.mxu0 %v2549
      %2927 = vmatpush1.bf16.msra.mxu0 %v2548
      %2928 = vmatprep.subr.bf16.mxu0 0
      %2929 = vmatpush2.bf16.msra.mxu0 0
      %2930 = vmatprep.subr.bf16.mxu0 0
      %2931 = vmatpush2.bf16.msra.mxu0 0
      %2932 = vmatprep.subr.bf16.mxu0 0
      %2933 = vmatpush2.bf16.msra.mxu0 0
      %2934 = vmatprep.subr.bf16.mxu0 0
      %2935 = vmatpush2.bf16.msra.mxu0 0
      %2936 = vmatprep.subr.bf16.mxu0 0
      %2937 = vmatpush2.bf16.msra.mxu0 0
      %2938 = vmatprep.subr.bf16.mxu0 0
      %2939 = vmatpush2.bf16.msra.mxu0 0
      %2940 = vmatprep.subr.bf16.mxu0 0
      %2941 = vmatpush2.bf16.msra.mxu0 0
      %2942 = vmatprep.subr.bf16.mxu0 0
      %2943 = vmatpush2.bf16.msra.mxu0 0
      %2944 = vmatprep.mubr.bf16.mxu0 0
      %2945 = vmatmul.mubr.bf16.gmra.mxu0 %v2601
      %v2946 = vpop.f32.mrf.mxu0
      %v2947 = vadd.f32 %v2411, %v2946
      %v2948 = vpop.f32.mrf.mxu0
      %v2949 = vadd.f32 %v2415, %v2948
      %v2950 = vpop.f32.mrf.mxu0
      %v2951 = vadd.f32 %v2411, %v2950
      %v2952 = vpop.f32.mrf.mxu0
      %v2953 = vadd.f32 %v2415, %v2952
      %2954 = vmatprep.mubr.bf16.mxu0 0
      %2955 = vmatmul.mubr.bf16.gmra.mxu0 %v2604
      %v2956 = vpop.f32.mrf.mxu0
      %v2957 = vadd.f32 %v2411, %v2956
      %v2958 = vpop.f32.mrf.mxu0
      %v2959 = vadd.f32 %v2415, %v2958
      %v2960 = vpop.f32.mrf.mxu0
      %v2961 = vpop.f32.mrf.mxu0
      %2962 = vdwg.mxu0
      %2963 = vmatprep.subr.bf16.mxu0 0
      %2964 = vmatpush1.bf16.msra.mxu0 0
      %2965 = vmatprep.subr.bf16.mxu0 0
      %2966 = vmatpush1.bf16.msra.mxu0 0
      %2967 = vmatprep.subr.bf16.mxu0 0
      %2968 = vmatpush1.bf16.msra.mxu0 0
      %2969 = vmatprep.subr.bf16.mxu0 0
      %2970 = vmatpush1.bf16.msra.mxu0 0
      %2971 = vmatprep.subr.bf16.mxu0 0
      %2972 = vmatpush1.bf16.msra.mxu0 0
      %2973 = vmatprep.subr.bf16.mxu0 0
      %2974 = vmatpush1.bf16.msra.mxu0 0
      %2975 = vmatprep.subr.bf16.mxu0 %v2567
      %2976 = vmatpush1.bf16.msra.mxu0 %v2566
      %2977 = vmatprep.subr.bf16.mxu0 %v2551
      %2978 = vmatpush1.bf16.msra.mxu0 %v2550
      %2979 = vmatprep.subr.bf16.mxu0 0
      %2980 = vmatpush2.bf16.msra.mxu0 0
      %2981 = vmatprep.subr.bf16.mxu0 0
      %2982 = vmatpush2.bf16.msra.mxu0 0
      %2983 = vmatprep.subr.bf16.mxu0 0
      %2984 = vmatpush2.bf16.msra.mxu0 0
      %2985 = vmatprep.subr.bf16.mxu0 0
      %2986 = vmatpush2.bf16.msra.mxu0 0
      %2987 = vmatprep.subr.bf16.mxu0 0
      %2988 = vmatpush2.bf16.msra.mxu0 0
      %2989 = vmatprep.subr.bf16.mxu0 0
      %2990 = vmatpush2.bf16.msra.mxu0 0
      %2991 = vmatprep.subr.bf16.mxu0 0
      %2992 = vmatpush2.bf16.msra.mxu0 0
      %2993 = vmatprep.subr.bf16.mxu0 0
      %2994 = vmatpush2.bf16.msra.mxu0 0
      %2995 = vmatprep.mubr.bf16.mxu0 0
      %2996 = vmatmul.mubr.bf16.gmra.mxu0 %v2601
      %v2997 = vpop.f32.mrf.mxu0
      %v2998 = vadd.f32 %v2419, %v2997
      %v2999 = vpop.f32.mrf.mxu0
      %v3000 = vadd.f32 %v2423, %v2999
      %v3001 = vpop.f32.mrf.mxu0
      %v3002 = vadd.f32 %v2419, %v3001
      %v3003 = vpop.f32.mrf.mxu0
      %v3004 = vadd.f32 %v2423, %v3003
      %3005 = vmatprep.mubr.bf16.mxu0 0
      %3006 = vmatmul.mubr.bf16.gmra.mxu0 %v2604
      %v3007 = vpop.f32.mrf.mxu0
      %v3008 = vadd.f32 %v2419, %v3007
      %v3009 = vpop.f32.mrf.mxu0
      %v3010 = vadd.f32 %v2423, %v3009
      %v3011 = vpop.f32.mrf.mxu0
      %v3012 = vpop.f32.mrf.mxu0
      %3013 = vdwg.mxu0
      %v3014 = vmax.f32 %v2641, 0.0
      %v3015 = vmax.f32 %v2643, 0.0
      %v3016 = vmax.f32 %v2692, 0.0
      %v3017 = vmax.f32 %v2694, 0.0
      %v3018 = vmax.f32 %v2743, 0.0
      %v3019 = vmax.f32 %v2745, 0.0
      %v3020 = vmax.f32 %v2794, 0.0
      %v3021 = vmax.f32 %v2796, 0.0
      %v3022 = vmax.f32 %v2845, 0.0
      %v3023 = vmax.f32 %v2847, 0.0
      %v3024 = vmax.f32 %v2896, 0.0
      %v3025 = vmax.f32 %v2898, 0.0
      %v3026 = vmax.f32 %v2947, 0.0
      %v3027 = vmax.f32 %v2949, 0.0
      %v3028 = vmax.f32 %v2998, 0.0
      %v3029 = vmax.f32 %v3000, 0.0
      %v3030 = vmax.f32 %v2645, 0.0
      %v3031 = vmax.f32 %v2647, 0.0
      %v3032 = vmax.f32 %v2696, 0.0
      %v3033 = vmax.f32 %v2698, 0.0
      %v3034 = vmax.f32 %v2747, 0.0
      %v3035 = vmax.f32 %v2749, 0.0
      %v3036 = vmax.f32 %v2798, 0.0
      %v3037 = vmax.f32 %v2800, 0.0
      %v3038 = vmax.f32 %v2849, 0.0
      %v3039 = vmax.f32 %v2851, 0.0
      %v3040 = vmax.f32 %v2900, 0.0
      %v3041 = vmax.f32 %v2902, 0.0
      %v3042 = vmax.f32 %v2951, 0.0
      %v3043 = vmax.f32 %v2953, 0.0
      %v3044 = vmax.f32 %v3002, 0.0
      %v3045 = vmax.f32 %v3004, 0.0
      %v3046 = vmax.f32 %v2651, 0.0
      %v3047 = vmax.f32 %v2653, 0.0
      %v3048 = vmax.f32 %v2702, 0.0
      %v3049 = vmax.f32 %v2704, 0.0
      %v3050 = vmax.f32 %v2753, 0.0
      %v3051 = vmax.f32 %v2755, 0.0
      %v3052 = vmax.f32 %v2804, 0.0
      %v3053 = vmax.f32 %v2806, 0.0
      %v3054 = vmax.f32 %v2855, 0.0
      %v3055 = vmax.f32 %v2857, 0.0
      %v3056 = vmax.f32 %v2906, 0.0
      %v3057 = vmax.f32 %v2908, 0.0
      %v3058 = vmax.f32 %v2957, 0.0
      %v3059 = vmax.f32 %v2959, 0.0
      %v3060 = vmax.f32 %v3008, 0.0
      %v3061 = vmax.f32 %v3010, 0.0
      %v3062 = vpack.c.bf16 %v3030, %v3014
      %v3063 = vpack.c.bf16 %v3031, %v3015
      %v3064 = vpack.c.bf16 %v3032, %v3016
      %v3065 = vpack.c.bf16 %v3033, %v3017
      %v3066 = vpack.c.bf16 %v3034, %v3018
      %v3067 = vpack.c.bf16 %v3035, %v3019
      %v3068 = vpack.c.bf16 %v3036, %v3020
      %v3069 = vpack.c.bf16 %v3037, %v3021
      %v3070 = vpack.c.bf16 %v3038, %v3022
      %v3071 = vpack.c.bf16 %v3039, %v3023
      %v3072 = vpack.c.bf16 %v3040, %v3024
      %v3073 = vpack.c.bf16 %v3041, %v3025
      %v3074 = vpack.c.bf16 %v3042, %v3026
      %v3075 = vpack.c.bf16 %v3043, %v3027
      %v3076 = vpack.c.bf16 %v3044, %v3028
      %v3077 = vpack.c.bf16 %v3045, %v3029
      %v3078 = vpack.c.bf16 %v3046, %v3046
      %v3079 = vpack.c.bf16 %v3047, %v3047
      %v3080 = vpack.c.bf16 %v3048, %v3048
      %v3081 = vpack.c.bf16 %v3049, %v3049
      %v3082 = vpack.c.bf16 %v3050, %v3050
      %v3083 = vpack.c.bf16 %v3051, %v3051
      %v3084 = vpack.c.bf16 %v3052, %v3052
      %v3085 = vpack.c.bf16 %v3053, %v3053
      %v3086 = vpack.c.bf16 %v3054, %v3054
      %v3087 = vpack.c.bf16 %v3055, %v3055
      %v3088 = vpack.c.bf16 %v3056, %v3056
      %v3089 = vpack.c.bf16 %v3057, %v3057
      %v3090 = vpack.c.bf16 %v3058, %v3058
      %v3091 = vpack.c.bf16 %v3059, %v3059
      %v3092 = vpack.c.bf16 %v3060, %v3060
      %v3093 = vpack.c.bf16 %v3061, %v3061
      %v3094 = vld [vmem:[%s681] sm:$0xf]
      %v3095 = vld [vmem:[%s681 + $0x4] sm:$0xf]
      %v3096 = vld [vmem:[%s681 + $0x8] sm:$0xf]
      %v3097 = vld [vmem:[%s681 + $0xc] sm:$0xf]
      %v3098 = vld [vmem:[%s681 + $0x10] sm:$0xf]
      %v3099 = vld [vmem:[%s681 + $0x14] sm:$0xf]
      %v3100 = vld [vmem:[%s681 + $0x18] sm:$0xf]
      %v3101 = vld [vmem:[%s681 + $0x1c] sm:$0xf]
      %v3102 = vld [vmem:[%s681 + $0x20] sm:$0xf]
      %v3103 = vld [vmem:[%s681 + $0x24] sm:$0xf]
      %v3104 = vld [vmem:[%s681 + $0x28] sm:$0xf]
      %v3105 = vld [vmem:[%s681 + $0x2c] sm:$0xf]
      %v3106 = vld [vmem:[%s681 + $0x30] sm:$0xf]
      %v3107 = vld [vmem:[%s681 + $0x34] sm:$0xf]
      %v3108 = vld [vmem:[%s681 + $0x38] sm:$0xf]
      %v3109 = vld [vmem:[%s681 + $0x3c] sm:$0xf]
      %v3110 = vld [vmem:[%s681 + $0x40] sm:$0xf]
      %v3111 = vld [vmem:[%s681 + $0x44] sm:$0xf]
      %v3112 = vld [vmem:[%s681 + $0x48] sm:$0xf]
      %v3113 = vld [vmem:[%s681 + $0x4c] sm:$0xf]
      %v3114 = vld [vmem:[%s681 + $0x50] sm:$0xf]
      %v3115 = vld [vmem:[%s681 + $0x54] sm:$0xf]
      %v3116 = vld [vmem:[%s681 + $0x58] sm:$0xf]
      %v3117 = vld [vmem:[%s681 + $0x5c] sm:$0xf]
      %v3118 = vld [vmem:[%s681 + $0x60] sm:$0xf]
      %v3119 = vld [vmem:[%s681 + $0x64] sm:$0xf]
      %v3120 = vld [vmem:[%s681 + $0x68] sm:$0xf]
      %v3121 = vld [vmem:[%s681 + $0x6c] sm:$0xf]
      %v3122 = vld [vmem:[%s681 + $0x70] sm:$0xf]
      %v3123 = vld [vmem:[%s681 + $0x74] sm:$0xf]
      %v3124 = vld [vmem:[%s681 + $0x78] sm:$0xf]
      %v3125 = vld [vmem:[%s681 + $0x7c] sm:$0xf]
      %v3126 = vld [vmem:[%s681 + $0x80] sm:$0xf]
      %v3127 = vld [vmem:[%s681 + $0x84] sm:$0xf]
      %v3128 = vld [vmem:[%s681 + $0x88] sm:$0xf]
      %v3129 = vld [vmem:[%s681 + $0x8c] sm:$0xf]
      %v3130 = vld [vmem:[%s681 + $0x90] sm:$0xf]
      %v3131 = vld [vmem:[%s681 + $0x94] sm:$0xf]
      %v3132 = vld [vmem:[%s681 + $0x98] sm:$0xf]
      %v3133 = vld [vmem:[%s681 + $0x9c] sm:$0xf]
      %v3134 = vld [vmem:[%s681 + $0xa0] sm:$0xf]
      %v3135 = vld [vmem:[%s681 + $0xa4] sm:$0xf]
      %v3136 = vld [vmem:[%s681 + $0xa8] sm:$0xf]
      %v3137 = vld [vmem:[%s681 + $0xac] sm:$0xf]
      %v3138 = vld [vmem:[%s681 + $0xb0] sm:$0xf]
      %v3139 = vld [vmem:[%s681 + $0xb4] sm:$0xf]
      %v3140 = vld [vmem:[%s681 + $0xb8] sm:$0xf]
      %v3141 = vld [vmem:[%s681 + $0xbc] sm:$0xf]
      %v3142 = vld [vmem:[%s681 + $0xc0] sm:$0xf]
      %v3143 = vld [vmem:[%s681 + $0xc4] sm:$0xf]
      %v3144 = vld [vmem:[%s681 + $0xc8] sm:$0xf]
      %v3145 = vld [vmem:[%s681 + $0xcc] sm:$0xf]
      %v3146 = vld [vmem:[%s681 + $0xd0] sm:$0xf]
      %v3147 = vld [vmem:[%s681 + $0xd4] sm:$0xf]
      %v3148 = vld [vmem:[%s681 + $0xd8] sm:$0xf]
      %v3149 = vld [vmem:[%s681 + $0xdc] sm:$0xf]
      %v3150 = vld [vmem:[%s681 + $0xe0] sm:$0xf]
      %v3151 = vld [vmem:[%s681 + $0xe4] sm:$0xf]
      %v3152 = vld [vmem:[%s681 + $0xe8] sm:$0xf]
      %v3153 = vld [vmem:[%s681 + $0xec] sm:$0xf]
      %v3154 = vld [vmem:[%s681 + $0xf0] sm:$0xf]
      %v3155 = vld [vmem:[%s681 + $0xf4] sm:$0xf]
      %v3156 = vld [vmem:[%s681 + $0xf8] sm:$0xf]
      %v3157 = vld [vmem:[%s681 + $0xfc] sm:$0xf]
      %v3158 = vld [vmem:[%s681 + $0x100] sm:$0xf]
      %v3159 = vld [vmem:[%s681 + $0x104] sm:$0xf]
      %v3160 = vld [vmem:[%s681 + $0x108] sm:$0xf]
      %v3161 = vld [vmem:[%s681 + $0x10c] sm:$0xf]
      %v3162 = vld [vmem:[%s681 + $0x110] sm:$0xf]
      %v3163 = vld [vmem:[%s681 + $0x114] sm:$0xf]
      %v3164 = vld [vmem:[%s681 + $0x118] sm:$0xf]
      %v3165 = vld [vmem:[%s681 + $0x11c] sm:$0xf]
      %v3166 = vld [vmem:[%s681 + $0x120] sm:$0xf]
      %v3167 = vld [vmem:[%s681 + $0x124] sm:$0xf]
      %v3168 = vld [vmem:[%s681 + $0x128] sm:$0xf]
      %v3169 = vld [vmem:[%s681 + $0x12c] sm:$0xf]
      %v3170 = vld [vmem:[%s681 + $0x130] sm:$0xf]
      %v3171 = vld [vmem:[%s681 + $0x134] sm:$0xf]
      %v3172 = vld [vmem:[%s681 + $0x138] sm:$0xf]
      %v3173 = vld [vmem:[%s681 + $0x13c] sm:$0xf]
      %v3174 = vld [vmem:[%s681 + $0x140] sm:$0xf]
      %v3175 = vld [vmem:[%s681 + $0x144] sm:$0xf]
      %v3176 = vld [vmem:[%s681 + $0x148] sm:$0xf]
      %v3177 = vld [vmem:[%s681 + $0x14c] sm:$0xf]
      %v3178 = vld [vmem:[%s681 + $0x150] sm:$0xf]
      %v3179 = vld [vmem:[%s681 + $0x154] sm:$0xf]
      %v3180 = vld [vmem:[%s681 + $0x158] sm:$0xf]
      %v3181 = vld [vmem:[%s681 + $0x15c] sm:$0xf]
      %v3182 = vld [vmem:[%s681 + $0x160] sm:$0xf]
      %v3183 = vld [vmem:[%s681 + $0x164] sm:$0xf]
      %v3184 = vld [vmem:[%s681 + $0x168] sm:$0xf]
      %v3185 = vld [vmem:[%s681 + $0x16c] sm:$0xf]
      %v3186 = vld [vmem:[%s681 + $0x170] sm:$0xf]
      %v3187 = vld [vmem:[%s681 + $0x174] sm:$0xf]
      %v3188 = vld [vmem:[%s681 + $0x178] sm:$0xf]
      %v3189 = vld [vmem:[%s681 + $0x17c] sm:$0xf]
      %v3190 = vld [vmem:[%s681 + $0x180] sm:$0xf]
      %v3191 = vld [vmem:[%s681 + $0x184] sm:$0xf]
      %v3192 = vld [vmem:[%s681 + $0x188] sm:$0xf]
      %v3193 = vld [vmem:[%s681 + $0x18c] sm:$0xf]
      %v3194 = vld [vmem:[%s681 + $0x190] sm:$0xf]
      %v3195 = vld [vmem:[%s681 + $0x194] sm:$0xf]
      %v3196 = vld [vmem:[%s681 + $0x198] sm:$0xf]
      %v3197 = vld [vmem:[%s681 + $0x19c] sm:$0xf]
      %v3198 = vld [vmem:[%s681 + $0x1a0] sm:$0xf]
      %v3199 = vld [vmem:[%s681 + $0x1a4] sm:$0xf]
      %v3200 = vld [vmem:[%s681 + $0x1a8] sm:$0xf]
      %v3201 = vld [vmem:[%s681 + $0x1ac] sm:$0xf]
      %v3202 = vld [vmem:[%s681 + $0x1b0] sm:$0xf]
      %v3203 = vld [vmem:[%s681 + $0x1b4] sm:$0xf]
      %v3204 = vld [vmem:[%s681 + $0x1b8] sm:$0xf]
      %v3205 = vld [vmem:[%s681 + $0x1bc] sm:$0xf]
      %v3206 = vld [vmem:[%s681 + $0x1c0] sm:$0xf]
      %v3207 = vld [vmem:[%s681 + $0x1c4] sm:$0xf]
      %v3208 = vld [vmem:[%s681 + $0x1c8] sm:$0xf]
      %v3209 = vld [vmem:[%s681 + $0x1cc] sm:$0xf]
      %v3210 = vld [vmem:[%s681 + $0x1d0] sm:$0xf]
      %v3211 = vld [vmem:[%s681 + $0x1d4] sm:$0xf]
      %v3212 = vld [vmem:[%s681 + $0x1d8] sm:$0xf]
      %v3213 = vld [vmem:[%s681 + $0x1dc] sm:$0xf]
      %v3214 = vld [vmem:[%s681 + $0x1e0] sm:$0xf]
      %v3215 = vld [vmem:[%s681 + $0x1e4] sm:$0xf]
      %v3216 = vld [vmem:[%s681 + $0x1e8] sm:$0xf]
      %v3217 = vld [vmem:[%s681 + $0x1ec] sm:$0xf]
      %v3218 = vld [vmem:[%s681 + $0x1f0] sm:$0xf]
      %v3219 = vld [vmem:[%s681 + $0x1f4] sm:$0xf]
      %v3220 = vld [vmem:[%s681 + $0x1f8] sm:$0xf]
      %v3221 = vld [vmem:[%s681 + $0x1fc] sm:$0xf]
      %v3222 = vld [vmem:[%s681 + $0x200] sm:$0xf]
      %v3223 = vld [vmem:[%s681 + $0x204] sm:$0xf]
      %v3224 = vld [vmem:[%s681 + $0x208] sm:$0xf]
      %v3225 = vld [vmem:[%s681 + $0x20c] sm:$0xf]
      %v3226 = vld [vmem:[%s681 + $0x210] sm:$0xf]
      %v3227 = vld [vmem:[%s681 + $0x214] sm:$0xf]
      %v3228 = vld [vmem:[%s681 + $0x218] sm:$0xf]
      %v3229 = vld [vmem:[%s681 + $0x21c] sm:$0xf]
      %v3230 = vld [vmem:[%s681 + $0x220] sm:$0xf]
      %v3231 = vld [vmem:[%s681 + $0x224] sm:$0xf]
      %v3232 = vld [vmem:[%s681 + $0x228] sm:$0xf]
      %v3233 = vld [vmem:[%s681 + $0x22c] sm:$0xf]
      %v3234 = vld [vmem:[%s681 + $0x230] sm:$0xf]
      %v3235 = vld [vmem:[%s681 + $0x234] sm:$0xf]
      %v3236 = vld [vmem:[%s681 + $0x238] sm:$0xf]
      %v3237 = vld [vmem:[%s681 + $0x23c] sm:$0xf]
      %v3238 = vld [vmem:[%s681 + $0x240] sm:$0xf]
      %v3239 = vld [vmem:[%s681 + $0x244] sm:$0xf]
      %v3240 = vld [vmem:[%s681 + $0x248] sm:$0xf]
      %v3241 = vld [vmem:[%s681 + $0x24c] sm:$0xf]
      %v3242 = vld [vmem:[%s681 + $0x250] sm:$0xf]
      %v3243 = vld [vmem:[%s681 + $0x254] sm:$0xf]
      %v3244 = vld [vmem:[%s681 + $0x258] sm:$0xf]
      %v3245 = vld [vmem:[%s681 + $0x25c] sm:$0xf]
      %v3246 = vld [vmem:[%s681 + $0x260] sm:$0xf]
      %v3247 = vld [vmem:[%s681 + $0x264] sm:$0xf]
      %v3248 = vld [vmem:[%s681 + $0x268] sm:$0xf]
      %v3249 = vld [vmem:[%s681 + $0x26c] sm:$0xf]
      %v3250 = vld [vmem:[%s681 + $0x270] sm:$0xf]
      %v3251 = vld [vmem:[%s681 + $0x274] sm:$0xf]
      %v3252 = vld [vmem:[%s681 + $0x278] sm:$0xf]
      %v3253 = vld [vmem:[%s681 + $0x27c] sm:$0xf]
      %v3254 = vld [vmem:[%s681 + $0x280] sm:$0xf]
      %v3255 = vld [vmem:[%s681 + $0x284] sm:$0xf]
      %v3256 = vld [vmem:[%s681 + $0x288] sm:$0xf]
      %v3257 = vld [vmem:[%s681 + $0x28c] sm:$0xf]
      %v3258 = vld [vmem:[%s681 + $0x290] sm:$0xf]
      %v3259 = vld [vmem:[%s681 + $0x294] sm:$0xf]
      %v3260 = vld [vmem:[%s681 + $0x298] sm:$0xf]
      %v3261 = vld [vmem:[%s681 + $0x29c] sm:$0xf]
      %v3262 = vld [vmem:[%s681 + $0x2a0] sm:$0xf]
      %v3263 = vld [vmem:[%s681 + $0x2a4] sm:$0xf]
      %v3264 = vld [vmem:[%s681 + $0x2a8] sm:$0xf]
      %v3265 = vld [vmem:[%s681 + $0x2ac] sm:$0xf]
      %v3266 = vld [vmem:[%s681 + $0x2b0] sm:$0xf]
      %v3267 = vld [vmem:[%s681 + $0x2b4] sm:$0xf]
      %v3268 = vld [vmem:[%s681 + $0x2b8] sm:$0xf]
      %v3269 = vld [vmem:[%s681 + $0x2bc] sm:$0xf]
      %v3270 = vld [vmem:[%s681 + $0x2c0] sm:$0xf]
      %v3271 = vld [vmem:[%s681 + $0x2c4] sm:$0xf]
      %v3272 = vld [vmem:[%s681 + $0x2c8] sm:$0xf]
      %v3273 = vld [vmem:[%s681 + $0x2cc] sm:$0xf]
      %v3274 = vld [vmem:[%s681 + $0x2d0] sm:$0xf]
      %v3275 = vld [vmem:[%s681 + $0x2d4] sm:$0xf]
      %v3276 = vld [vmem:[%s681 + $0x2d8] sm:$0xf]
      %v3277 = vld [vmem:[%s681 + $0x2dc] sm:$0xf]
      %v3278 = vld [vmem:[%s681 + $0x2e0] sm:$0xf]
      %v3279 = vld [vmem:[%s681 + $0x2e4] sm:$0xf]
      %v3280 = vld [vmem:[%s681 + $0x2e8] sm:$0xf]
      %v3281 = vld [vmem:[%s681 + $0x2ec] sm:$0xf]
      %v3282 = vld [vmem:[%s681 + $0x2f0] sm:$0xf]
      %v3283 = vld [vmem:[%s681 + $0x2f4] sm:$0xf]
      %v3284 = vld [vmem:[%s681 + $0x2f8] sm:$0xf]
      %v3285 = vld [vmem:[%s681 + $0x2fc] sm:$0xf]
      %v3286 = vld [vmem:[%s681 + $0x300] sm:$0xf]
      %v3287 = vld [vmem:[%s681 + $0x304] sm:$0xf]
      %v3288 = vld [vmem:[%s681 + $0x308] sm:$0xf]
      %v3289 = vld [vmem:[%s681 + $0x30c] sm:$0xf]
      %v3290 = vld [vmem:[%s681 + $0x310] sm:$0xf]
      %v3291 = vld [vmem:[%s681 + $0x314] sm:$0xf]
      %v3292 = vld [vmem:[%s681 + $0x318] sm:$0xf]
      %v3293 = vld [vmem:[%s681 + $0x31c] sm:$0xf]
      %v3294 = vld [vmem:[%s681 + $0x320] sm:$0xf]
      %v3295 = vld [vmem:[%s681 + $0x324] sm:$0xf]
      %v3296 = vld [vmem:[%s681 + $0x328] sm:$0xf]
      %v3297 = vld [vmem:[%s681 + $0x32c] sm:$0xf]
      %v3298 = vld [vmem:[%s681 + $0x330] sm:$0xf]
      %v3299 = vld [vmem:[%s681 + $0x334] sm:$0xf]
      %v3300 = vld [vmem:[%s681 + $0x338] sm:$0xf]
      %v3301 = vld [vmem:[%s681 + $0x33c] sm:$0xf]
      %v3302 = vld [vmem:[%s681 + $0x340] sm:$0xf]
      %v3303 = vld [vmem:[%s681 + $0x344] sm:$0xf]
      %v3304 = vld [vmem:[%s681 + $0x348] sm:$0xf]
      %v3305 = vld [vmem:[%s681 + $0x34c] sm:$0xf]
      %v3306 = vld [vmem:[%s681 + $0x350] sm:$0xf]
      %v3307 = vld [vmem:[%s681 + $0x354] sm:$0xf]
      %v3308 = vld [vmem:[%s681 + $0x358] sm:$0xf]
      %v3309 = vld [vmem:[%s681 + $0x35c] sm:$0xf]
      %v3310 = vld [vmem:[%s681 + $0x360] sm:$0xf]
      %v3311 = vld [vmem:[%s681 + $0x364] sm:$0xf]
      %v3312 = vld [vmem:[%s681 + $0x368] sm:$0xf]
      %v3313 = vld [vmem:[%s681 + $0x36c] sm:$0xf]
      %v3314 = vld [vmem:[%s681 + $0x370] sm:$0xf]
      %v3315 = vld [vmem:[%s681 + $0x374] sm:$0xf]
      %v3316 = vld [vmem:[%s681 + $0x378] sm:$0xf]
      %v3317 = vld [vmem:[%s681 + $0x37c] sm:$0xf]
      %v3318 = vld [vmem:[%s681 + $0x380] sm:$0xf]
      %v3319 = vld [vmem:[%s681 + $0x384] sm:$0xf]
      %v3320 = vld [vmem:[%s681 + $0x388] sm:$0xf]
      %v3321 = vld [vmem:[%s681 + $0x38c] sm:$0xf]
      %v3322 = vld [vmem:[%s681 + $0x390] sm:$0xf]
      %v3323 = vld [vmem:[%s681 + $0x394] sm:$0xf]
      %v3324 = vld [vmem:[%s681 + $0x398] sm:$0xf]
      %v3325 = vld [vmem:[%s681 + $0x39c] sm:$0xf]
      %v3326 = vld [vmem:[%s681 + $0x3a0] sm:$0xf]
      %v3327 = vld [vmem:[%s681 + $0x3a4] sm:$0xf]
      %v3328 = vld [vmem:[%s681 + $0x3a8] sm:$0xf]
      %v3329 = vld [vmem:[%s681 + $0x3ac] sm:$0xf]
      %v3330 = vld [vmem:[%s681 + $0x3b0] sm:$0xf]
      %v3331 = vld [vmem:[%s681 + $0x3b4] sm:$0xf]
      %v3332 = vld [vmem:[%s681 + $0x3b8] sm:$0xf]
      %v3333 = vld [vmem:[%s681 + $0x3bc] sm:$0xf]
      %v3334 = vld [vmem:[%s681 + $0x3c0] sm:$0xf]
      %v3335 = vld [vmem:[%s681 + $0x3c4] sm:$0xf]
      %v3336 = vld [vmem:[%s681 + $0x3c8] sm:$0xf]
      %v3337 = vld [vmem:[%s681 + $0x3cc] sm:$0xf]
      %v3338 = vld [vmem:[%s681 + $0x3d0] sm:$0xf]
      %v3339 = vld [vmem:[%s681 + $0x3d4] sm:$0xf]
      %v3340 = vld [vmem:[%s681 + $0x3d8] sm:$0xf]
      %v3341 = vld [vmem:[%s681 + $0x3dc] sm:$0xf]
      %v3342 = vld [vmem:[%s681 + $0x3e0] sm:$0xf]
      %v3343 = vld [vmem:[%s681 + $0x3e4] sm:$0xf]
      %v3344 = vld [vmem:[%s681 + $0x3e8] sm:$0xf]
      %v3345 = vld [vmem:[%s681 + $0x3ec] sm:$0xf]
      %v3346 = vld [vmem:[%s681 + $0x3f0] sm:$0xf]
      %v3347 = vld [vmem:[%s681 + $0x3f4] sm:$0xf]
      %v3348 = vld [vmem:[%s681 + $0x3f8] sm:$0xf]
      %v3349 = vld [vmem:[%s681 + $0x3fc] sm:$0xf]
      %v3350 = vld [vmem:[%s684] sm:$0x1]
      %v3352 = vlaneseq
      %v3353 = vshrl.u32 %v3352, 7
      %v3354 = vsub.s32 0, %v3353
      %v3355 = vrot.slane %v3350, %v3354
      %v3613 = vunpack.c.l.b16 %v3094
      %v3614 = vunpack.c.l.b16 %v3095
      %v3615 = vunpack.c.l.b16 %v3096
      %v3616 = vunpack.c.l.b16 %v3097
      %v3617 = vunpack.c.l.b16 %v3098
      %v3618 = vunpack.c.l.b16 %v3099
      %v3619 = vunpack.c.l.b16 %v3100
      %v3620 = vunpack.c.l.b16 %v3101
      %v3621 = vunpack.c.l.b16 %v3102
      %v3622 = vunpack.c.l.b16 %v3103
      %v3623 = vunpack.c.l.b16 %v3104
      %v3624 = vunpack.c.l.b16 %v3105
      %v3625 = vunpack.c.l.b16 %v3106
      %v3626 = vunpack.c.l.b16 %v3107
      %v3627 = vunpack.c.l.b16 %v3108
      %v3628 = vunpack.c.l.b16 %v3109
      %v3629 = vunpack.c.l.b16 %v3110
      %v3630 = vunpack.c.l.b16 %v3111
      %v3631 = vunpack.c.l.b16 %v3112
      %v3632 = vunpack.c.l.b16 %v3113
      %v3633 = vunpack.c.l.b16 %v3114
      %v3634 = vunpack.c.l.b16 %v3115
      %v3635 = vunpack.c.l.b16 %v3116
      %v3636 = vunpack.c.l.b16 %v3117
      %v3637 = vunpack.c.l.b16 %v3118
      %v3638 = vunpack.c.l.b16 %v3119
      %v3639 = vunpack.c.l.b16 %v3120
      %v3640 = vunpack.c.l.b16 %v3121
      %v3641 = vunpack.c.l.b16 %v3122
      %v3642 = vunpack.c.l.b16 %v3123
      %v3643 = vunpack.c.l.b16 %v3124
      %v3644 = vunpack.c.l.b16 %v3125
      %v3645 = vunpack.c.l.b16 %v3126
      %v3646 = vunpack.c.l.b16 %v3127
      %v3647 = vunpack.c.l.b16 %v3128
      %v3648 = vunpack.c.l.b16 %v3129
      %v3649 = vunpack.c.l.b16 %v3130
      %v3650 = vunpack.c.l.b16 %v3131
      %v3651 = vunpack.c.l.b16 %v3132
      %v3652 = vunpack.c.l.b16 %v3133
      %v3653 = vunpack.c.l.b16 %v3134
      %v3654 = vunpack.c.l.b16 %v3135
      %v3655 = vunpack.c.l.b16 %v3136
      %v3656 = vunpack.c.l.b16 %v3137
      %v3657 = vunpack.c.l.b16 %v3138
      %v3658 = vunpack.c.l.b16 %v3139
      %v3659 = vunpack.c.l.b16 %v3140
      %v3660 = vunpack.c.l.b16 %v3141
      %v3661 = vunpack.c.l.b16 %v3142
      %v3662 = vunpack.c.l.b16 %v3143
      %v3663 = vunpack.c.l.b16 %v3144
      %v3664 = vunpack.c.l.b16 %v3145
      %v3665 = vunpack.c.l.b16 %v3146
      %v3666 = vunpack.c.l.b16 %v3147
      %v3667 = vunpack.c.l.b16 %v3148
      %v3668 = vunpack.c.l.b16 %v3149
      %v3669 = vunpack.c.l.b16 %v3150
      %v3670 = vunpack.c.l.b16 %v3151
      %v3671 = vunpack.c.l.b16 %v3152
      %v3672 = vunpack.c.l.b16 %v3153
      %v3673 = vunpack.c.l.b16 %v3154
      %v3674 = vunpack.c.l.b16 %v3155
      %v3675 = vunpack.c.l.b16 %v3156
      %v3676 = vunpack.c.l.b16 %v3157
      %v3677 = vunpack.c.l.b16 %v3158
      %v3678 = vunpack.c.l.b16 %v3159
      %v3679 = vunpack.c.l.b16 %v3160
      %v3680 = vunpack.c.l.b16 %v3161
      %v3681 = vunpack.c.l.b16 %v3162
      %v3682 = vunpack.c.l.b16 %v3163
      %v3683 = vunpack.c.l.b16 %v3164
      %v3684 = vunpack.c.l.b16 %v3165
      %v3685 = vunpack.c.l.b16 %v3166
      %v3686 = vunpack.c.l.b16 %v3167
      %v3687 = vunpack.c.l.b16 %v3168
      %v3688 = vunpack.c.l.b16 %v3169
      %v3689 = vunpack.c.l.b16 %v3170
      %v3690 = vunpack.c.l.b16 %v3171
      %v3691 = vunpack.c.l.b16 %v3172
      %v3692 = vunpack.c.l.b16 %v3173
      %v3693 = vunpack.c.l.b16 %v3174
      %v3694 = vunpack.c.l.b16 %v3175
      %v3695 = vunpack.c.l.b16 %v3176
      %v3696 = vunpack.c.l.b16 %v3177
      %v3697 = vunpack.c.l.b16 %v3178
      %v3698 = vunpack.c.l.b16 %v3179
      %v3699 = vunpack.c.l.b16 %v3180
      %v3700 = vunpack.c.l.b16 %v3181
      %v3701 = vunpack.c.l.b16 %v3182
      %v3702 = vunpack.c.l.b16 %v3183
      %v3703 = vunpack.c.l.b16 %v3184
      %v3704 = vunpack.c.l.b16 %v3185
      %v3705 = vunpack.c.l.b16 %v3186
      %v3706 = vunpack.c.l.b16 %v3187
      %v3707 = vunpack.c.l.b16 %v3188
      %v3708 = vunpack.c.l.b16 %v3189
      %v3709 = vunpack.c.l.b16 %v3190
      %v3710 = vunpack.c.l.b16 %v3191
      %v3711 = vunpack.c.l.b16 %v3192
      %v3712 = vunpack.c.l.b16 %v3193
      %v3713 = vunpack.c.l.b16 %v3194
      %v3714 = vunpack.c.l.b16 %v3195
      %v3715 = vunpack.c.l.b16 %v3196
      %v3716 = vunpack.c.l.b16 %v3197
      %v3717 = vunpack.c.l.b16 %v3198
      %v3718 = vunpack.c.l.b16 %v3199
      %v3719 = vunpack.c.l.b16 %v3200
      %v3720 = vunpack.c.l.b16 %v3201
      %v3721 = vunpack.c.l.b16 %v3202
      %v3722 = vunpack.c.l.b16 %v3203
      %v3723 = vunpack.c.l.b16 %v3204
      %v3724 = vunpack.c.l.b16 %v3205
      %v3725 = vunpack.c.l.b16 %v3206
      %v3726 = vunpack.c.l.b16 %v3207
      %v3727 = vunpack.c.l.b16 %v3208
      %v3728 = vunpack.c.l.b16 %v3209
      %v3729 = vunpack.c.l.b16 %v3210
      %v3730 = vunpack.c.l.b16 %v3211
      %v3731 = vunpack.c.l.b16 %v3212
      %v3732 = vunpack.c.l.b16 %v3213
      %v3733 = vunpack.c.l.b16 %v3214
      %v3734 = vunpack.c.l.b16 %v3215
      %v3735 = vunpack.c.l.b16 %v3216
      %v3736 = vunpack.c.l.b16 %v3217
      %v3737 = vunpack.c.l.b16 %v3218
      %v3738 = vunpack.c.l.b16 %v3219
      %v3739 = vunpack.c.l.b16 %v3220
      %v3740 = vunpack.c.l.b16 %v3221
      %v3741 = vunpack.c.l.b16 %v3222
      %v3742 = vunpack.c.l.b16 %v3223
      %v3743 = vunpack.c.l.b16 %v3224
      %v3744 = vunpack.c.l.b16 %v3225
      %v3745 = vunpack.c.l.b16 %v3226
      %v3746 = vunpack.c.l.b16 %v3227
      %v3747 = vunpack.c.l.b16 %v3228
      %v3748 = vunpack.c.l.b16 %v3229
      %v3749 = vunpack.c.l.b16 %v3230
      %v3750 = vunpack.c.l.b16 %v3231
      %v3751 = vunpack.c.l.b16 %v3232
      %v3752 = vunpack.c.l.b16 %v3233
      %v3753 = vunpack.c.l.b16 %v3234
      %v3754 = vunpack.c.l.b16 %v3235
      %v3755 = vunpack.c.l.b16 %v3236
      %v3756 = vunpack.c.l.b16 %v3237
      %v3757 = vunpack.c.l.b16 %v3238
      %v3758 = vunpack.c.l.b16 %v3239
      %v3759 = vunpack.c.l.b16 %v3240
      %v3760 = vunpack.c.l.b16 %v3241
      %v3761 = vunpack.c.l.b16 %v3242
      %v3762 = vunpack.c.l.b16 %v3243
      %v3763 = vunpack.c.l.b16 %v3244
      %v3764 = vunpack.c.l.b16 %v3245
      %v3765 = vunpack.c.l.b16 %v3246
      %v3766 = vunpack.c.l.b16 %v3247
      %v3767 = vunpack.c.l.b16 %v3248
      %v3768 = vunpack.c.l.b16 %v3249
      %v3769 = vunpack.c.l.b16 %v3250
      %v3770 = vunpack.c.l.b16 %v3251
      %v3771 = vunpack.c.l.b16 %v3252
      %v3772 = vunpack.c.l.b16 %v3253
      %v3773 = vunpack.c.l.b16 %v3254
      %v3774 = vunpack.c.l.b16 %v3255
      %v3775 = vunpack.c.l.b16 %v3256
      %v3776 = vunpack.c.l.b16 %v3257
      %v3777 = vunpack.c.l.b16 %v3258
      %v3778 = vunpack.c.l.b16 %v3259
      %v3779 = vunpack.c.l.b16 %v3260
      %v3780 = vunpack.c.l.b16 %v3261
      %v3781 = vunpack.c.l.b16 %v3262
      %v3782 = vunpack.c.l.b16 %v3263
      %v3783 = vunpack.c.l.b16 %v3264
      %v3784 = vunpack.c.l.b16 %v3265
      %v3785 = vunpack.c.l.b16 %v3266
      %v3786 = vunpack.c.l.b16 %v3267
      %v3787 = vunpack.c.l.b16 %v3268
      %v3788 = vunpack.c.l.b16 %v3269
      %v3789 = vunpack.c.l.b16 %v3270
      %v3790 = vunpack.c.l.b16 %v3271
      %v3791 = vunpack.c.l.b16 %v3272
      %v3792 = vunpack.c.l.b16 %v3273
      %v3793 = vunpack.c.l.b16 %v3274
      %v3794 = vunpack.c.l.b16 %v3275
      %v3795 = vunpack.c.l.b16 %v3276
      %v3796 = vunpack.c.l.b16 %v3277
      %v3797 = vunpack.c.l.b16 %v3278
      %v3798 = vunpack.c.l.b16 %v3279
      %v3799 = vunpack.c.l.b16 %v3280
      %v3800 = vunpack.c.l.b16 %v3281
      %v3801 = vunpack.c.l.b16 %v3282
      %v3802 = vunpack.c.l.b16 %v3283
      %v3803 = vunpack.c.l.b16 %v3284
      %v3804 = vunpack.c.l.b16 %v3285
      %v3805 = vunpack.c.l.b16 %v3286
      %v3806 = vunpack.c.l.b16 %v3287
      %v3807 = vunpack.c.l.b16 %v3288
      %v3808 = vunpack.c.l.b16 %v3289
      %v3809 = vunpack.c.l.b16 %v3290
      %v3810 = vunpack.c.l.b16 %v3291
      %v3811 = vunpack.c.l.b16 %v3292
      %v3812 = vunpack.c.l.b16 %v3293
      %v3813 = vunpack.c.l.b16 %v3294
      %v3814 = vunpack.c.l.b16 %v3295
      %v3815 = vunpack.c.l.b16 %v3296
      %v3816 = vunpack.c.l.b16 %v3297
      %v3817 = vunpack.c.l.b16 %v3298
      %v3818 = vunpack.c.l.b16 %v3299
      %v3819 = vunpack.c.l.b16 %v3300
      %v3820 = vunpack.c.l.b16 %v3301
      %v3821 = vunpack.c.l.b16 %v3302
      %v3822 = vunpack.c.l.b16 %v3303
      %v3823 = vunpack.c.l.b16 %v3304
      %v3824 = vunpack.c.l.b16 %v3305
      %v3825 = vunpack.c.l.b16 %v3306
      %v3826 = vunpack.c.l.b16 %v3307
      %v3827 = vunpack.c.l.b16 %v3308
      %v3828 = vunpack.c.l.b16 %v3309
      %v3829 = vunpack.c.l.b16 %v3310
      %v3830 = vunpack.c.l.b16 %v3311
      %v3831 = vunpack.c.l.b16 %v3312
      %v3832 = vunpack.c.l.b16 %v3313
      %v3833 = vunpack.c.l.b16 %v3314
      %v3834 = vunpack.c.l.b16 %v3315
      %v3835 = vunpack.c.l.b16 %v3316
      %v3836 = vunpack.c.l.b16 %v3317
      %v3837 = vunpack.c.l.b16 %v3318
      %v3838 = vunpack.c.l.b16 %v3319
      %v3839 = vunpack.c.l.b16 %v3320
      %v3840 = vunpack.c.l.b16 %v3321
      %v3841 = vunpack.c.l.b16 %v3322
      %v3842 = vunpack.c.l.b16 %v3323
      %v3843 = vunpack.c.l.b16 %v3324
      %v3844 = vunpack.c.l.b16 %v3325
      %v3845 = vunpack.c.l.b16 %v3326
      %v3846 = vunpack.c.l.b16 %v3327
      %v3847 = vunpack.c.l.b16 %v3328
      %v3848 = vunpack.c.l.b16 %v3329
      %v3849 = vunpack.c.l.b16 %v3330
      %v3850 = vunpack.c.l.b16 %v3331
      %v3851 = vunpack.c.l.b16 %v3332
      %v3852 = vunpack.c.l.b16 %v3333
      %v3853 = vunpack.c.l.b16 %v3334
      %v3854 = vunpack.c.l.b16 %v3335
      %v3855 = vunpack.c.l.b16 %v3336
      %v3856 = vunpack.c.l.b16 %v3337
      %v3857 = vunpack.c.l.b16 %v3338
      %v3858 = vunpack.c.l.b16 %v3339
      %v3859 = vunpack.c.l.b16 %v3340
      %v3860 = vunpack.c.l.b16 %v3341
      %v3861 = vunpack.c.l.b16 %v3342
      %v3862 = vunpack.c.l.b16 %v3343
      %v3863 = vunpack.c.l.b16 %v3344
      %v3864 = vunpack.c.l.b16 %v3345
      %v3865 = vunpack.c.l.b16 %v3346
      %v3866 = vunpack.c.l.b16 %v3347
      %v3867 = vunpack.c.l.b16 %v3348
      %v3868 = vunpack.c.l.b16 %v3349
      %v3869 = vpack.c.b16 %v3614, %v3613
      %v3870 = vpack.c.b16 %v3616, %v3615
      %v3871 = vpack.c.b16 %v3618, %v3617
      %v3872 = vpack.c.b16 %v3620, %v3619
      %v3873 = vpack.c.b16 %v3622, %v3621
      %v3874 = vpack.c.b16 %v3624, %v3623
      %v3875 = vpack.c.b16 %v3626, %v3625
      %v3876 = vpack.c.b16 %v3628, %v3627
      %v3877 = vpack.c.b16 %v3630, %v3629
      %v3878 = vpack.c.b16 %v3632, %v3631
      %v3879 = vpack.c.b16 %v3634, %v3633
      %v3880 = vpack.c.b16 %v3636, %v3635
      %v3881 = vpack.c.b16 %v3638, %v3637
      %v3882 = vpack.c.b16 %v3640, %v3639
      %v3883 = vpack.c.b16 %v3642, %v3641
      %v3884 = vpack.c.b16 %v3644, %v3643
      %v3885 = vpack.c.b16 %v3646, %v3645
      %v3886 = vpack.c.b16 %v3648, %v3647
      %v3887 = vpack.c.b16 %v3650, %v3649
      %v3888 = vpack.c.b16 %v3652, %v3651
      %v3889 = vpack.c.b16 %v3654, %v3653
      %v3890 = vpack.c.b16 %v3656, %v3655
      %v3891 = vpack.c.b16 %v3658, %v3657
      %v3892 = vpack.c.b16 %v3660, %v3659
      %v3893 = vpack.c.b16 %v3662, %v3661
      %v3894 = vpack.c.b16 %v3664, %v3663
      %v3895 = vpack.c.b16 %v3666, %v3665
      %v3896 = vpack.c.b16 %v3668, %v3667
      %v3897 = vpack.c.b16 %v3670, %v3669
      %v3898 = vpack.c.b16 %v3672, %v3671
      %v3899 = vpack.c.b16 %v3674, %v3673
      %v3900 = vpack.c.b16 %v3676, %v3675
      %v3901 = vpack.c.b16 %v3678, %v3677
      %v3902 = vpack.c.b16 %v3680, %v3679
      %v3903 = vpack.c.b16 %v3682, %v3681
      %v3904 = vpack.c.b16 %v3684, %v3683
      %v3905 = vpack.c.b16 %v3686, %v3685
      %v3906 = vpack.c.b16 %v3688, %v3687
      %v3907 = vpack.c.b16 %v3690, %v3689
      %v3908 = vpack.c.b16 %v3692, %v3691
      %v3909 = vpack.c.b16 %v3694, %v3693
      %v3910 = vpack.c.b16 %v3696, %v3695
      %v3911 = vpack.c.b16 %v3698, %v3697
      %v3912 = vpack.c.b16 %v3700, %v3699
      %v3913 = vpack.c.b16 %v3702, %v3701
      %v3914 = vpack.c.b16 %v3704, %v3703
      %v3915 = vpack.c.b16 %v3706, %v3705
      %v3916 = vpack.c.b16 %v3708, %v3707
      %v3917 = vpack.c.b16 %v3710, %v3709
      %v3918 = vpack.c.b16 %v3712, %v3711
      %v3919 = vpack.c.b16 %v3714, %v3713
      %v3920 = vpack.c.b16 %v3716, %v3715
      %v3921 = vpack.c.b16 %v3718, %v3717
      %v3922 = vpack.c.b16 %v3720, %v3719
      %v3923 = vpack.c.b16 %v3722, %v3721
      %v3924 = vpack.c.b16 %v3724, %v3723
      %v3925 = vpack.c.b16 %v3726, %v3725
      %v3926 = vpack.c.b16 %v3728, %v3727
      %v3927 = vpack.c.b16 %v3730, %v3729
      %v3928 = vpack.c.b16 %v3732, %v3731
      %v3929 = vpack.c.b16 %v3734, %v3733
      %v3930 = vpack.c.b16 %v3736, %v3735
      %v3931 = vpack.c.b16 %v3738, %v3737
      %v3932 = vpack.c.b16 %v3740, %v3739
      %v3933 = vpack.c.b16 %v3742, %v3741
      %v3934 = vpack.c.b16 %v3744, %v3743
      %v3935 = vpack.c.b16 %v3746, %v3745
      %v3936 = vpack.c.b16 %v3748, %v3747
      %v3937 = vpack.c.b16 %v3750, %v3749
      %v3938 = vpack.c.b16 %v3752, %v3751
      %v3939 = vpack.c.b16 %v3754, %v3753
      %v3940 = vpack.c.b16 %v3756, %v3755
      %v3941 = vpack.c.b16 %v3758, %v3757
      %v3942 = vpack.c.b16 %v3760, %v3759
      %v3943 = vpack.c.b16 %v3762, %v3761
      %v3944 = vpack.c.b16 %v3764, %v3763
      %v3945 = vpack.c.b16 %v3766, %v3765
      %v3946 = vpack.c.b16 %v3768, %v3767
      %v3947 = vpack.c.b16 %v3770, %v3769
      %v3948 = vpack.c.b16 %v3772, %v3771
      %v3949 = vpack.c.b16 %v3774, %v3773
      %v3950 = vpack.c.b16 %v3776, %v3775
      %v3951 = vpack.c.b16 %v3778, %v3777
      %v3952 = vpack.c.b16 %v3780, %v3779
      %v3953 = vpack.c.b16 %v3782, %v3781
      %v3954 = vpack.c.b16 %v3784, %v3783
      %v3955 = vpack.c.b16 %v3786, %v3785
      %v3956 = vpack.c.b16 %v3788, %v3787
      %v3957 = vpack.c.b16 %v3790, %v3789
      %v3958 = vpack.c.b16 %v3792, %v3791
      %v3959 = vpack.c.b16 %v3794, %v3793
      %v3960 = vpack.c.b16 %v3796, %v3795
      %v3961 = vpack.c.b16 %v3798, %v3797
      %v3962 = vpack.c.b16 %v3800, %v3799
      %v3963 = vpack.c.b16 %v3802, %v3801
      %v3964 = vpack.c.b16 %v3804, %v3803
      %v3965 = vpack.c.b16 %v3806, %v3805
      %v3966 = vpack.c.b16 %v3808, %v3807
      %v3967 = vpack.c.b16 %v3810, %v3809
      %v3968 = vpack.c.b16 %v3812, %v3811
      %v3969 = vpack.c.b16 %v3814, %v3813
      %v3970 = vpack.c.b16 %v3816, %v3815
      %v3971 = vpack.c.b16 %v3818, %v3817
      %v3972 = vpack.c.b16 %v3820, %v3819
      %v3973 = vpack.c.b16 %v3822, %v3821
      %v3974 = vpack.c.b16 %v3824, %v3823
      %v3975 = vpack.c.b16 %v3826, %v3825
      %v3976 = vpack.c.b16 %v3828, %v3827
      %v3977 = vpack.c.b16 %v3830, %v3829
      %v3978 = vpack.c.b16 %v3832, %v3831
      %v3979 = vpack.c.b16 %v3834, %v3833
      %v3980 = vpack.c.b16 %v3836, %v3835
      %v3981 = vpack.c.b16 %v3838, %v3837
      %v3982 = vpack.c.b16 %v3840, %v3839
      %v3983 = vpack.c.b16 %v3842, %v3841
      %v3984 = vpack.c.b16 %v3844, %v3843
      %v3985 = vpack.c.b16 %v3846, %v3845
      %v3986 = vpack.c.b16 %v3848, %v3847
      %v3987 = vpack.c.b16 %v3850, %v3849
      %v3988 = vpack.c.b16 %v3852, %v3851
      %v3989 = vpack.c.b16 %v3854, %v3853
      %v3990 = vpack.c.b16 %v3856, %v3855
      %v3991 = vpack.c.b16 %v3858, %v3857
      %v3992 = vpack.c.b16 %v3860, %v3859
      %v3993 = vpack.c.b16 %v3862, %v3861
      %v3994 = vpack.c.b16 %v3864, %v3863
      %v3995 = vpack.c.b16 %v3866, %v3865
      %v3996 = vpack.c.b16 %v3868, %v3867
      %4125 = vmatprep.subr.bf16.mxu0 0
      %4126 = vmatpush1.bf16.msra.mxu0 %v3876
      %4127 = vmatprep.subr.bf16.mxu0 0
      %4128 = vmatpush1.bf16.msra.mxu0 %v3875
      %4129 = vmatprep.subr.bf16.mxu0 0
      %4130 = vmatpush1.bf16.msra.mxu0 %v3874
      %4131 = vmatprep.subr.bf16.mxu0 0
      %4132 = vmatpush1.bf16.msra.mxu0 %v3873
      %4133 = vmatprep.subr.bf16.mxu0 0
      %4134 = vmatpush1.bf16.msra.mxu0 %v3872
      %4135 = vmatprep.subr.bf16.mxu0 0
      %4136 = vmatpush1.bf16.msra.mxu0 %v3871
      %4137 = vmatprep.subr.bf16.mxu0 0
      %4138 = vmatpush1.bf16.msra.mxu0 %v3870
      %4139 = vmatprep.subr.bf16.mxu0 0
      %4140 = vmatpush1.bf16.msra.mxu0 %v3869
      %4141 = vmatprep.subr.bf16.mxu0 0
      %4142 = vmatpush2.bf16.msra.mxu0 %v3884
      %4143 = vmatprep.subr.bf16.mxu0 0
      %4144 = vmatpush2.bf16.msra.mxu0 %v3883
      %4145 = vmatprep.subr.bf16.mxu0 0
      %4146 = vmatpush2.bf16.msra.mxu0 %v3882
      %4147 = vmatprep.subr.bf16.mxu0 0
      %4148 = vmatpush2.bf16.msra.mxu0 %v3881
      %4149 = vmatprep.subr.bf16.mxu0 0
      %4150 = vmatpush2.bf16.msra.mxu0 %v3880
      %4151 = vmatprep.subr.bf16.mxu0 0
      %4152 = vmatpush2.bf16.msra.mxu0 %v3879
      %4153 = vmatprep.subr.bf16.mxu0 0
      %4154 = vmatpush2.bf16.msra.mxu0 %v3878
      %4155 = vmatprep.subr.bf16.mxu0 0
      %4156 = vmatpush2.bf16.msra.mxu0 %v3877
      %4157 = vmatprep.mubr.bf16.mxu0 %v3063
      %4158 = vmatmul.mubr.bf16.gmra.mxu0 %v3062
      %v4159 = vpop.f32.mrf.mxu0
      %v4160 = vadd.f32 %v3355, %v4159
      %v4161 = vpop.f32.mrf.mxu0
      %v4162 = vpop.f32.mrf.mxu0
      %v4163 = vadd.f32 %v3355, %v4162
      %v4164 = vpop.f32.mrf.mxu0
      %4165 = vmatprep.mubr.bf16.mxu0 %v3079
      %4166 = vmatmul.mubr.bf16.gmra.mxu0 %v3078
      %v4167 = vpop.f32.mrf.mxu0
      %v4168 = vadd.f32 %v3355, %v4167
      %v4169 = vpop.f32.mrf.mxu0
      %v4170 = vpop.f32.mrf.mxu0
      %v4171 = vpop.f32.mrf.mxu0
      %4172 = vdwg.mxu0
      %4173 = vmatprep.subr.bf16.mxu0 0
      %4174 = vmatpush1.bf16.msra.mxu0 %v3892
      %4175 = vmatprep.subr.bf16.mxu0 0
      %4176 = vmatpush1.bf16.msra.mxu0 %v3891
      %4177 = vmatprep.subr.bf16.mxu0 0
      %4178 = vmatpush1.bf16.msra.mxu0 %v3890
      %4179 = vmatprep.subr.bf16.mxu0 0
      %4180 = vmatpush1.bf16.msra.mxu0 %v3889
      %4181 = vmatprep.subr.bf16.mxu0 0
      %4182 = vmatpush1.bf16.msra.mxu0 %v3888
      %4183 = vmatprep.subr.bf16.mxu0 0
      %4184 = vmatpush1.bf16.msra.mxu0 %v3887
      %4185 = vmatprep.subr.bf16.mxu0 0
      %4186 = vmatpush1.bf16.msra.mxu0 %v3886
      %4187 = vmatprep.subr.bf16.mxu0 0
      %4188 = vmatpush1.bf16.msra.mxu0 %v3885
      %4189 = vmatprep.subr.bf16.mxu0 0
      %4190 = vmatpush2.bf16.msra.mxu0 %v3900
      %4191 = vmatprep.subr.bf16.mxu0 0
      %4192 = vmatpush2.bf16.msra.mxu0 %v3899
      %4193 = vmatprep.subr.bf16.mxu0 0
      %4194 = vmatpush2.bf16.msra.mxu0 %v3898
      %4195 = vmatprep.subr.bf16.mxu0 0
      %4196 = vmatpush2.bf16.msra.mxu0 %v3897
      %4197 = vmatprep.subr.bf16.mxu0 0
      %4198 = vmatpush2.bf16.msra.mxu0 %v3896
      %4199 = vmatprep.subr.bf16.mxu0 0
      %4200 = vmatpush2.bf16.msra.mxu0 %v3895
      %4201 = vmatprep.subr.bf16.mxu0 0
      %4202 = vmatpush2.bf16.msra.mxu0 %v3894
      %4203 = vmatprep.subr.bf16.mxu0 0
      %4204 = vmatpush2.bf16.msra.mxu0 %v3893
      %4205 = vmatprep.mubr.bf16.mxu0 %v3065
      %4206 = vmatmul.mubr.bf16.gmra.mxu0 %v3064
      %v4207 = vpop.f32.mrf.mxu0
      %v4208 = vadd.f32 %v4160, %v4207
      %v4209 = vpop.f32.mrf.mxu0
      %v4210 = vpop.f32.mrf.mxu0
      %v4211 = vadd.f32 %v4163, %v4210
      %v4212 = vpop.f32.mrf.mxu0
      %4213 = vmatprep.mubr.bf16.mxu0 %v3081
      %4214 = vmatmul.mubr.bf16.gmra.mxu0 %v3080
      %v4215 = vpop.f32.mrf.mxu0
      %v4216 = vadd.f32 %v4168, %v4215
      %v4217 = vpop.f32.mrf.mxu0
      %v4218 = vpop.f32.mrf.mxu0
      %v4219 = vpop.f32.mrf.mxu0
      %4220 = vdwg.mxu0
      %4221 = vmatprep.subr.bf16.mxu0 0
      %4222 = vmatpush1.bf16.msra.mxu0 %v3908
      %4223 = vmatprep.subr.bf16.mxu0 0
      %4224 = vmatpush1.bf16.msra.mxu0 %v3907
      %4225 = vmatprep.subr.bf16.mxu0 0
      %4226 = vmatpush1.bf16.msra.mxu0 %v3906
      %4227 = vmatprep.subr.bf16.mxu0 0
      %4228 = vmatpush1.bf16.msra.mxu0 %v3905
      %4229 = vmatprep.subr.bf16.mxu0 0
      %4230 = vmatpush1.bf16.msra.mxu0 %v3904
      %4231 = vmatprep.subr.bf16.mxu0 0
      %4232 = vmatpush1.bf16.msra.mxu0 %v3903
      %4233 = vmatprep.subr.bf16.mxu0 0
      %4234 = vmatpush1.bf16.msra.mxu0 %v3902
      %4235 = vmatprep.subr.bf16.mxu0 0
      %4236 = vmatpush1.bf16.msra.mxu0 %v3901
      %4237 = vmatprep.subr.bf16.mxu0 0
      %4238 = vmatpush2.bf16.msra.mxu0 %v3916
      %4239 = vmatprep.subr.bf16.mxu0 0
      %4240 = vmatpush2.bf16.msra.mxu0 %v3915
      %4241 = vmatprep.subr.bf16.mxu0 0
      %4242 = vmatpush2.bf16.msra.mxu0 %v3914
      %4243 = vmatprep.subr.bf16.mxu0 0
      %4244 = vmatpush2.bf16.msra.mxu0 %v3913
      %4245 = vmatprep.subr.bf16.mxu0 0
      %4246 = vmatpush2.bf16.msra.mxu0 %v3912
      %4247 = vmatprep.subr.bf16.mxu0 0
      %4248 = vmatpush2.bf16.msra.mxu0 %v3911
      %4249 = vmatprep.subr.bf16.mxu0 0
      %4250 = vmatpush2.bf16.msra.mxu0 %v3910
      %4251 = vmatprep.subr.bf16.mxu0 0
      %4252 = vmatpush2.bf16.msra.mxu0 %v3909
      %4253 = vmatprep.mubr.bf16.mxu0 %v3067
      %4254 = vmatmul.mubr.bf16.gmra.mxu0 %v3066
      %v4255 = vpop.f32.mrf.mxu0
      %v4256 = vadd.f32 %v4208, %v4255
      %v4257 = vpop.f32.mrf.mxu0
      %v4258 = vpop.f32.mrf.mxu0
      %v4259 = vadd.f32 %v4211, %v4258
      %v4260 = vpop.f32.mrf.mxu0
      %4261 = vmatprep.mubr.bf16.mxu0 %v3083
      %4262 = vmatmul.mubr.bf16.gmra.mxu0 %v3082
      %v4263 = vpop.f32.mrf.mxu0
      %v4264 = vadd.f32 %v4216, %v4263
      %v4265 = vpop.f32.mrf.mxu0
      %v4266 = vpop.f32.mrf.mxu0
      %v4267 = vpop.f32.mrf.mxu0
      %4268 = vdwg.mxu0
      %4269 = vmatprep.subr.bf16.mxu0 0
      %4270 = vmatpush1.bf16.msra.mxu0 %v3924
      %4271 = vmatprep.subr.bf16.mxu0 0
      %4272 = vmatpush1.bf16.msra.mxu0 %v3923
      %4273 = vmatprep.subr.bf16.mxu0 0
      %4274 = vmatpush1.bf16.msra.mxu0 %v3922
      %4275 = vmatprep.subr.bf16.mxu0 0
      %4276 = vmatpush1.bf16.msra.mxu0 %v3921
      %4277 = vmatprep.subr.bf16.mxu0 0
      %4278 = vmatpush1.bf16.msra.mxu0 %v3920
      %4279 = vmatprep.subr.bf16.mxu0 0
      %4280 = vmatpush1.bf16.msra.mxu0 %v3919
      %4281 = vmatprep.subr.bf16.mxu0 0
      %4282 = vmatpush1.bf16.msra.mxu0 %v3918
      %4283 = vmatprep.subr.bf16.mxu0 0
      %4284 = vmatpush1.bf16.msra.mxu0 %v3917
      %4285 = vmatprep.subr.bf16.mxu0 0
      %4286 = vmatpush2.bf16.msra.mxu0 %v3932
      %4287 = vmatprep.subr.bf16.mxu0 0
      %4288 = vmatpush2.bf16.msra.mxu0 %v3931
      %4289 = vmatprep.subr.bf16.mxu0 0
      %4290 = vmatpush2.bf16.msra.mxu0 %v3930
      %4291 = vmatprep.subr.bf16.mxu0 0
      %4292 = vmatpush2.bf16.msra.mxu0 %v3929
      %4293 = vmatprep.subr.bf16.mxu0 0
      %4294 = vmatpush2.bf16.msra.mxu0 %v3928
      %4295 = vmatprep.subr.bf16.mxu0 0
      %4296 = vmatpush2.bf16.msra.mxu0 %v3927
      %4297 = vmatprep.subr.bf16.mxu0 0
      %4298 = vmatpush2.bf16.msra.mxu0 %v3926
      %4299 = vmatprep.subr.bf16.mxu0 0
      %4300 = vmatpush2.bf16.msra.mxu0 %v3925
      %4301 = vmatprep.mubr.bf16.mxu0 %v3069
      %4302 = vmatmul.mubr.bf16.gmra.mxu0 %v3068
      %v4303 = vpop.f32.mrf.mxu0
      %v4304 = vadd.f32 %v4256, %v4303
      %v4305 = vpop.f32.mrf.mxu0
      %v4306 = vpop.f32.mrf.mxu0
      %v4307 = vadd.f32 %v4259, %v4306
      %v4308 = vpop.f32.mrf.mxu0
      %4309 = vmatprep.mubr.bf16.mxu0 %v3085
      %4310 = vmatmul.mubr.bf16.gmra.mxu0 %v3084
      %v4311 = vpop.f32.mrf.mxu0
      %v4312 = vadd.f32 %v4264, %v4311
      %v4313 = vpop.f32.mrf.mxu0
      %v4314 = vpop.f32.mrf.mxu0
      %v4315 = vpop.f32.mrf.mxu0
      %4316 = vdwg.mxu0
      %4317 = vmatprep.subr.bf16.mxu0 0
      %4318 = vmatpush1.bf16.msra.mxu0 %v3940
      %4319 = vmatprep.subr.bf16.mxu0 0
      %4320 = vmatpush1.bf16.msra.mxu0 %v3939
      %4321 = vmatprep.subr.bf16.mxu0 0
      %4322 = vmatpush1.bf16.msra.mxu0 %v3938
      %4323 = vmatprep.subr.bf16.mxu0 0
      %4324 = vmatpush1.bf16.msra.mxu0 %v3937
      %4325 = vmatprep.subr.bf16.mxu0 0
      %4326 = vmatpush1.bf16.msra.mxu0 %v3936
      %4327 = vmatprep.subr.bf16.mxu0 0
      %4328 = vmatpush1.bf16.msra.mxu0 %v3935
      %4329 = vmatprep.subr.bf16.mxu0 0
      %4330 = vmatpush1.bf16.msra.mxu0 %v3934
      %4331 = vmatprep.subr.bf16.mxu0 0
      %4332 = vmatpush1.bf16.msra.mxu0 %v3933
      %4333 = vmatprep.subr.bf16.mxu0 0
      %4334 = vmatpush2.bf16.msra.mxu0 %v3948
      %4335 = vmatprep.subr.bf16.mxu0 0
      %4336 = vmatpush2.bf16.msra.mxu0 %v3947
      %4337 = vmatprep.subr.bf16.mxu0 0
      %4338 = vmatpush2.bf16.msra.mxu0 %v3946
      %4339 = vmatprep.subr.bf16.mxu0 0
      %4340 = vmatpush2.bf16.msra.mxu0 %v3945
      %4341 = vmatprep.subr.bf16.mxu0 0
      %4342 = vmatpush2.bf16.msra.mxu0 %v3944
      %4343 = vmatprep.subr.bf16.mxu0 0
      %4344 = vmatpush2.bf16.msra.mxu0 %v3943
      %4345 = vmatprep.subr.bf16.mxu0 0
      %4346 = vmatpush2.bf16.msra.mxu0 %v3942
      %4347 = vmatprep.subr.bf16.mxu0 0
      %4348 = vmatpush2.bf16.msra.mxu0 %v3941
      %4349 = vmatprep.mubr.bf16.mxu0 %v3071
      %4350 = vmatmul.mubr.bf16.gmra.mxu0 %v3070
      %v4351 = vpop.f32.mrf.mxu0
      %v4352 = vadd.f32 %v4304, %v4351
      %v4353 = vpop.f32.mrf.mxu0
      %v4354 = vpop.f32.mrf.mxu0
      %v4355 = vadd.f32 %v4307, %v4354
      %v4356 = vpop.f32.mrf.mxu0
      %4357 = vmatprep.mubr.bf16.mxu0 %v3087
      %4358 = vmatmul.mubr.bf16.gmra.mxu0 %v3086
      %v4359 = vpop.f32.mrf.mxu0
      %v4360 = vadd.f32 %v4312, %v4359
      %v4361 = vpop.f32.mrf.mxu0
      %v4362 = vpop.f32.mrf.mxu0
      %v4363 = vpop.f32.mrf.mxu0
      %4364 = vdwg.mxu0
      %4365 = vmatprep.subr.bf16.mxu0 0
      %4366 = vmatpush1.bf16.msra.mxu0 %v3956
      %4367 = vmatprep.subr.bf16.mxu0 0
      %4368 = vmatpush1.bf16.msra.mxu0 %v3955
      %4369 = vmatprep.subr.bf16.mxu0 0
      %4370 = vmatpush1.bf16.msra.mxu0 %v3954
      %4371 = vmatprep.subr.bf16.mxu0 0
      %4372 = vmatpush1.bf16.msra.mxu0 %v3953
      %4373 = vmatprep.subr.bf16.mxu0 0
      %4374 = vmatpush1.bf16.msra.mxu0 %v3952
      %4375 = vmatprep.subr.bf16.mxu0 0
      %4376 = vmatpush1.bf16.msra.mxu0 %v3951
      %4377 = vmatprep.subr.bf16.mxu0 0
      %4378 = vmatpush1.bf16.msra.mxu0 %v3950
      %4379 = vmatprep.subr.bf16.mxu0 0
      %4380 = vmatpush1.bf16.msra.mxu0 %v3949
      %4381 = vmatprep.subr.bf16.mxu0 0
      %4382 = vmatpush2.bf16.msra.mxu0 %v3964
      %4383 = vmatprep.subr.bf16.mxu0 0
      %4384 = vmatpush2.bf16.msra.mxu0 %v3963
      %4385 = vmatprep.subr.bf16.mxu0 0
      %4386 = vmatpush2.bf16.msra.mxu0 %v3962
      %4387 = vmatprep.subr.bf16.mxu0 0
      %4388 = vmatpush2.bf16.msra.mxu0 %v3961
      %4389 = vmatprep.subr.bf16.mxu0 0
      %4390 = vmatpush2.bf16.msra.mxu0 %v3960
      %4391 = vmatprep.subr.bf16.mxu0 0
      %4392 = vmatpush2.bf16.msra.mxu0 %v3959
      %4393 = vmatprep.subr.bf16.mxu0 0
      %4394 = vmatpush2.bf16.msra.mxu0 %v3958
      %4395 = vmatprep.subr.bf16.mxu0 0
      %4396 = vmatpush2.bf16.msra.mxu0 %v3957
      %4397 = vmatprep.mubr.bf16.mxu0 %v3073
      %4398 = vmatmul.mubr.bf16.gmra.mxu0 %v3072
      %v4399 = vpop.f32.mrf.mxu0
      %v4400 = vadd.f32 %v4352, %v4399
      %v4401 = vpop.f32.mrf.mxu0
      %v4402 = vpop.f32.mrf.mxu0
      %v4403 = vadd.f32 %v4355, %v4402
      %v4404 = vpop.f32.mrf.mxu0
      %4405 = vmatprep.mubr.bf16.mxu0 %v3089
      %4406 = vmatmul.mubr.bf16.gmra.mxu0 %v3088
      %v4407 = vpop.f32.mrf.mxu0
      %v4408 = vadd.f32 %v4360, %v4407
      %v4409 = vpop.f32.mrf.mxu0
      %v4410 = vpop.f32.mrf.mxu0
      %v4411 = vpop.f32.mrf.mxu0
      %4412 = vdwg.mxu0
      %4413 = vmatprep.subr.bf16.mxu0 0
      %4414 = vmatpush1.bf16.msra.mxu0 %v3972
      %4415 = vmatprep.subr.bf16.mxu0 0
      %4416 = vmatpush1.bf16.msra.mxu0 %v3971
      %4417 = vmatprep.subr.bf16.mxu0 0
      %4418 = vmatpush1.bf16.msra.mxu0 %v3970
      %4419 = vmatprep.subr.bf16.mxu0 0
      %4420 = vmatpush1.bf16.msra.mxu0 %v3969
      %4421 = vmatprep.subr.bf16.mxu0 0
      %4422 = vmatpush1.bf16.msra.mxu0 %v3968
      %4423 = vmatprep.subr.bf16.mxu0 0
      %4424 = vmatpush1.bf16.msra.mxu0 %v3967
      %4425 = vmatprep.subr.bf16.mxu0 0
      %4426 = vmatpush1.bf16.msra.mxu0 %v3966
      %4427 = vmatprep.subr.bf16.mxu0 0
      %4428 = vmatpush1.bf16.msra.mxu0 %v3965
      %4429 = vmatprep.subr.bf16.mxu0 0
      %4430 = vmatpush2.bf16.msra.mxu0 %v3980
      %4431 = vmatprep.subr.bf16.mxu0 0
      %4432 = vmatpush2.bf16.msra.mxu0 %v3979
      %4433 = vmatprep.subr.bf16.mxu0 0
      %4434 = vmatpush2.bf16.msra.mxu0 %v3978
      %4435 = vmatprep.subr.bf16.mxu0 0
      %4436 = vmatpush2.bf16.msra.mxu0 %v3977
      %4437 = vmatprep.subr.bf16.mxu0 0
      %4438 = vmatpush2.bf16.msra.mxu0 %v3976
      %4439 = vmatprep.subr.bf16.mxu0 0
      %4440 = vmatpush2.bf16.msra.mxu0 %v3975
      %4441 = vmatprep.subr.bf16.mxu0 0
      %4442 = vmatpush2.bf16.msra.mxu0 %v3974
      %4443 = vmatprep.subr.bf16.mxu0 0
      %4444 = vmatpush2.bf16.msra.mxu0 %v3973
      %4445 = vmatprep.mubr.bf16.mxu0 %v3075
      %4446 = vmatmul.mubr.bf16.gmra.mxu0 %v3074
      %v4447 = vpop.f32.mrf.mxu0
      %v4448 = vadd.f32 %v4400, %v4447
      %v4449 = vpop.f32.mrf.mxu0
      %v4450 = vpop.f32.mrf.mxu0
      %v4451 = vadd.f32 %v4403, %v4450
      %v4452 = vpop.f32.mrf.mxu0
      %4453 = vmatprep.mubr.bf16.mxu0 %v3091
      %4454 = vmatmul.mubr.bf16.gmra.mxu0 %v3090
      %v4455 = vpop.f32.mrf.mxu0
      %v4456 = vadd.f32 %v4408, %v4455
      %v4457 = vpop.f32.mrf.mxu0
      %v4458 = vpop.f32.mrf.mxu0
      %v4459 = vpop.f32.mrf.mxu0
      %4460 = vdwg.mxu0
      %4461 = vmatprep.subr.bf16.mxu0 0
      %4462 = vmatpush1.bf16.msra.mxu0 %v3988
      %4463 = vmatprep.subr.bf16.mxu0 0
      %4464 = vmatpush1.bf16.msra.mxu0 %v3987
      %4465 = vmatprep.subr.bf16.mxu0 0
      %4466 = vmatpush1.bf16.msra.mxu0 %v3986
      %4467 = vmatprep.subr.bf16.mxu0 0
      %4468 = vmatpush1.bf16.msra.mxu0 %v3985
      %4469 = vmatprep.subr.bf16.mxu0 0
      %4470 = vmatpush1.bf16.msra.mxu0 %v3984
      %4471 = vmatprep.subr.bf16.mxu0 0
      %4472 = vmatpush1.bf16.msra.mxu0 %v3983
      %4473 = vmatprep.subr.bf16.mxu0 0
      %4474 = vmatpush1.bf16.msra.mxu0 %v3982
      %4475 = vmatprep.subr.bf16.mxu0 0
      %4476 = vmatpush1.bf16.msra.mxu0 %v3981
      %4477 = vmatprep.subr.bf16.mxu0 0
      %4478 = vmatpush2.bf16.msra.mxu0 %v3996
      %4479 = vmatprep.subr.bf16.mxu0 0
      %4480 = vmatpush2.bf16.msra.mxu0 %v3995
      %4481 = vmatprep.subr.bf16.mxu0 0
      %4482 = vmatpush2.bf16.msra.mxu0 %v3994
      %4483 = vmatprep.subr.bf16.mxu0 0
      %4484 = vmatpush2.bf16.msra.mxu0 %v3993
      %4485 = vmatprep.subr.bf16.mxu0 0
      %4486 = vmatpush2.bf16.msra.mxu0 %v3992
      %4487 = vmatprep.subr.bf16.mxu0 0
      %4488 = vmatpush2.bf16.msra.mxu0 %v3991
      %4489 = vmatprep.subr.bf16.mxu0 0
      %4490 = vmatpush2.bf16.msra.mxu0 %v3990
      %4491 = vmatprep.subr.bf16.mxu0 0
      %4492 = vmatpush2.bf16.msra.mxu0 %v3989
      %4493 = vmatprep.mubr.bf16.mxu0 %v3077
      %4494 = vmatmul.mubr.bf16.gmra.mxu0 %v3076
      %v4495 = vpop.f32.mrf.mxu0
      %v4496 = vadd.f32 %v4448, %v4495
      %v4497 = vpop.f32.mrf.mxu0
      %v4498 = vpop.f32.mrf.mxu0
      %v4499 = vadd.f32 %v4451, %v4498
      %v4500 = vpop.f32.mrf.mxu0
      %4501 = vmatprep.mubr.bf16.mxu0 %v3093
      %4502 = vmatmul.mubr.bf16.gmra.mxu0 %v3092
      %v4503 = vpop.f32.mrf.mxu0
      %v4504 = vadd.f32 %v4456, %v4503
      %v4505 = vpop.f32.mrf.mxu0
      %v4506 = vpop.f32.mrf.mxu0
      %v4507 = vpop.f32.mrf.mxu0
      %4508 = vdwg.mxu0
      %v4509 = vadd.f32 %v4496, %v2319
      %v4510 = vadd.f32 %v4499, %v2320
      %v4511 = vadd.f32 %v4504, %v2321
      %v4512 = vld [vmem:[%s693] sm:$0x1]
      %v4513 = vld [vmem:[%s696] sm:$0x1]
      %v4514 = vsel %vm826, %v4509, 0.0
      %4515 = vadd.xlane.f32.xlu0 %v4514
      %v4516 = vpop.xlane.xlu0 %4515
      %v4517 = vsel %vm826, %v4510, 0.0
      %4518 = vadd.xlane.f32.xlu0 %v4517
      %v4519 = vpop.xlane.xlu0 %4518
      %v4520 = vsel %vm826, %v4511, 0.0
      %4521 = vadd.xlane.f32.xlu0 %v4520
      %v4522 = vpop.xlane.xlu0 %4521
      %v4523 = vmul.f32 %v4516, %v2273
      %v4524 = vmul.f32 %v4519, %v2273
      %v4525 = vmul.f32 %v4522, %v2273
      %v4526 = vsub.f32 %v4509, %v4523
      %v4527 = vsub.f32 %v4510, %v4524
      %v4528 = vsub.f32 %v4511, %v4525
      %v4529 = vmul.f32 %v4526, %v4526
      %v4530 = vmul.f32 %v4527, %v4527
      %v4531 = vmul.f32 %v4528, %v4528
      %v4532 = vsel %vm826, %v4529, 0.0
      %4533 = vadd.xlane.f32.xlu0 %v4532
      %v4534 = vpop.xlane.xlu0 %4533
      %v4535 = vsel %vm826, %v4530, 0.0
      %4536 = vadd.xlane.f32.xlu0 %v4535
      %v4537 = vpop.xlane.xlu0 %4536
      %v4538 = vsel %vm826, %v4531, 0.0
      %4539 = vadd.xlane.f32.xlu0 %v4538
      %v4540 = vpop.xlane.xlu0 %4539
      %v4541 = vmul.f32 %v4534, %v2273
      %v4542 = vmul.f32 %v4537, %v2273
      %v4543 = vmul.f32 %v4540, %v2273
      %v4544 = vadd.f32 %v4541, 1e-05
      %v4545 = vadd.f32 %v4542, 1e-05
      %v4546 = vadd.f32 %v4543, 1e-05
      %v4547 = vrsqrt.pop %v4544
      %v4548 = vrsqrt.pop %v4545
      %v4549 = vrsqrt.pop %v4546
      %v4550 = vmul.f32 %v4526, %v4547
      %v4551 = vmul.f32 %v4527, %v4548
      %v4552 = vmul.f32 %v4528, %v4549
      %v4554 = vlaneseq
      %v4555 = vshrl.u32 %v4554, 7
      %v4556 = vsub.s32 0, %v4555
      %v4557 = vrot.slane %v4512, %v4556
      %v4559 = vmul.f32 %v4550, %v4557
      %v4560 = vmul.f32 %v4551, %v4557
      %v4561 = vmul.f32 %v4552, %v4557
      %v4563 = vlaneseq
      %v4564 = vshrl.u32 %v4563, 7
      %v4565 = vsub.s32 0, %v4564
      %v4566 = vrot.slane %v4513, %v4565
      %v4568 = vadd.f32 %v4559, %v4566
      %v4569 = vadd.f32 %v4560, %v4566
      %v4570 = vadd.f32 %v4561, %v4566
      %4571 = vst.msk [vmem:[#allocation2] sm:$0xff] %vm826, %v4568
      %4572 = vst.msk [vmem:[#allocation2 + $0x8] sm:$0xff] %vm826, %v4569
      %4573 = vst.msk [vmem:[#allocation2 + $0x10] sm:$0xff] %vm826, %v4570
      %p4574 = scmp.eq.s32.totalorder %s31, 1
      // Predicated region
      $region85: #{transformer_encoder_forward.1} parent=79 // pred_check
        %p4575 = pneg %p4574
      $region86: #{transformer_encoder_forward.1} parent=79 // pred_check_branch
        %4577 = sbr.rel (%p4575) target = $region88
      $region87: #{transformer_encoder_forward.1} parent=79 // pred_region
        %4578 = vst.msk [vmem:[%s701] sm:$0xff] %vm826, %v4568
        %4579 = vst.msk [vmem:[%s701 + $0x8] sm:$0xff] %vm826, %v4569
        %4580 = vst.msk [vmem:[%s701 + $0x10] sm:$0xff] %vm826, %v4570
      $region88: #{transformer_encoder_forward.1} parent=79 // pred_fallthru
        _
      %p4581 = scmp.lt.s32.totalorder %s30, 1
      %s4582 = scalar_select %p4581, %s30, 1
      %s4583 = smul.addr %s4582, 3
      %s4584 = smul.addr %s4583, 8
      %s4585 = scalar_lea.vmem %s15, %s4584
      // Predicated region
      $region89: #{transformer_encoder_forward.1} parent=79 // pred_check
        %p4586 = pneg %p436
      $region90: #{transformer_encoder_forward.1} parent=79 // pred_check_branch
        %4588 = sbr.rel (%p4586) target = $region92
      $region91: #{transformer_encoder_forward.1} parent=79 // pred_region
        _
      $region92: #{transformer_encoder_forward.1} parent=79 // pred_fallthru
        _
    $region80: #{transformer_encoder_forward.1} parent=5 // pred_fallthru
      _
    %p4589 = scmp.le.s32.totalorder 2, %s21
    // Predicated region
    $region93: #{transformer_encoder_forward.1} parent=5 // pred_check
      %p4590 = pneg %p4589
    $region94: #{transformer_encoder_forward.1} parent=5 // pred_check_branch
      %4592 = sbr.rel (%p4590) target = $region96
    $region95: #{transformer_encoder_forward.1} parent=5 // pred_region
      %s4593 = ssub.s32 %s21, 2
      // Predicated region
      $region97: #{transformer_encoder_forward.1} parent=95 // pred_check
        %p4594 = pneg %p442
      $region98: #{transformer_encoder_forward.1} parent=95 // pred_check_branch
        %4596 = sbr.rel (%p4594) target = $region100
      $region99: #{transformer_encoder_forward.1} parent=95 // pred_region
        %p4597 = scmp.lt.s32.totalorder %s32, 1
        %s4598 = scalar_select %p4597, %s32, 1
        %s4599 = smul.addr %s4598, 3
        %s4600 = smul.addr %s4599, 8
        %s4601 = scalar_lea.vmem %s15, %s4600
      $region100: #{transformer_encoder_forward.1} parent=95 // pred_fallthru
        _
    $region96: #{transformer_encoder_forward.1} parent=5 // pred_fallthru
      _
  $region6: #{transformer_encoder_forward.1} parent=0 // loop_footer
    %s25 = sadd.s32 1, %s21
  $region7: #{transformer_encoder_forward.1} parent=0 // loop_footer_branch
    %20 = sbr.rel target = $region3
  $region8: #{transformer_encoder_forward.1} parent=0 // loop_exit
    _

</llo_original>
